<compile_context>
chip_gen: v7x
topology: tpu7x:2x2x1
jax: 0.10.0
libtpu: 0.0.40
codegen_flags: <defaults>
</compile_context>

<pallas_src>
import jax
import jax.numpy as jnp
from jax.experimental import pallas as pl
from jax.experimental.pallas import tpu as pltpu
import numpy as np

# ---------------- model hyper-parameters (match the PyTorch __init__) -------
SEQ_LEN = 15
BASE_EMBED_DIM = 8
LSTM_HIDDEN = 16
METHOD_EMBED_DIM = 4
NUM_NUMERIC = 3
MLP_HIDDEN = 64


# ---------------------------- Pallas kernel ---------------------------------
def aso_kernel(xih_ref,   # [T, 4H, Bt]  precomputed x@W_ih^T + b, feature-major
               mf_ref,    # [M, Bt]      method embedding, feature-major
               nf_ref,    # [3, Bt]      numeric features, feature-major
               whh_ref,   # [4H, H]      LSTM recurrent weight (PyTorch layout)
               w1s_ref,   # [MLP, H]     first Linear weight, seq-feature cols
               w1m_ref,   # [MLP, M]     first Linear weight, method cols
               w1n_ref,   # [MLP, 3]     first Linear weight, numeric cols
               b1_ref,    # [MLP, 1]
               w2_ref,    # [MLP, 1]
               b2_ref,    # [1, 1]
               out_ref):  # [1, Bt]      lane-dense output (batch in lanes)
    T = xih_ref.shape[0]
    H = whh_ref.shape[1]
    Bt = out_ref.shape[1]

    whh = whh_ref[...]                                          # [4H, H]

    # h-independent MLP terms hoisted ABOVE the recurrence: their MXU latency
    # hides under the serial LSTM loop instead of extending the epilogue.
    mn = (jnp.dot(w1m_ref[...], mf_ref[...], preferred_element_type=jnp.float32)
          + jnp.dot(w1n_ref[...], nf_ref[...], preferred_element_type=jnp.float32)
          + b1_ref[...])                                         # [MLP, Bt]

    h = jnp.zeros((H, Bt), jnp.float32)
    c = jnp.zeros((H, Bt), jnp.float32)

    # Fully-unrolled feature-major recurrence. Only one MXU matmul
    # ([4H,H] @ [H,Bt]) remains on the serial critical path; the input
    # projection was hoisted outside as a single large matmul. Gate slices are
    # aligned sublane blocks (16 rows each), not sub-128 lane extracts.
    for t in range(T):
        gates = xih_ref[t] + jnp.dot(whh, h, preferred_element_type=jnp.float32)  # [4H, Bt]
        i_g = jax.nn.sigmoid(gates[0 * H:1 * H, :])
        f_g = jax.nn.sigmoid(gates[1 * H:2 * H, :])
        g_g = jnp.tanh(gates[2 * H:3 * H, :])
        o_g = jax.nn.sigmoid(gates[3 * H:4 * H, :])
        c = f_g * c + i_g * g_g
        h = o_g * jnp.tanh(c)

    # concat([h, method, numeric]) @ W1  ==  split-weight sum (transposed here).
    hid = jnp.maximum(
        jnp.dot(w1s_ref[...], h, preferred_element_type=jnp.float32) + mn, 0.0)   # [MLP, Bt]

    # Final [MLP] -> 1 projection as VPU multiply + sublane reduction
    # (avoids an N=1 MXU matmul); result is lane-dense [1, Bt].
    out = jnp.sum(hid * w2_ref[...], axis=0, keepdims=True) + b2_ref[...]          # [1, Bt]
    out_ref[...] = out.astype(out_ref.dtype)


# ------------------------------ wrapper --------------------------------------
def aso_predictor_forward(params, seq_idx, methods, numeric_feats):
    """seq_idx: [B, T] int32, methods: [B] int32, numeric_feats: [B, 3] f32."""
    B, T = seq_idx.shape
    H4 = 4 * LSTM_HIDDEN

    # ---- plain-JAX glue: embedding gathers + hoisted LSTM input projection ----
    x_embed = jnp.take(params["embedding"], seq_idx, axis=0)               # [B, T, E]
    method_feat = jnp.take(params["method_emb"], methods, axis=0)          # [B, M]
    b_lstm = (params["b_ih"] + params["b_hh"])[None, None, :]              # [1, 1, 4H]
    # One [B*T, E] x [E, 4H] matmul instead of 15 tiny matmuls inside the loop.
    xih = jnp.einsum("bte,ge->btg", x_embed, params["w_ih"]) + b_lstm      # [B, T, 4H]

    # Feature-major / batch-in-lanes layout for the kernel.
    xih_t = jnp.transpose(xih, (1, 2, 0)).astype(jnp.float32)              # [T, 4H, B]
    mf_t = method_feat.T.astype(jnp.float32)                               # [M, B]
    nf_t = numeric_feats.T.astype(jnp.float32)                             # [3, B]

    # Batch tiling (batch lives on the lane axis). Multi-tile blocks use a
    # multiple-of-128 lane width; small batches run as a single full-width tile.
    b_tile = 256 if B > 256 else B
    b_pad = -(-B // b_tile) * b_tile
    if b_pad != B:
        pad = b_pad - B
        xih_t = jnp.pad(xih_t, ((0, 0), (0, 0), (0, pad)))
        mf_t = jnp.pad(mf_t, ((0, 0), (0, pad)))
        nf_t = jnp.pad(nf_t, ((0, 0), (0, pad)))
    n_tiles = b_pad // b_tile

    w1 = params["w1"]                                                      # [MLP, 23]
    kernel_inputs = (
        xih_t, mf_t, nf_t,
        params["w_hh"],                                                    # [4H, H]
        w1[:, :LSTM_HIDDEN],                                               # [MLP, H]
        w1[:, LSTM_HIDDEN:LSTM_HIDDEN + METHOD_EMBED_DIM],                 # [MLP, M]
        w1[:, LSTM_HIDDEN + METHOD_EMBED_DIM:],                            # [MLP, 3]
        params["b1"][:, None],                                             # [MLP, 1]
        params["w2"].T,                                                    # [MLP, 1]
        params["b2"][:, None],                                             # [1, 1]
    )

    def _rep(shape):
        zeros = (0,) * len(shape)
        return pl.BlockSpec(shape, lambda bi: zeros)                       # replicated weights

    in_specs = [
        pl.BlockSpec((T, H4, b_tile), lambda bi: (0, 0, bi)),
        pl.BlockSpec((METHOD_EMBED_DIM, b_tile), lambda bi: (0, bi)),
        pl.BlockSpec((NUM_NUMERIC, b_tile), lambda bi: (0, bi)),
        _rep((H4, LSTM_HIDDEN)),
        _rep((MLP_HIDDEN, LSTM_HIDDEN)),
        _rep((MLP_HIDDEN, METHOD_EMBED_DIM)),
        _rep((MLP_HIDDEN, NUM_NUMERIC)),
        _rep((MLP_HIDDEN, 1)),
        _rep((MLP_HIDDEN, 1)),
        _rep((1, 1)),
    ]

    out = pl.pallas_call(
        aso_kernel,
        out_shape=jax.ShapeDtypeStruct((1, b_pad), jnp.float32),
        grid=(n_tiles,),
        in_specs=in_specs,
        out_specs=pl.BlockSpec((1, b_tile), lambda bi: (0, bi)),
        compiler_params=pltpu.CompilerParams(
            dimension_semantics=("parallel",)),
    )(*kernel_inputs)

    return out[0, :B][:, None]                                             # [B, 1]


# --------------------- deterministic parameter init --------------------------
def init_params(key):
    ks = jax.random.split(key, 10)
    H4 = 4 * LSTM_HIDDEN
    s = 0.1
    # PyTorch LSTM gate order along the 4H axis: i, f, g, o.
    return {
        "embedding": jax.random.normal(ks[0], (4, BASE_EMBED_DIM), jnp.float32),
        "method_emb": jax.random.normal(ks[1], (3, METHOD_EMBED_DIM), jnp.float32),
        "w_ih": s * jax.random.normal(ks[2], (H4, BASE_EMBED_DIM), jnp.float32),   # [4H, E]
        "w_hh": s * jax.random.normal(ks[3], (H4, LSTM_HIDDEN), jnp.float32),      # [4H, H]
        "b_ih": s * jax.random.normal(ks[4], (H4,), jnp.float32),
        "b_hh": s * jax.random.normal(ks[5], (H4,), jnp.float32),
        "w1": s * jax.random.normal(
            ks[6], (MLP_HIDDEN, LSTM_HIDDEN + METHOD_EMBED_DIM + NUM_NUMERIC), jnp.float32),
        "b1": s * jax.random.normal(ks[7], (MLP_HIDDEN,), jnp.float32),
        "w2": s * jax.random.normal(ks[8], (1, MLP_HIDDEN), jnp.float32),
        "b2": s * jax.random.normal(ks[9], (1,), jnp.float32),
    }


# ------------------------ pure-JAX reference ---------------------------------
def reference_forward(params, seq_idx, methods, numeric_feats):
    x_embed = jnp.take(params["embedding"], seq_idx, axis=0)               # [B, T, E]
    method_feat = jnp.take(params["method_emb"], methods, axis=0)          # [B, M]
    B = seq_idx.shape[0]
    H = LSTM_HIDDEN
    w_ih_t = params["w_ih"].T
    w_hh_t = params["w_hh"].T
    b = (params["b_ih"] + params["b_hh"])[None, :]
    h = jnp.zeros((B, H), jnp.float32)
    c = jnp.zeros((B, H), jnp.float32)
    for t in range(SEQ_LEN):
        gates = x_embed[:, t, :] @ w_ih_t + h @ w_hh_t + b
        i = jax.nn.sigmoid(gates[:, :H])
        f = jax.nn.sigmoid(gates[:, H:2 * H])
        g = jnp.tanh(gates[:, 2 * H:3 * H])
        o = jax.nn.sigmoid(gates[:, 3 * H:])
        c = f * c + i * g
        h = o * jnp.tanh(c)
    x = jnp.concatenate([h, method_feat, numeric_feats], axis=1)
    hid = jnp.maximum(x @ params["w1"].T + params["b1"][None, :], 0.0)
    return hid @ params["w2"].T + params["b2"][None, :]


if __name__ == "__main__":
    B = 2
    key = jax.random.PRNGKey(0)
    k_seq, k_meth, k_num, k_params = jax.random.split(key, 4)

    seq_idx = jax.random.randint(k_seq, (B, SEQ_LEN), 0, 4, dtype=jnp.int32)
    methods = jax.random.randint(k_meth, (B,), 0, 3, dtype=jnp.int32)
    numeric_feats = jax.random.normal(k_num, (B, NUM_NUMERIC), jnp.float32)

    params = init_params(k_params)

    out = aso_predictor_forward(params, seq_idx, methods, numeric_feats)
    out = jax.block_until_ready(out)

    ref = reference_forward(params, seq_idx, methods, numeric_feats)
    assert out.shape == (B, 1)
    np.testing.assert_allclose(np.asarray(out), np.asarray(ref), rtol=1e-4, atol=1e-4)

    print("KERNEL_OK")
</pallas_src>

<mosaic_0001>
module attributes {stable_mosaic.version = 11 : i64} {
  func.func @aso_kernel(%arg0: i32, %arg1: memref<15x64x2xf32, #tpu.memory_space<vmem>>, %arg2: memref<4x2xf32, #tpu.memory_space<vmem>>, %arg3: memref<3x2xf32, #tpu.memory_space<vmem>>, %arg4: memref<64x16xf32, #tpu.memory_space<vmem>>, %arg5: memref<64x16xf32, #tpu.memory_space<vmem>>, %arg6: memref<64x4xf32, #tpu.memory_space<vmem>>, %arg7: memref<64x3xf32, #tpu.memory_space<vmem>>, %arg8: memref<64x1xf32, #tpu.memory_space<vmem>>, %arg9: memref<64x1xf32, #tpu.memory_space<vmem>>, %arg10: memref<1x1xf32, #tpu.memory_space<vmem>>, %arg11: memref<1x2xf32, #tpu.memory_space<vmem>>) attributes {dimension_semantics = [#tpu.dimension_semantics<parallel>], iteration_bounds = array<i64: 1>, scalar_prefetch = 0 : i64, scratch_operands = 0 : i64, tpu.core_type = #tpu.core_type<tc>, window_params = [{transform_indices = @transform_0, window_bounds = array<i64: 15, 64, 2>}, {transform_indices = @transform_1, window_bounds = array<i64: 4, 2>}, {transform_indices = @transform_2, window_bounds = array<i64: 3, 2>}, {pipeline_mode = #tpu.pipeline_mode<synchronous>, transform_indices = @transform_3, window_bounds = array<i64: 64, 16>}, {pipeline_mode = #tpu.pipeline_mode<synchronous>, transform_indices = @transform_4, window_bounds = array<i64: 64, 16>}, {pipeline_mode = #tpu.pipeline_mode<synchronous>, transform_indices = @transform_5, window_bounds = array<i64: 64, 4>}, {pipeline_mode = #tpu.pipeline_mode<synchronous>, transform_indices = @transform_6, window_bounds = array<i64: 64, 3>}, {pipeline_mode = #tpu.pipeline_mode<synchronous>, transform_indices = @transform_7, window_bounds = array<i64: 64, 1>}, {pipeline_mode = #tpu.pipeline_mode<synchronous>, transform_indices = @transform_8, window_bounds = array<i64: 64, 1>}, {pipeline_mode = #tpu.pipeline_mode<synchronous>, transform_indices = @transform_9, window_bounds = array<i64: 1, 1>}, {transform_indices = @transform_10, window_bounds = array<i64: 1, 2>}]} {
    %c0 = arith.constant 0 : index
    %c0_0 = arith.constant 0 : index
    %0 = vector.load %arg4[%c0, %c0_0] : memref<64x16xf32, #tpu.memory_space<vmem>>, vector<64x16xf32>
    %c0_1 = arith.constant 0 : index
    %c0_2 = arith.constant 0 : index
    %1 = vector.load %arg6[%c0_1, %c0_2] : memref<64x4xf32, #tpu.memory_space<vmem>>, vector<64x4xf32>
    %c0_3 = arith.constant 0 : index
    %c0_4 = arith.constant 0 : index
    %2 = vector.load %arg2[%c0_3, %c0_4] : memref<4x2xf32, #tpu.memory_space<vmem>>, vector<4x2xf32>
    %cst = arith.constant dense<0.000000e+00> : vector<64x2xf32>
    %3 = tpu.matmul %1, %2, %cst {dimension_numbers = #tpu.dot_dimension_numbers<[1], [0], [0], [1], [0, 0, 1, 1], [], []>} : vector<64x4xf32>, vector<4x2xf32>, vector<64x2xf32> -> vector<64x2xf32>
    %c0_5 = arith.constant 0 : index
    %c0_6 = arith.constant 0 : index
    %4 = vector.load %arg7[%c0_5, %c0_6] : memref<64x3xf32, #tpu.memory_space<vmem>>, vector<64x3xf32>
    %c0_7 = arith.constant 0 : index
    %c0_8 = arith.constant 0 : index
    %5 = vector.load %arg3[%c0_7, %c0_8] : memref<3x2xf32, #tpu.memory_space<vmem>>, vector<3x2xf32>
    %cst_9 = arith.constant dense<0.000000e+00> : vector<64x2xf32>
    %6 = tpu.matmul %4, %5, %cst_9 {dimension_numbers = #tpu.dot_dimension_numbers<[1], [0], [0], [1], [0, 0, 1, 1], [], []>} : vector<64x3xf32>, vector<3x2xf32>, vector<64x2xf32> -> vector<64x2xf32>
    %7 = arith.addf %3, %6 : vector<64x2xf32>
    %c0_10 = arith.constant 0 : index
    %c0_11 = arith.constant 0 : index
    %8 = vector.load %arg8[%c0_10, %c0_11] : memref<64x1xf32, #tpu.memory_space<vmem>>, vector<64x1xf32>
    %9 = vector.broadcast %8 : vector<64x1xf32> to vector<64x2xf32>
    %10 = arith.addf %7, %9 : vector<64x2xf32>
    %cst_12 = arith.constant 0.000000e+00 : f32
    %11 = vector.broadcast %cst_12 : f32 to vector<16x2xf32>
    %cst_13 = arith.constant 0.000000e+00 : f32
    %12 = vector.broadcast %cst_13 : f32 to vector<16x2xf32>
    %c0_14 = arith.constant 0 : index
    %c0_15 = arith.constant 0 : index
    %c0_16 = arith.constant 0 : index
    %13 = vector.load %arg1[%c0_14, %c0_15, %c0_16] : memref<15x64x2xf32, #tpu.memory_space<vmem>>, vector<1x64x2xf32>
    %14 = vector.shape_cast %13 : vector<1x64x2xf32> to vector<64x2xf32>
    %cst_17 = arith.constant dense<0.000000e+00> : vector<64x2xf32>
    %15 = tpu.matmul %0, %11, %cst_17 {dimension_numbers = #tpu.dot_dimension_numbers<[1], [0], [0], [1], [0, 0, 1, 1], [], []>} : vector<64x16xf32>, vector<16x2xf32>, vector<64x2xf32> -> vector<64x2xf32>
    %16 = arith.addf %14, %15 : vector<64x2xf32>
    %17 = vector.extract_strided_slice %16 {offsets = [0, 0], sizes = [16, 2], strides = [1, 1]} : vector<64x2xf32> to vector<16x2xf32>
    %18 = arith.negf %17 : vector<16x2xf32>
    %19 = math.exp %18 : vector<16x2xf32>
    %cst_18 = arith.constant 1.000000e+00 : f32
    %20 = vector.broadcast %cst_18 : f32 to vector<16x2xf32>
    %21 = arith.addf %20, %19 : vector<16x2xf32>
    %22 = arith.divf %20, %21 : vector<16x2xf32>
    %23 = vector.extract_strided_slice %16 {offsets = [16, 0], sizes = [16, 2], strides = [1, 1]} : vector<64x2xf32> to vector<16x2xf32>
    %24 = arith.negf %23 : vector<16x2xf32>
    %25 = math.exp %24 : vector<16x2xf32>
    %cst_19 = arith.constant 1.000000e+00 : f32
    %26 = vector.broadcast %cst_19 : f32 to vector<16x2xf32>
    %27 = arith.addf %26, %25 : vector<16x2xf32>
    %28 = arith.divf %26, %27 : vector<16x2xf32>
    %29 = vector.extract_strided_slice %16 {offsets = [32, 0], sizes = [16, 2], strides = [1, 1]} : vector<64x2xf32> to vector<16x2xf32>
    %30 = math.tanh %29 : vector<16x2xf32>
    %31 = vector.extract_strided_slice %16 {offsets = [48, 0], sizes = [16, 2], strides = [1, 1]} : vector<64x2xf32> to vector<16x2xf32>
    %32 = arith.negf %31 : vector<16x2xf32>
    %33 = math.exp %32 : vector<16x2xf32>
    %cst_20 = arith.constant 1.000000e+00 : f32
    %34 = vector.broadcast %cst_20 : f32 to vector<16x2xf32>
    %35 = arith.addf %34, %33 : vector<16x2xf32>
    %36 = arith.divf %34, %35 : vector<16x2xf32>
    %37 = arith.mulf %28, %12 : vector<16x2xf32>
    %38 = arith.mulf %22, %30 : vector<16x2xf32>
    %39 = arith.addf %37, %38 : vector<16x2xf32>
    %40 = math.tanh %39 : vector<16x2xf32>
    %41 = arith.mulf %36, %40 : vector<16x2xf32>
    %c1 = arith.constant 1 : index
    %c0_21 = arith.constant 0 : index
    %c0_22 = arith.constant 0 : index
    %42 = vector.load %arg1[%c1, %c0_21, %c0_22] : memref<15x64x2xf32, #tpu.memory_space<vmem>>, vector<1x64x2xf32>
    %43 = vector.shape_cast %42 : vector<1x64x2xf32> to vector<64x2xf32>
    %cst_23 = arith.constant dense<0.000000e+00> : vector<64x2xf32>
    %44 = tpu.matmul %0, %41, %cst_23 {dimension_numbers = #tpu.dot_dimension_numbers<[1], [0], [0], [1], [0, 0, 1, 1], [], []>} : vector<64x16xf32>, vector<16x2xf32>, vector<64x2xf32> -> vector<64x2xf32>
    %45 = arith.addf %43, %44 : vector<64x2xf32>
    %46 = vector.extract_strided_slice %45 {offsets = [0, 0], sizes = [16, 2], strides = [1, 1]} : vector<64x2xf32> to vector<16x2xf32>
    %47 = arith.negf %46 : vector<16x2xf32>
    %48 = math.exp %47 : vector<16x2xf32>
    %cst_24 = arith.constant 1.000000e+00 : f32
    %49 = vector.broadcast %cst_24 : f32 to vector<16x2xf32>
    %50 = arith.addf %49, %48 : vector<16x2xf32>
    %51 = arith.divf %49, %50 : vector<16x2xf32>
    %52 = vector.extract_strided_slice %45 {offsets = [16, 0], sizes = [16, 2], strides = [1, 1]} : vector<64x2xf32> to vector<16x2xf32>
    %53 = arith.negf %52 : vector<16x2xf32>
    %54 = math.exp %53 : vector<16x2xf32>
    %cst_25 = arith.constant 1.000000e+00 : f32
    %55 = vector.broadcast %cst_25 : f32 to vector<16x2xf32>
    %56 = arith.addf %55, %54 : vector<16x2xf32>
    %57 = arith.divf %55, %56 : vector<16x2xf32>
    %58 = vector.extract_strided_slice %45 {offsets = [32, 0], sizes = [16, 2], strides = [1, 1]} : vector<64x2xf32> to vector<16x2xf32>
    %59 = math.tanh %58 : vector<16x2xf32>
    %60 = vector.extract_strided_slice %45 {offsets = [48, 0], sizes = [16, 2], strides = [1, 1]} : vector<64x2xf32> to vector<16x2xf32>
    %61 = arith.negf %60 : vector<16x2xf32>
    %62 = math.exp %61 : vector<16x2xf32>
    %cst_26 = arith.constant 1.000000e+00 : f32
    %63 = vector.broadcast %cst_26 : f32 to vector<16x2xf32>
    %64 = arith.addf %63, %62 : vector<16x2xf32>
    %65 = arith.divf %63, %64 : vector<16x2xf32>
    %66 = arith.mulf %57, %39 : vector<16x2xf32>
    %67 = arith.mulf %51, %59 : vector<16x2xf32>
    %68 = arith.addf %66, %67 : vector<16x2xf32>
    %69 = math.tanh %68 : vector<16x2xf32>
    %70 = arith.mulf %65, %69 : vector<16x2xf32>
    %c2 = arith.constant 2 : index
    %c0_27 = arith.constant 0 : index
    %c0_28 = arith.constant 0 : index
    %71 = vector.load %arg1[%c2, %c0_27, %c0_28] : memref<15x64x2xf32, #tpu.memory_space<vmem>>, vector<1x64x2xf32>
    %72 = vector.shape_cast %71 : vector<1x64x2xf32> to vector<64x2xf32>
    %cst_29 = arith.constant dense<0.000000e+00> : vector<64x2xf32>
    %73 = tpu.matmul %0, %70, %cst_29 {dimension_numbers = #tpu.dot_dimension_numbers<[1], [0], [0], [1], [0, 0, 1, 1], [], []>} : vector<64x16xf32>, vector<16x2xf32>, vector<64x2xf32> -> vector<64x2xf32>
    %74 = arith.addf %72, %73 : vector<64x2xf32>
    %75 = vector.extract_strided_slice %74 {offsets = [0, 0], sizes = [16, 2], strides = [1, 1]} : vector<64x2xf32> to vector<16x2xf32>
    %76 = arith.negf %75 : vector<16x2xf32>
    %77 = math.exp %76 : vector<16x2xf32>
    %cst_30 = arith.constant 1.000000e+00 : f32
    %78 = vector.broadcast %cst_30 : f32 to vector<16x2xf32>
    %79 = arith.addf %78, %77 : vector<16x2xf32>
    %80 = arith.divf %78, %79 : vector<16x2xf32>
    %81 = vector.extract_strided_slice %74 {offsets = [16, 0], sizes = [16, 2], strides = [1, 1]} : vector<64x2xf32> to vector<16x2xf32>
    %82 = arith.negf %81 : vector<16x2xf32>
    %83 = math.exp %82 : vector<16x2xf32>
    %cst_31 = arith.constant 1.000000e+00 : f32
    %84 = vector.broadcast %cst_31 : f32 to vector<16x2xf32>
    %85 = arith.addf %84, %83 : vector<16x2xf32>
    %86 = arith.divf %84, %85 : vector<16x2xf32>
    %87 = vector.extract_strided_slice %74 {offsets = [32, 0], sizes = [16, 2], strides = [1, 1]} : vector<64x2xf32> to vector<16x2xf32>
    %88 = math.tanh %87 : vector<16x2xf32>
    %89 = vector.extract_strided_slice %74 {offsets = [48, 0], sizes = [16, 2], strides = [1, 1]} : vector<64x2xf32> to vector<16x2xf32>
    %90 = arith.negf %89 : vector<16x2xf32>
    %91 = math.exp %90 : vector<16x2xf32>
    %cst_32 = arith.constant 1.000000e+00 : f32
    %92 = vector.broadcast %cst_32 : f32 to vector<16x2xf32>
    %93 = arith.addf %92, %91 : vector<16x2xf32>
    %94 = arith.divf %92, %93 : vector<16x2xf32>
    %95 = arith.mulf %86, %68 : vector<16x2xf32>
    %96 = arith.mulf %80, %88 : vector<16x2xf32>
    %97 = arith.addf %95, %96 : vector<16x2xf32>
    %98 = math.tanh %97 : vector<16x2xf32>
    %99 = arith.mulf %94, %98 : vector<16x2xf32>
    %c3 = arith.constant 3 : index
    %c0_33 = arith.constant 0 : index
    %c0_34 = arith.constant 0 : index
    %100 = vector.load %arg1[%c3, %c0_33, %c0_34] : memref<15x64x2xf32, #tpu.memory_space<vmem>>, vector<1x64x2xf32>
    %101 = vector.shape_cast %100 : vector<1x64x2xf32> to vector<64x2xf32>
    %cst_35 = arith.constant dense<0.000000e+00> : vector<64x2xf32>
    %102 = tpu.matmul %0, %99, %cst_35 {dimension_numbers = #tpu.dot_dimension_numbers<[1], [0], [0], [1], [0, 0, 1, 1], [], []>} : vector<64x16xf32>, vector<16x2xf32>, vector<64x2xf32> -> vector<64x2xf32>
    %103 = arith.addf %101, %102 : vector<64x2xf32>
    %104 = vector.extract_strided_slice %103 {offsets = [0, 0], sizes = [16, 2], strides = [1, 1]} : vector<64x2xf32> to vector<16x2xf32>
    %105 = arith.negf %104 : vector<16x2xf32>
    %106 = math.exp %105 : vector<16x2xf32>
    %cst_36 = arith.constant 1.000000e+00 : f32
    %107 = vector.broadcast %cst_36 : f32 to vector<16x2xf32>
    %108 = arith.addf %107, %106 : vector<16x2xf32>
    %109 = arith.divf %107, %108 : vector<16x2xf32>
    %110 = vector.extract_strided_slice %103 {offsets = [16, 0], sizes = [16, 2], strides = [1, 1]} : vector<64x2xf32> to vector<16x2xf32>
    %111 = arith.negf %110 : vector<16x2xf32>
    %112 = math.exp %111 : vector<16x2xf32>
    %cst_37 = arith.constant 1.000000e+00 : f32
    %113 = vector.broadcast %cst_37 : f32 to vector<16x2xf32>
    %114 = arith.addf %113, %112 : vector<16x2xf32>
    %115 = arith.divf %113, %114 : vector<16x2xf32>
    %116 = vector.extract_strided_slice %103 {offsets = [32, 0], sizes = [16, 2], strides = [1, 1]} : vector<64x2xf32> to vector<16x2xf32>
    %117 = math.tanh %116 : vector<16x2xf32>
    %118 = vector.extract_strided_slice %103 {offsets = [48, 0], sizes = [16, 2], strides = [1, 1]} : vector<64x2xf32> to vector<16x2xf32>
    %119 = arith.negf %118 : vector<16x2xf32>
    %120 = math.exp %119 : vector<16x2xf32>
    %cst_38 = arith.constant 1.000000e+00 : f32
    %121 = vector.broadcast %cst_38 : f32 to vector<16x2xf32>
    %122 = arith.addf %121, %120 : vector<16x2xf32>
    %123 = arith.divf %121, %122 : vector<16x2xf32>
    %124 = arith.mulf %115, %97 : vector<16x2xf32>
    %125 = arith.mulf %109, %117 : vector<16x2xf32>
    %126 = arith.addf %124, %125 : vector<16x2xf32>
    %127 = math.tanh %126 : vector<16x2xf32>
    %128 = arith.mulf %123, %127 : vector<16x2xf32>
    %c4 = arith.constant 4 : index
    %c0_39 = arith.constant 0 : index
    %c0_40 = arith.constant 0 : index
    %129 = vector.load %arg1[%c4, %c0_39, %c0_40] : memref<15x64x2xf32, #tpu.memory_space<vmem>>, vector<1x64x2xf32>
    %130 = vector.shape_cast %129 : vector<1x64x2xf32> to vector<64x2xf32>
    %cst_41 = arith.constant dense<0.000000e+00> : vector<64x2xf32>
    %131 = tpu.matmul %0, %128, %cst_41 {dimension_numbers = #tpu.dot_dimension_numbers<[1], [0], [0], [1], [0, 0, 1, 1], [], []>} : vector<64x16xf32>, vector<16x2xf32>, vector<64x2xf32> -> vector<64x2xf32>
    %132 = arith.addf %130, %131 : vector<64x2xf32>
    %133 = vector.extract_strided_slice %132 {offsets = [0, 0], sizes = [16, 2], strides = [1, 1]} : vector<64x2xf32> to vector<16x2xf32>
    %134 = arith.negf %133 : vector<16x2xf32>
    %135 = math.exp %134 : vector<16x2xf32>
    %cst_42 = arith.constant 1.000000e+00 : f32
    %136 = vector.broadcast %cst_42 : f32 to vector<16x2xf32>
    %137 = arith.addf %136, %135 : vector<16x2xf32>
    %138 = arith.divf %136, %137 : vector<16x2xf32>
    %139 = vector.extract_strided_slice %132 {offsets = [16, 0], sizes = [16, 2], strides = [1, 1]} : vector<64x2xf32> to vector<16x2xf32>
    %140 = arith.negf %139 : vector<16x2xf32>
    %141 = math.exp %140 : vector<16x2xf32>
    %cst_43 = arith.constant 1.000000e+00 : f32
    %142 = vector.broadcast %cst_43 : f32 to vector<16x2xf32>
    %143 = arith.addf %142, %141 : vector<16x2xf32>
    %144 = arith.divf %142, %143 : vector<16x2xf32>
    %145 = vector.extract_strided_slice %132 {offsets = [32, 0], sizes = [16, 2], strides = [1, 1]} : vector<64x2xf32> to vector<16x2xf32>
    %146 = math.tanh %145 : vector<16x2xf32>
    %147 = vector.extract_strided_slice %132 {offsets = [48, 0], sizes = [16, 2], strides = [1, 1]} : vector<64x2xf32> to vector<16x2xf32>
    %148 = arith.negf %147 : vector<16x2xf32>
    %149 = math.exp %148 : vector<16x2xf32>
    %cst_44 = arith.constant 1.000000e+00 : f32
    %150 = vector.broadcast %cst_44 : f32 to vector<16x2xf32>
    %151 = arith.addf %150, %149 : vector<16x2xf32>
    %152 = arith.divf %150, %151 : vector<16x2xf32>
    %153 = arith.mulf %144, %126 : vector<16x2xf32>
    %154 = arith.mulf %138, %146 : vector<16x2xf32>
    %155 = arith.addf %153, %154 : vector<16x2xf32>
    %156 = math.tanh %155 : vector<16x2xf32>
    %157 = arith.mulf %152, %156 : vector<16x2xf32>
    %c5 = arith.constant 5 : index
    %c0_45 = arith.constant 0 : index
    %c0_46 = arith.constant 0 : index
    %158 = vector.load %arg1[%c5, %c0_45, %c0_46] : memref<15x64x2xf32, #tpu.memory_space<vmem>>, vector<1x64x2xf32>
    %159 = vector.shape_cast %158 : vector<1x64x2xf32> to vector<64x2xf32>
    %cst_47 = arith.constant dense<0.000000e+00> : vector<64x2xf32>
    %160 = tpu.matmul %0, %157, %cst_47 {dimension_numbers = #tpu.dot_dimension_numbers<[1], [0], [0], [1], [0, 0, 1, 1], [], []>} : vector<64x16xf32>, vector<16x2xf32>, vector<64x2xf32> -> vector<64x2xf32>
    %161 = arith.addf %159, %160 : vector<64x2xf32>
    %162 = vector.extract_strided_slice %161 {offsets = [0, 0], sizes = [16, 2], strides = [1, 1]} : vector<64x2xf32> to vector<16x2xf32>
    %163 = arith.negf %162 : vector<16x2xf32>
    %164 = math.exp %163 : vector<16x2xf32>
    %cst_48 = arith.constant 1.000000e+00 : f32
    %165 = vector.broadcast %cst_48 : f32 to vector<16x2xf32>
    %166 = arith.addf %165, %164 : vector<16x2xf32>
    %167 = arith.divf %165, %166 : vector<16x2xf32>
    %168 = vector.extract_strided_slice %161 {offsets = [16, 0], sizes = [16, 2], strides = [1, 1]} : vector<64x2xf32> to vector<16x2xf32>
    %169 = arith.negf %168 : vector<16x2xf32>
    %170 = math.exp %169 : vector<16x2xf32>
    %cst_49 = arith.constant 1.000000e+00 : f32
    %171 = vector.broadcast %cst_49 : f32 to vector<16x2xf32>
    %172 = arith.addf %171, %170 : vector<16x2xf32>
    %173 = arith.divf %171, %172 : vector<16x2xf32>
    %174 = vector.extract_strided_slice %161 {offsets = [32, 0], sizes = [16, 2], strides = [1, 1]} : vector<64x2xf32> to vector<16x2xf32>
    %175 = math.tanh %174 : vector<16x2xf32>
    %176 = vector.extract_strided_slice %161 {offsets = [48, 0], sizes = [16, 2], strides = [1, 1]} : vector<64x2xf32> to vector<16x2xf32>
    %177 = arith.negf %176 : vector<16x2xf32>
    %178 = math.exp %177 : vector<16x2xf32>
    %cst_50 = arith.constant 1.000000e+00 : f32
    %179 = vector.broadcast %cst_50 : f32 to vector<16x2xf32>
    %180 = arith.addf %179, %178 : vector<16x2xf32>
    %181 = arith.divf %179, %180 : vector<16x2xf32>
    %182 = arith.mulf %173, %155 : vector<16x2xf32>
    %183 = arith.mulf %167, %175 : vector<16x2xf32>
    %184 = arith.addf %182, %183 : vector<16x2xf32>
    %185 = math.tanh %184 : vector<16x2xf32>
    %186 = arith.mulf %181, %185 : vector<16x2xf32>
    %c6 = arith.constant 6 : index
    %c0_51 = arith.constant 0 : index
    %c0_52 = arith.constant 0 : index
    %187 = vector.load %arg1[%c6, %c0_51, %c0_52] : memref<15x64x2xf32, #tpu.memory_space<vmem>>, vector<1x64x2xf32>
    %188 = vector.shape_cast %187 : vector<1x64x2xf32> to vector<64x2xf32>
    %cst_53 = arith.constant dense<0.000000e+00> : vector<64x2xf32>
    %189 = tpu.matmul %0, %186, %cst_53 {dimension_numbers = #tpu.dot_dimension_numbers<[1], [0], [0], [1], [0, 0, 1, 1], [], []>} : vector<64x16xf32>, vector<16x2xf32>, vector<64x2xf32> -> vector<64x2xf32>
    %190 = arith.addf %188, %189 : vector<64x2xf32>
    %191 = vector.extract_strided_slice %190 {offsets = [0, 0], sizes = [16, 2], strides = [1, 1]} : vector<64x2xf32> to vector<16x2xf32>
    %192 = arith.negf %191 : vector<16x2xf32>
    %193 = math.exp %192 : vector<16x2xf32>
    %cst_54 = arith.constant 1.000000e+00 : f32
    %194 = vector.broadcast %cst_54 : f32 to vector<16x2xf32>
    %195 = arith.addf %194, %193 : vector<16x2xf32>
    %196 = arith.divf %194, %195 : vector<16x2xf32>
    %197 = vector.extract_strided_slice %190 {offsets = [16, 0], sizes = [16, 2], strides = [1, 1]} : vector<64x2xf32> to vector<16x2xf32>
    %198 = arith.negf %197 : vector<16x2xf32>
    %199 = math.exp %198 : vector<16x2xf32>
    %cst_55 = arith.constant 1.000000e+00 : f32
    %200 = vector.broadcast %cst_55 : f32 to vector<16x2xf32>
    %201 = arith.addf %200, %199 : vector<16x2xf32>
    %202 = arith.divf %200, %201 : vector<16x2xf32>
    %203 = vector.extract_strided_slice %190 {offsets = [32, 0], sizes = [16, 2], strides = [1, 1]} : vector<64x2xf32> to vector<16x2xf32>
    %204 = math.tanh %203 : vector<16x2xf32>
    %205 = vector.extract_strided_slice %190 {offsets = [48, 0], sizes = [16, 2], strides = [1, 1]} : vector<64x2xf32> to vector<16x2xf32>
    %206 = arith.negf %205 : vector<16x2xf32>
    %207 = math.exp %206 : vector<16x2xf32>
    %cst_56 = arith.constant 1.000000e+00 : f32
    %208 = vector.broadcast %cst_56 : f32 to vector<16x2xf32>
    %209 = arith.addf %208, %207 : vector<16x2xf32>
    %210 = arith.divf %208, %209 : vector<16x2xf32>
    %211 = arith.mulf %202, %184 : vector<16x2xf32>
    %212 = arith.mulf %196, %204 : vector<16x2xf32>
    %213 = arith.addf %211, %212 : vector<16x2xf32>
    %214 = math.tanh %213 : vector<16x2xf32>
    %215 = arith.mulf %210, %214 : vector<16x2xf32>
    %c7 = arith.constant 7 : index
    %c0_57 = arith.constant 0 : index
    %c0_58 = arith.constant 0 : index
    %216 = vector.load %arg1[%c7, %c0_57, %c0_58] : memref<15x64x2xf32, #tpu.memory_space<vmem>>, vector<1x64x2xf32>
    %217 = vector.shape_cast %216 : vector<1x64x2xf32> to vector<64x2xf32>
    %cst_59 = arith.constant dense<0.000000e+00> : vector<64x2xf32>
    %218 = tpu.matmul %0, %215, %cst_59 {dimension_numbers = #tpu.dot_dimension_numbers<[1], [0], [0], [1], [0, 0, 1, 1], [], []>} : vector<64x16xf32>, vector<16x2xf32>, vector<64x2xf32> -> vector<64x2xf32>
    %219 = arith.addf %217, %218 : vector<64x2xf32>
    %220 = vector.extract_strided_slice %219 {offsets = [0, 0], sizes = [16, 2], strides = [1, 1]} : vector<64x2xf32> to vector<16x2xf32>
    %221 = arith.negf %220 : vector<16x2xf32>
    %222 = math.exp %221 : vector<16x2xf32>
    %cst_60 = arith.constant 1.000000e+00 : f32
    %223 = vector.broadcast %cst_60 : f32 to vector<16x2xf32>
    %224 = arith.addf %223, %222 : vector<16x2xf32>
    %225 = arith.divf %223, %224 : vector<16x2xf32>
    %226 = vector.extract_strided_slice %219 {offsets = [16, 0], sizes = [16, 2], strides = [1, 1]} : vector<64x2xf32> to vector<16x2xf32>
    %227 = arith.negf %226 : vector<16x2xf32>
    %228 = math.exp %227 : vector<16x2xf32>
    %cst_61 = arith.constant 1.000000e+00 : f32
    %229 = vector.broadcast %cst_61 : f32 to vector<16x2xf32>
    %230 = arith.addf %229, %228 : vector<16x2xf32>
    %231 = arith.divf %229, %230 : vector<16x2xf32>
    %232 = vector.extract_strided_slice %219 {offsets = [32, 0], sizes = [16, 2], strides = [1, 1]} : vector<64x2xf32> to vector<16x2xf32>
    %233 = math.tanh %232 : vector<16x2xf32>
    %234 = vector.extract_strided_slice %219 {offsets = [48, 0], sizes = [16, 2], strides = [1, 1]} : vector<64x2xf32> to vector<16x2xf32>
    %235 = arith.negf %234 : vector<16x2xf32>
    %236 = math.exp %235 : vector<16x2xf32>
    %cst_62 = arith.constant 1.000000e+00 : f32
    %237 = vector.broadcast %cst_62 : f32 to vector<16x2xf32>
    %238 = arith.addf %237, %236 : vector<16x2xf32>
    %239 = arith.divf %237, %238 : vector<16x2xf32>
    %240 = arith.mulf %231, %213 : vector<16x2xf32>
    %241 = arith.mulf %225, %233 : vector<16x2xf32>
    %242 = arith.addf %240, %241 : vector<16x2xf32>
    %243 = math.tanh %242 : vector<16x2xf32>
    %244 = arith.mulf %239, %243 : vector<16x2xf32>
    %c8 = arith.constant 8 : index
    %c0_63 = arith.constant 0 : index
    %c0_64 = arith.constant 0 : index
    %245 = vector.load %arg1[%c8, %c0_63, %c0_64] : memref<15x64x2xf32, #tpu.memory_space<vmem>>, vector<1x64x2xf32>
    %246 = vector.shape_cast %245 : vector<1x64x2xf32> to vector<64x2xf32>
    %cst_65 = arith.constant dense<0.000000e+00> : vector<64x2xf32>
    %247 = tpu.matmul %0, %244, %cst_65 {dimension_numbers = #tpu.dot_dimension_numbers<[1], [0], [0], [1], [0, 0, 1, 1], [], []>} : vector<64x16xf32>, vector<16x2xf32>, vector<64x2xf32> -> vector<64x2xf32>
    %248 = arith.addf %246, %247 : vector<64x2xf32>
    %249 = vector.extract_strided_slice %248 {offsets = [0, 0], sizes = [16, 2], strides = [1, 1]} : vector<64x2xf32> to vector<16x2xf32>
    %250 = arith.negf %249 : vector<16x2xf32>
    %251 = math.exp %250 : vector<16x2xf32>
    %cst_66 = arith.constant 1.000000e+00 : f32
    %252 = vector.broadcast %cst_66 : f32 to vector<16x2xf32>
    %253 = arith.addf %252, %251 : vector<16x2xf32>
    %254 = arith.divf %252, %253 : vector<16x2xf32>
    %255 = vector.extract_strided_slice %248 {offsets = [16, 0], sizes = [16, 2], strides = [1, 1]} : vector<64x2xf32> to vector<16x2xf32>
    %256 = arith.negf %255 : vector<16x2xf32>
    %257 = math.exp %256 : vector<16x2xf32>
    %cst_67 = arith.constant 1.000000e+00 : f32
    %258 = vector.broadcast %cst_67 : f32 to vector<16x2xf32>
    %259 = arith.addf %258, %257 : vector<16x2xf32>
    %260 = arith.divf %258, %259 : vector<16x2xf32>
    %261 = vector.extract_strided_slice %248 {offsets = [32, 0], sizes = [16, 2], strides = [1, 1]} : vector<64x2xf32> to vector<16x2xf32>
    %262 = math.tanh %261 : vector<16x2xf32>
    %263 = vector.extract_strided_slice %248 {offsets = [48, 0], sizes = [16, 2], strides = [1, 1]} : vector<64x2xf32> to vector<16x2xf32>
    %264 = arith.negf %263 : vector<16x2xf32>
    %265 = math.exp %264 : vector<16x2xf32>
    %cst_68 = arith.constant 1.000000e+00 : f32
    %266 = vector.broadcast %cst_68 : f32 to vector<16x2xf32>
    %267 = arith.addf %266, %265 : vector<16x2xf32>
    %268 = arith.divf %266, %267 : vector<16x2xf32>
    %269 = arith.mulf %260, %242 : vector<16x2xf32>
    %270 = arith.mulf %254, %262 : vector<16x2xf32>
    %271 = arith.addf %269, %270 : vector<16x2xf32>
    %272 = math.tanh %271 : vector<16x2xf32>
    %273 = arith.mulf %268, %272 : vector<16x2xf32>
    %c9 = arith.constant 9 : index
    %c0_69 = arith.constant 0 : index
    %c0_70 = arith.constant 0 : index
    %274 = vector.load %arg1[%c9, %c0_69, %c0_70] : memref<15x64x2xf32, #tpu.memory_space<vmem>>, vector<1x64x2xf32>
    %275 = vector.shape_cast %274 : vector<1x64x2xf32> to vector<64x2xf32>
    %cst_71 = arith.constant dense<0.000000e+00> : vector<64x2xf32>
    %276 = tpu.matmul %0, %273, %cst_71 {dimension_numbers = #tpu.dot_dimension_numbers<[1], [0], [0], [1], [0, 0, 1, 1], [], []>} : vector<64x16xf32>, vector<16x2xf32>, vector<64x2xf32> -> vector<64x2xf32>
    %277 = arith.addf %275, %276 : vector<64x2xf32>
    %278 = vector.extract_strided_slice %277 {offsets = [0, 0], sizes = [16, 2], strides = [1, 1]} : vector<64x2xf32> to vector<16x2xf32>
    %279 = arith.negf %278 : vector<16x2xf32>
    %280 = math.exp %279 : vector<16x2xf32>
    %cst_72 = arith.constant 1.000000e+00 : f32
    %281 = vector.broadcast %cst_72 : f32 to vector<16x2xf32>
    %282 = arith.addf %281, %280 : vector<16x2xf32>
    %283 = arith.divf %281, %282 : vector<16x2xf32>
    %284 = vector.extract_strided_slice %277 {offsets = [16, 0], sizes = [16, 2], strides = [1, 1]} : vector<64x2xf32> to vector<16x2xf32>
    %285 = arith.negf %284 : vector<16x2xf32>
    %286 = math.exp %285 : vector<16x2xf32>
    %cst_73 = arith.constant 1.000000e+00 : f32
    %287 = vector.broadcast %cst_73 : f32 to vector<16x2xf32>
    %288 = arith.addf %287, %286 : vector<16x2xf32>
    %289 = arith.divf %287, %288 : vector<16x2xf32>
    %290 = vector.extract_strided_slice %277 {offsets = [32, 0], sizes = [16, 2], strides = [1, 1]} : vector<64x2xf32> to vector<16x2xf32>
    %291 = math.tanh %290 : vector<16x2xf32>
    %292 = vector.extract_strided_slice %277 {offsets = [48, 0], sizes = [16, 2], strides = [1, 1]} : vector<64x2xf32> to vector<16x2xf32>
    %293 = arith.negf %292 : vector<16x2xf32>
    %294 = math.exp %293 : vector<16x2xf32>
    %cst_74 = arith.constant 1.000000e+00 : f32
    %295 = vector.broadcast %cst_74 : f32 to vector<16x2xf32>
    %296 = arith.addf %295, %294 : vector<16x2xf32>
    %297 = arith.divf %295, %296 : vector<16x2xf32>
    %298 = arith.mulf %289, %271 : vector<16x2xf32>
    %299 = arith.mulf %283, %291 : vector<16x2xf32>
    %300 = arith.addf %298, %299 : vector<16x2xf32>
    %301 = math.tanh %300 : vector<16x2xf32>
    %302 = arith.mulf %297, %301 : vector<16x2xf32>
    %c10 = arith.constant 10 : index
    %c0_75 = arith.constant 0 : index
    %c0_76 = arith.constant 0 : index
    %303 = vector.load %arg1[%c10, %c0_75, %c0_76] : memref<15x64x2xf32, #tpu.memory_space<vmem>>, vector<1x64x2xf32>
    %304 = vector.shape_cast %303 : vector<1x64x2xf32> to vector<64x2xf32>
    %cst_77 = arith.constant dense<0.000000e+00> : vector<64x2xf32>
    %305 = tpu.matmul %0, %302, %cst_77 {dimension_numbers = #tpu.dot_dimension_numbers<[1], [0], [0], [1], [0, 0, 1, 1], [], []>} : vector<64x16xf32>, vector<16x2xf32>, vector<64x2xf32> -> vector<64x2xf32>
    %306 = arith.addf %304, %305 : vector<64x2xf32>
    %307 = vector.extract_strided_slice %306 {offsets = [0, 0], sizes = [16, 2], strides = [1, 1]} : vector<64x2xf32> to vector<16x2xf32>
    %308 = arith.negf %307 : vector<16x2xf32>
    %309 = math.exp %308 : vector<16x2xf32>
    %cst_78 = arith.constant 1.000000e+00 : f32
    %310 = vector.broadcast %cst_78 : f32 to vector<16x2xf32>
    %311 = arith.addf %310, %309 : vector<16x2xf32>
    %312 = arith.divf %310, %311 : vector<16x2xf32>
    %313 = vector.extract_strided_slice %306 {offsets = [16, 0], sizes = [16, 2], strides = [1, 1]} : vector<64x2xf32> to vector<16x2xf32>
    %314 = arith.negf %313 : vector<16x2xf32>
    %315 = math.exp %314 : vector<16x2xf32>
    %cst_79 = arith.constant 1.000000e+00 : f32
    %316 = vector.broadcast %cst_79 : f32 to vector<16x2xf32>
    %317 = arith.addf %316, %315 : vector<16x2xf32>
    %318 = arith.divf %316, %317 : vector<16x2xf32>
    %319 = vector.extract_strided_slice %306 {offsets = [32, 0], sizes = [16, 2], strides = [1, 1]} : vector<64x2xf32> to vector<16x2xf32>
    %320 = math.tanh %319 : vector<16x2xf32>
    %321 = vector.extract_strided_slice %306 {offsets = [48, 0], sizes = [16, 2], strides = [1, 1]} : vector<64x2xf32> to vector<16x2xf32>
    %322 = arith.negf %321 : vector<16x2xf32>
    %323 = math.exp %322 : vector<16x2xf32>
    %cst_80 = arith.constant 1.000000e+00 : f32
    %324 = vector.broadcast %cst_80 : f32 to vector<16x2xf32>
    %325 = arith.addf %324, %323 : vector<16x2xf32>
    %326 = arith.divf %324, %325 : vector<16x2xf32>
    %327 = arith.mulf %318, %300 : vector<16x2xf32>
    %328 = arith.mulf %312, %320 : vector<16x2xf32>
    %329 = arith.addf %327, %328 : vector<16x2xf32>
    %330 = math.tanh %329 : vector<16x2xf32>
    %331 = arith.mulf %326, %330 : vector<16x2xf32>
    %c11 = arith.constant 11 : index
    %c0_81 = arith.constant 0 : index
    %c0_82 = arith.constant 0 : index
    %332 = vector.load %arg1[%c11, %c0_81, %c0_82] : memref<15x64x2xf32, #tpu.memory_space<vmem>>, vector<1x64x2xf32>
    %333 = vector.shape_cast %332 : vector<1x64x2xf32> to vector<64x2xf32>
    %cst_83 = arith.constant dense<0.000000e+00> : vector<64x2xf32>
    %334 = tpu.matmul %0, %331, %cst_83 {dimension_numbers = #tpu.dot_dimension_numbers<[1], [0], [0], [1], [0, 0, 1, 1], [], []>} : vector<64x16xf32>, vector<16x2xf32>, vector<64x2xf32> -> vector<64x2xf32>
    %335 = arith.addf %333, %334 : vector<64x2xf32>
    %336 = vector.extract_strided_slice %335 {offsets = [0, 0], sizes = [16, 2], strides = [1, 1]} : vector<64x2xf32> to vector<16x2xf32>
    %337 = arith.negf %336 : vector<16x2xf32>
    %338 = math.exp %337 : vector<16x2xf32>
    %cst_84 = arith.constant 1.000000e+00 : f32
    %339 = vector.broadcast %cst_84 : f32 to vector<16x2xf32>
    %340 = arith.addf %339, %338 : vector<16x2xf32>
    %341 = arith.divf %339, %340 : vector<16x2xf32>
    %342 = vector.extract_strided_slice %335 {offsets = [16, 0], sizes = [16, 2], strides = [1, 1]} : vector<64x2xf32> to vector<16x2xf32>
    %343 = arith.negf %342 : vector<16x2xf32>
    %344 = math.exp %343 : vector<16x2xf32>
    %cst_85 = arith.constant 1.000000e+00 : f32
    %345 = vector.broadcast %cst_85 : f32 to vector<16x2xf32>
    %346 = arith.addf %345, %344 : vector<16x2xf32>
    %347 = arith.divf %345, %346 : vector<16x2xf32>
    %348 = vector.extract_strided_slice %335 {offsets = [32, 0], sizes = [16, 2], strides = [1, 1]} : vector<64x2xf32> to vector<16x2xf32>
    %349 = math.tanh %348 : vector<16x2xf32>
    %350 = vector.extract_strided_slice %335 {offsets = [48, 0], sizes = [16, 2], strides = [1, 1]} : vector<64x2xf32> to vector<16x2xf32>
    %351 = arith.negf %350 : vector<16x2xf32>
    %352 = math.exp %351 : vector<16x2xf32>
    %cst_86 = arith.constant 1.000000e+00 : f32
    %353 = vector.broadcast %cst_86 : f32 to vector<16x2xf32>
    %354 = arith.addf %353, %352 : vector<16x2xf32>
    %355 = arith.divf %353, %354 : vector<16x2xf32>
    %356 = arith.mulf %347, %329 : vector<16x2xf32>
    %357 = arith.mulf %341, %349 : vector<16x2xf32>
    %358 = arith.addf %356, %357 : vector<16x2xf32>
    %359 = math.tanh %358 : vector<16x2xf32>
    %360 = arith.mulf %355, %359 : vector<16x2xf32>
    %c12 = arith.constant 12 : index
    %c0_87 = arith.constant 0 : index
    %c0_88 = arith.constant 0 : index
    %361 = vector.load %arg1[%c12, %c0_87, %c0_88] : memref<15x64x2xf32, #tpu.memory_space<vmem>>, vector<1x64x2xf32>
    %362 = vector.shape_cast %361 : vector<1x64x2xf32> to vector<64x2xf32>
    %cst_89 = arith.constant dense<0.000000e+00> : vector<64x2xf32>
    %363 = tpu.matmul %0, %360, %cst_89 {dimension_numbers = #tpu.dot_dimension_numbers<[1], [0], [0], [1], [0, 0, 1, 1], [], []>} : vector<64x16xf32>, vector<16x2xf32>, vector<64x2xf32> -> vector<64x2xf32>
    %364 = arith.addf %362, %363 : vector<64x2xf32>
    %365 = vector.extract_strided_slice %364 {offsets = [0, 0], sizes = [16, 2], strides = [1, 1]} : vector<64x2xf32> to vector<16x2xf32>
    %366 = arith.negf %365 : vector<16x2xf32>
    %367 = math.exp %366 : vector<16x2xf32>
    %cst_90 = arith.constant 1.000000e+00 : f32
    %368 = vector.broadcast %cst_90 : f32 to vector<16x2xf32>
    %369 = arith.addf %368, %367 : vector<16x2xf32>
    %370 = arith.divf %368, %369 : vector<16x2xf32>
    %371 = vector.extract_strided_slice %364 {offsets = [16, 0], sizes = [16, 2], strides = [1, 1]} : vector<64x2xf32> to vector<16x2xf32>
    %372 = arith.negf %371 : vector<16x2xf32>
    %373 = math.exp %372 : vector<16x2xf32>
    %cst_91 = arith.constant 1.000000e+00 : f32
    %374 = vector.broadcast %cst_91 : f32 to vector<16x2xf32>
    %375 = arith.addf %374, %373 : vector<16x2xf32>
    %376 = arith.divf %374, %375 : vector<16x2xf32>
    %377 = vector.extract_strided_slice %364 {offsets = [32, 0], sizes = [16, 2], strides = [1, 1]} : vector<64x2xf32> to vector<16x2xf32>
    %378 = math.tanh %377 : vector<16x2xf32>
    %379 = vector.extract_strided_slice %364 {offsets = [48, 0], sizes = [16, 2], strides = [1, 1]} : vector<64x2xf32> to vector<16x2xf32>
    %380 = arith.negf %379 : vector<16x2xf32>
    %381 = math.exp %380 : vector<16x2xf32>
    %cst_92 = arith.constant 1.000000e+00 : f32
    %382 = vector.broadcast %cst_92 : f32 to vector<16x2xf32>
    %383 = arith.addf %382, %381 : vector<16x2xf32>
    %384 = arith.divf %382, %383 : vector<16x2xf32>
    %385 = arith.mulf %376, %358 : vector<16x2xf32>
    %386 = arith.mulf %370, %378 : vector<16x2xf32>
    %387 = arith.addf %385, %386 : vector<16x2xf32>
    %388 = math.tanh %387 : vector<16x2xf32>
    %389 = arith.mulf %384, %388 : vector<16x2xf32>
    %c13 = arith.constant 13 : index
    %c0_93 = arith.constant 0 : index
    %c0_94 = arith.constant 0 : index
    %390 = vector.load %arg1[%c13, %c0_93, %c0_94] : memref<15x64x2xf32, #tpu.memory_space<vmem>>, vector<1x64x2xf32>
    %391 = vector.shape_cast %390 : vector<1x64x2xf32> to vector<64x2xf32>
    %cst_95 = arith.constant dense<0.000000e+00> : vector<64x2xf32>
    %392 = tpu.matmul %0, %389, %cst_95 {dimension_numbers = #tpu.dot_dimension_numbers<[1], [0], [0], [1], [0, 0, 1, 1], [], []>} : vector<64x16xf32>, vector<16x2xf32>, vector<64x2xf32> -> vector<64x2xf32>
    %393 = arith.addf %391, %392 : vector<64x2xf32>
    %394 = vector.extract_strided_slice %393 {offsets = [0, 0], sizes = [16, 2], strides = [1, 1]} : vector<64x2xf32> to vector<16x2xf32>
    %395 = arith.negf %394 : vector<16x2xf32>
    %396 = math.exp %395 : vector<16x2xf32>
    %cst_96 = arith.constant 1.000000e+00 : f32
    %397 = vector.broadcast %cst_96 : f32 to vector<16x2xf32>
    %398 = arith.addf %397, %396 : vector<16x2xf32>
    %399 = arith.divf %397, %398 : vector<16x2xf32>
    %400 = vector.extract_strided_slice %393 {offsets = [16, 0], sizes = [16, 2], strides = [1, 1]} : vector<64x2xf32> to vector<16x2xf32>
    %401 = arith.negf %400 : vector<16x2xf32>
    %402 = math.exp %401 : vector<16x2xf32>
    %cst_97 = arith.constant 1.000000e+00 : f32
    %403 = vector.broadcast %cst_97 : f32 to vector<16x2xf32>
    %404 = arith.addf %403, %402 : vector<16x2xf32>
    %405 = arith.divf %403, %404 : vector<16x2xf32>
    %406 = vector.extract_strided_slice %393 {offsets = [32, 0], sizes = [16, 2], strides = [1, 1]} : vector<64x2xf32> to vector<16x2xf32>
    %407 = math.tanh %406 : vector<16x2xf32>
    %408 = vector.extract_strided_slice %393 {offsets = [48, 0], sizes = [16, 2], strides = [1, 1]} : vector<64x2xf32> to vector<16x2xf32>
    %409 = arith.negf %408 : vector<16x2xf32>
    %410 = math.exp %409 : vector<16x2xf32>
    %cst_98 = arith.constant 1.000000e+00 : f32
    %411 = vector.broadcast %cst_98 : f32 to vector<16x2xf32>
    %412 = arith.addf %411, %410 : vector<16x2xf32>
    %413 = arith.divf %411, %412 : vector<16x2xf32>
    %414 = arith.mulf %405, %387 : vector<16x2xf32>
    %415 = arith.mulf %399, %407 : vector<16x2xf32>
    %416 = arith.addf %414, %415 : vector<16x2xf32>
    %417 = math.tanh %416 : vector<16x2xf32>
    %418 = arith.mulf %413, %417 : vector<16x2xf32>
    %c14 = arith.constant 14 : index
    %c0_99 = arith.constant 0 : index
    %c0_100 = arith.constant 0 : index
    %419 = vector.load %arg1[%c14, %c0_99, %c0_100] : memref<15x64x2xf32, #tpu.memory_space<vmem>>, vector<1x64x2xf32>
    %420 = vector.shape_cast %419 : vector<1x64x2xf32> to vector<64x2xf32>
    %cst_101 = arith.constant dense<0.000000e+00> : vector<64x2xf32>
    %421 = tpu.matmul %0, %418, %cst_101 {dimension_numbers = #tpu.dot_dimension_numbers<[1], [0], [0], [1], [0, 0, 1, 1], [], []>} : vector<64x16xf32>, vector<16x2xf32>, vector<64x2xf32> -> vector<64x2xf32>
    %422 = arith.addf %420, %421 : vector<64x2xf32>
    %423 = vector.extract_strided_slice %422 {offsets = [0, 0], sizes = [16, 2], strides = [1, 1]} : vector<64x2xf32> to vector<16x2xf32>
    %424 = arith.negf %423 : vector<16x2xf32>
    %425 = math.exp %424 : vector<16x2xf32>
    %cst_102 = arith.constant 1.000000e+00 : f32
    %426 = vector.broadcast %cst_102 : f32 to vector<16x2xf32>
    %427 = arith.addf %426, %425 : vector<16x2xf32>
    %428 = arith.divf %426, %427 : vector<16x2xf32>
    %429 = vector.extract_strided_slice %422 {offsets = [16, 0], sizes = [16, 2], strides = [1, 1]} : vector<64x2xf32> to vector<16x2xf32>
    %430 = arith.negf %429 : vector<16x2xf32>
    %431 = math.exp %430 : vector<16x2xf32>
    %cst_103 = arith.constant 1.000000e+00 : f32
    %432 = vector.broadcast %cst_103 : f32 to vector<16x2xf32>
    %433 = arith.addf %432, %431 : vector<16x2xf32>
    %434 = arith.divf %432, %433 : vector<16x2xf32>
    %435 = vector.extract_strided_slice %422 {offsets = [32, 0], sizes = [16, 2], strides = [1, 1]} : vector<64x2xf32> to vector<16x2xf32>
    %436 = math.tanh %435 : vector<16x2xf32>
    %437 = vector.extract_strided_slice %422 {offsets = [48, 0], sizes = [16, 2], strides = [1, 1]} : vector<64x2xf32> to vector<16x2xf32>
    %438 = arith.negf %437 : vector<16x2xf32>
    %439 = math.exp %438 : vector<16x2xf32>
    %cst_104 = arith.constant 1.000000e+00 : f32
    %440 = vector.broadcast %cst_104 : f32 to vector<16x2xf32>
    %441 = arith.addf %440, %439 : vector<16x2xf32>
    %442 = arith.divf %440, %441 : vector<16x2xf32>
    %443 = arith.mulf %434, %416 : vector<16x2xf32>
    %444 = arith.mulf %428, %436 : vector<16x2xf32>
    %445 = arith.addf %443, %444 : vector<16x2xf32>
    %446 = math.tanh %445 : vector<16x2xf32>
    %447 = arith.mulf %442, %446 : vector<16x2xf32>
    %c0_105 = arith.constant 0 : index
    %c0_106 = arith.constant 0 : index
    %448 = vector.load %arg5[%c0_105, %c0_106] : memref<64x16xf32, #tpu.memory_space<vmem>>, vector<64x16xf32>
    %cst_107 = arith.constant dense<0.000000e+00> : vector<64x2xf32>
    %449 = tpu.matmul %448, %447, %cst_107 {dimension_numbers = #tpu.dot_dimension_numbers<[1], [0], [0], [1], [0, 0, 1, 1], [], []>} : vector<64x16xf32>, vector<16x2xf32>, vector<64x2xf32> -> vector<64x2xf32>
    %450 = arith.addf %449, %10 : vector<64x2xf32>
    %cst_108 = arith.constant 0.000000e+00 : f32
    %451 = vector.broadcast %cst_108 : f32 to vector<64x2xf32>
    %452 = arith.maximumf %450, %451 : vector<64x2xf32>
    %c0_109 = arith.constant 0 : index
    %c0_110 = arith.constant 0 : index
    %453 = vector.load %arg9[%c0_109, %c0_110] : memref<64x1xf32, #tpu.memory_space<vmem>>, vector<64x1xf32>
    %454 = vector.broadcast %453 : vector<64x1xf32> to vector<64x2xf32>
    %455 = arith.mulf %452, %454 : vector<64x2xf32>
    %cst_111 = arith.constant dense<0.000000e+00> : vector<2xf32>
    %456 = vector.multi_reduction <add>, %455, %cst_111 [0] : vector<64x2xf32> to vector<2xf32>
    %457 = vector.shape_cast %456 : vector<2xf32> to vector<1x2xf32>
    %c0_112 = arith.constant 0 : index
    %c0_113 = arith.constant 0 : index
    %458 = vector.load %arg10[%c0_112, %c0_113] : memref<1x1xf32, #tpu.memory_space<vmem>>, vector<1x1xf32>
    %459 = vector.broadcast %458 : vector<1x1xf32> to vector<1x2xf32>
    %460 = arith.addf %457, %459 : vector<1x2xf32>
    %c0_114 = arith.constant 0 : index
    %c0_115 = arith.constant 0 : index
    %461 = vector.load %arg11[%c0_114, %c0_115] : memref<1x2xf32, #tpu.memory_space<vmem>>, vector<1x2xf32>
    tpu.vector_store %arg11[%c0_114, %c0_115], %460 {strides = array<i32>} : memref<1x2xf32, #tpu.memory_space<vmem>>, vector<1x2xf32>,
    return
  }
  func.func @transform_0(%arg0: i32) -> (i32, i32, i32) {
    %c0_i32 = arith.constant 0 : i32
    %c0_i32_0 = arith.constant 0 : i32
    %c0_i32_1 = arith.constant 0 : i32
    return %c0_i32, %c0_i32_0, %arg0 : i32, i32, i32
  }
  func.func @transform_1(%arg0: i32) -> (i32, i32) {
    %c0_i32 = arith.constant 0 : i32
    %c0_i32_0 = arith.constant 0 : i32
    return %c0_i32, %arg0 : i32, i32
  }
  func.func @transform_2(%arg0: i32) -> (i32, i32) {
    %c0_i32 = arith.constant 0 : i32
    %c0_i32_0 = arith.constant 0 : i32
    return %c0_i32, %arg0 : i32, i32
  }
  func.func @transform_3(%arg0: i32) -> (i32, i32) {
    %c0_i32 = arith.constant 0 : i32
    %c0_i32_0 = arith.constant 0 : i32
    %c0_i32_1 = arith.constant 0 : i32
    return %c0_i32, %c0_i32_0 : i32, i32
  }
  func.func @transform_4(%arg0: i32) -> (i32, i32) {
    %c0_i32 = arith.constant 0 : i32
    %c0_i32_0 = arith.constant 0 : i32
    %c0_i32_1 = arith.constant 0 : i32
    return %c0_i32, %c0_i32_0 : i32, i32
  }
  func.func @transform_5(%arg0: i32) -> (i32, i32) {
    %c0_i32 = arith.constant 0 : i32
    %c0_i32_0 = arith.constant 0 : i32
    %c0_i32_1 = arith.constant 0 : i32
    return %c0_i32, %c0_i32_0 : i32, i32
  }
  func.func @transform_6(%arg0: i32) -> (i32, i32) {
    %c0_i32 = arith.constant 0 : i32
    %c0_i32_0 = arith.constant 0 : i32
    %c0_i32_1 = arith.constant 0 : i32
    return %c0_i32, %c0_i32_0 : i32, i32
  }
  func.func @transform_7(%arg0: i32) -> (i32, i32) {
    %c0_i32 = arith.constant 0 : i32
    %c0_i32_0 = arith.constant 0 : i32
    %c0_i32_1 = arith.constant 0 : i32
    return %c0_i32, %c0_i32_0 : i32, i32
  }
  func.func @transform_8(%arg0: i32) -> (i32, i32) {
    %c0_i32 = arith.constant 0 : i32
    %c0_i32_0 = arith.constant 0 : i32
    %c0_i32_1 = arith.constant 0 : i32
    return %c0_i32, %c0_i32_0 : i32, i32
  }
  func.func @transform_9(%arg0: i32) -> (i32, i32) {
    %c0_i32 = arith.constant 0 : i32
    %c0_i32_0 = arith.constant 0 : i32
    %c0_i32_1 = arith.constant 0 : i32
    return %c0_i32, %c0_i32_0 : i32, i32
  }
  func.func @transform_10(%arg0: i32) -> (i32, i32) {
    %c0_i32 = arith.constant 0 : i32
    %c0_i32_0 = arith.constant 0 : i32
    return %c0_i32, %arg0 : i32, i32
  }
}

</mosaic_0001>

<llo_original>
// kernel: tpu_custom_call.1
$region0: #{tpu_custom_call.1}
  #allocation0 [shape = 'u32[]', space=smem, size = 0x4, offset = 0x4, fixed_abs, tag = 'smem constant byte address 0x4 - core index']
  #allocation1 [shape = 'u32[144,128]{1,0:T(1,128)}', space=vmem, size = 0x12000, scoped, tag = 'internal scratch']
  #allocation2 [shape = 'f32[1,1]{1,0:T(1,128)S(1)}', space=vmem, size = 0x200, scoped, tag = 'scoped memory for tpu_custom_call.1']
  %s0 = inlined_call_operand.vmem [shape: f32[15,64,2], index: 0, kind: input, shape index: {}]
  %s1 = inlined_call_operand.vmem [shape: f32[4,2], index: 1, kind: input, shape index: {}]
  %s2 = inlined_call_operand.vmem [shape: f32[3,2], index: 2, kind: input, shape index: {}]
  %s3 = inlined_call_operand.vmem [shape: f32[64,16], index: 3, kind: input, shape index: {}]
  %s4 = inlined_call_operand.vmem [shape: f32[64,16], index: 4, kind: input, shape index: {}]
  %s5 = inlined_call_operand.vmem [shape: f32[64,4], index: 5, kind: input, shape index: {}]
  %s6 = inlined_call_operand.vmem [shape: f32[64,3], index: 6, kind: input, shape index: {}]
  %s7 = inlined_call_operand.vmem [shape: f32[64,1], index: 7, kind: input, shape index: {}]
  %s8 = inlined_call_operand.vmem [shape: f32[64,1], index: 8, kind: input, shape index: {}]
  %s9 = inlined_call_operand.<no memory space> [shape: f32[1,1], index: 9, kind: input, shape index: {}]
  %s10 = inlined_call_operand.hbm [shape: f32[1,2], index: 10, kind: output, shape index: {}]
  %s11 = sld [smem:[#allocation0]]
  $region50: #{tpu_custom_call.1} parent=0
    _
  %s13 = ssub.s32 1, %s11
  %s14 = scalar_select 0, %s13, %s11
  %v15 = vstv %s9
  %16 = vst [vmem:[#allocation2] sm:$0x1] %v15
  $region1: #{tpu_custom_call.1} parent=0
    #allocation3 [shape = 'u8[512]{0}', space=vmem, size = 0x400, scoped, tag = 'output window, operand 0, single buffered']
    #allocation4 [shape = 's32[1]{0}', space=sflag, size = 0x4, scoped, tag = 'scoped memory for tpu_custom_call.1']
    %17 = vsyncpa [#allocation4], 0
    // Predicated region
    $region2: #{tpu_custom_call.1} parent=1 // pred_check
      _
    $region3: #{tpu_custom_call.1} parent=1 // pred_check_branch
      %19 = sbr.rel (0) target = $region5
    $region4: #{tpu_custom_call.1} parent=1 // pred_region
      _
    $region5: #{tpu_custom_call.1} parent=1 // pred_fallthru
      _
    // Predicated region
    $region6: #{tpu_custom_call.1} parent=1 // pred_check
      _
    $region7: #{tpu_custom_call.1} parent=1 // pred_check_branch
      %21 = sbr.rel (0) target = $region9
    $region8: #{tpu_custom_call.1} parent=1 // pred_region
      _
    $region9: #{tpu_custom_call.1} parent=1 // pred_fallthru
      _
    // Predicated region
    $region10: #{tpu_custom_call.1} parent=1 // pred_check
      _
    $region11: #{tpu_custom_call.1} parent=1 // pred_check_branch
      %23 = sbr.rel (0) target = $region13
    $region12: #{tpu_custom_call.1} parent=1 // pred_region
      _
    $region13: #{tpu_custom_call.1} parent=1 // pred_fallthru
      _
    // Predicated region
    $region14: #{tpu_custom_call.1} parent=1 // pred_check
      _
    $region15: #{tpu_custom_call.1} parent=1 // pred_check_branch
      %25 = sbr.rel (0) target = $region17
    $region16: #{tpu_custom_call.1} parent=1 // pred_region
      _
    $region17: #{tpu_custom_call.1} parent=1 // pred_fallthru
      _
    // Predicated region
    $region18: #{tpu_custom_call.1} parent=1 // pred_check
      _
    $region19: #{tpu_custom_call.1} parent=1 // pred_check_branch
      %27 = sbr.rel (0) target = $region21
    $region20: #{tpu_custom_call.1} parent=1 // pred_region
      _
    $region21: #{tpu_custom_call.1} parent=1 // pred_fallthru
      _
    // Predicated region
    $region22: #{tpu_custom_call.1} parent=1 // pred_check
      _
    $region23: #{tpu_custom_call.1} parent=1 // pred_check_branch
      %29 = sbr.rel (0) target = $region25
    $region24: #{tpu_custom_call.1} parent=1 // pred_region
      _
    $region25: #{tpu_custom_call.1} parent=1 // pred_fallthru
      _
    // Predicated region
    $region26: #{tpu_custom_call.1} parent=1 // pred_check
      _
    $region27: #{tpu_custom_call.1} parent=1 // pred_check_branch
      %31 = sbr.rel (0) target = $region29
    $region28: #{tpu_custom_call.1} parent=1 // pred_region
      _
    $region29: #{tpu_custom_call.1} parent=1 // pred_fallthru
      _
    // Predicated region
    $region30: #{tpu_custom_call.1} parent=1 // pred_check
      _
    $region31: #{tpu_custom_call.1} parent=1 // pred_check_branch
      %33 = sbr.rel (0) target = $region33
    $region32: #{tpu_custom_call.1} parent=1 // pred_region
      _
    $region33: #{tpu_custom_call.1} parent=1 // pred_fallthru
      _
    // Predicated region
    $region34: #{tpu_custom_call.1} parent=1 // pred_check
      _
    $region35: #{tpu_custom_call.1} parent=1 // pred_check_branch
      %35 = sbr.rel (0) target = $region37
    $region36: #{tpu_custom_call.1} parent=1 // pred_region
      _
    $region37: #{tpu_custom_call.1} parent=1 // pred_fallthru
      _
    // Predicated region
    $region38: #{tpu_custom_call.1} parent=1 // pred_check
      _
    $region39: #{tpu_custom_call.1} parent=1 // pred_check_branch
      %37 = sbr.rel (0) target = $region41
    $region40: #{tpu_custom_call.1} parent=1 // pred_region
      _
    $region41: #{tpu_custom_call.1} parent=1 // pred_fallthru
      _
    %v38 = vld [vmem:[%s3] sm:$0xff]
    %v39 = vld [vmem:[%s3 + $0x8] sm:$0xff]
    %v40 = vld [vmem:[%s3 + $0x10] sm:$0xff]
    %v41 = vld [vmem:[%s3 + $0x18] sm:$0xff]
    %v42 = vld [vmem:[%s3 + $0x20] sm:$0xff]
    %v43 = vld [vmem:[%s3 + $0x28] sm:$0xff]
    %v44 = vld [vmem:[%s3 + $0x30] sm:$0xff]
    %v45 = vld [vmem:[%s3 + $0x38] sm:$0xff]
    %v46 = vld [vmem:[%s5] sm:$0xff]
    %v47 = vld [vmem:[%s5 + $0x8] sm:$0xff]
    %v48 = vld [vmem:[%s5 + $0x10] sm:$0xff]
    %v49 = vld [vmem:[%s5 + $0x18] sm:$0xff]
    %v50 = vld [vmem:[%s5 + $0x20] sm:$0xff]
    %v51 = vld [vmem:[%s5 + $0x28] sm:$0xff]
    %v52 = vld [vmem:[%s5 + $0x30] sm:$0xff]
    %v53 = vld [vmem:[%s5 + $0x38] sm:$0xff]
    %v54 = vld [vmem:[%s1] sm:$0xf]
    %v55 = vld [vmem:[%s6] sm:$0xff]
    %v56 = vld [vmem:[%s6 + $0x8] sm:$0xff]
    %v57 = vld [vmem:[%s6 + $0x10] sm:$0xff]
    %v58 = vld [vmem:[%s6 + $0x18] sm:$0xff]
    %v59 = vld [vmem:[%s6 + $0x20] sm:$0xff]
    %v60 = vld [vmem:[%s6 + $0x28] sm:$0xff]
    %v61 = vld [vmem:[%s6 + $0x30] sm:$0xff]
    %v62 = vld [vmem:[%s6 + $0x38] sm:$0xff]
    %v63 = vld [vmem:[%s2] sm:$0x7]
    %vm64 = vcmask 23552
    %v66 = vsel %vm64, %v55, 0
    %v69 = vsel %vm64, %v56, 0
    %v72 = vsel %vm64, %v57, 0
    %v75 = vsel %vm64, %v58, 0
    %v78 = vsel %vm64, %v59, 0
    %v81 = vsel %vm64, %v60, 0
    %v84 = vsel %vm64, %v61, 0
    %v87 = vsel %vm64, %v62, 0
    %vm89 = vcmask 1042432
    %v91 = vsel %vm89, %v63, 0
    %93 = vmatprep.subr.mxu0 0.0
    %94 = vmatpush1.msra.mxu0 %v91
    %95 = vmatprep.subr.mxu0 0.0
    %96 = vmatpush1.msra.mxu0 0.0
    %97 = vmatprep.subr.mxu0 0.0
    %98 = vmatpush1.msra.mxu0 0.0
    %99 = vmatprep.subr.mxu0 0.0
    %100 = vmatpush1.msra.mxu0 0.0
    %101 = vmatprep.subr.mxu0 0.0
    %102 = vmatpush1.msra.mxu0 0.0
    %103 = vmatprep.subr.mxu0 0.0
    %104 = vmatpush1.msra.mxu0 0.0
    %105 = vmatprep.subr.mxu0 0.0
    %106 = vmatpush1.msra.mxu0 0.0
    %107 = vmatprep.subr.mxu0 0.0
    %108 = vmatpush1.msra.mxu0 0.0
    %109 = vmatprep.subr.mxu0 0.0
    %110 = vmatpush1.msra.mxu0 0.0
    %111 = vmatprep.subr.mxu0 0.0
    %112 = vmatpush1.msra.mxu0 0.0
    %113 = vmatprep.subr.mxu0 0.0
    %114 = vmatpush1.msra.mxu0 0.0
    %115 = vmatprep.subr.mxu0 0.0
    %116 = vmatpush1.msra.mxu0 0.0
    %117 = vmatprep.subr.mxu0 0.0
    %118 = vmatpush1.msra.mxu0 0.0
    %119 = vmatprep.subr.mxu0 0.0
    %120 = vmatpush1.msra.mxu0 0.0
    %121 = vmatprep.subr.mxu0 0.0
    %122 = vmatpush1.msra.mxu0 0.0
    %123 = vmatprep.subr.mxu0 0.0
    %124 = vmatpush1.msra.mxu0 0.0
    %125 = vmatprep.subr.mxu0 0.0
    %126 = vmatpush1.msra.mxu0 0.0
    %127 = vmatprep.subr.mxu0 0.0
    %128 = vmatpush1.msra.mxu0 0.0
    %129 = vmatprep.subr.mxu0 0.0
    %130 = vmatpush1.msra.mxu0 0.0
    %131 = vmatprep.subr.mxu0 0.0
    %132 = vmatpush1.msra.mxu0 0.0
    %133 = vmatprep.subr.mxu0 0.0
    %134 = vmatpush1.msra.mxu0 0.0
    %135 = vmatprep.subr.mxu0 0.0
    %136 = vmatpush1.msra.mxu0 0.0
    %137 = vmatprep.subr.mxu0 0.0
    %138 = vmatpush1.msra.mxu0 0.0
    %139 = vmatprep.subr.mxu0 0.0
    %140 = vmatpush1.msra.mxu0 0.0
    %141 = vmatprep.subr.mxu0 0.0
    %142 = vmatpush1.msra.mxu0 0.0
    %143 = vmatprep.subr.mxu0 0.0
    %144 = vmatpush1.msra.mxu0 0.0
    %145 = vmatprep.subr.mxu0 0.0
    %146 = vmatpush1.msra.mxu0 0.0
    %147 = vmatprep.subr.mxu0 0.0
    %148 = vmatpush1.msra.mxu0 0.0
    %149 = vmatprep.subr.mxu0 0.0
    %150 = vmatpush1.msra.mxu0 0.0
    %151 = vmatprep.subr.mxu0 0.0
    %152 = vmatpush1.msra.mxu0 0.0
    %153 = vmatprep.subr.mxu0 0.0
    %154 = vmatpush1.msra.mxu0 0.0
    %155 = vmatprep.subr.mxu0 0.0
    %156 = vmatpush1.msra.mxu0 0.0
    %157 = vmatprep.mubr.f32.mxu0 0.0
    %158 = vmatmul.mubr.f32.gmra.mrb[0].mxu0 %v66
    %v159 = vpop.f32.mrb[0].mxu0
    %v160 = vadd.f32 0.0, %v159
    %v161 = vpop.f32.mrb[0].mxu0
    %162 = vmatprep.mubr.f32.mxu0 0.0
    %163 = vmatmul.mubr.f32.gmra.mrb[0].mxu0 %v69
    %v164 = vpop.f32.mrb[0].mxu0
    %v165 = vadd.f32 0.0, %v164
    %v166 = vpop.f32.mrb[0].mxu0
    %167 = vmatprep.mubr.f32.mxu0 0.0
    %168 = vmatmul.mubr.f32.gmra.mrb[0].mxu0 %v72
    %v169 = vpop.f32.mrb[0].mxu0
    %v170 = vadd.f32 0.0, %v169
    %v171 = vpop.f32.mrb[0].mxu0
    %172 = vmatprep.mubr.f32.mxu0 0.0
    %173 = vmatmul.mubr.f32.gmra.mrb[0].mxu0 %v75
    %v174 = vpop.f32.mrb[0].mxu0
    %v175 = vadd.f32 0.0, %v174
    %v176 = vpop.f32.mrb[0].mxu0
    %177 = vmatprep.mubr.f32.mxu0 0.0
    %178 = vmatmul.mubr.f32.gmra.mrb[0].mxu0 %v78
    %v179 = vpop.f32.mrb[0].mxu0
    %v180 = vadd.f32 0.0, %v179
    %v181 = vpop.f32.mrb[0].mxu0
    %182 = vmatprep.mubr.f32.mxu0 0.0
    %183 = vmatmul.mubr.f32.gmra.mrb[0].mxu0 %v81
    %v184 = vpop.f32.mrb[0].mxu0
    %v185 = vadd.f32 0.0, %v184
    %v186 = vpop.f32.mrb[0].mxu0
    %187 = vmatprep.mubr.f32.mxu0 0.0
    %188 = vmatmul.mubr.f32.gmra.mrb[0].mxu0 %v84
    %v189 = vpop.f32.mrb[0].mxu0
    %v190 = vadd.f32 0.0, %v189
    %v191 = vpop.f32.mrb[0].mxu0
    %192 = vmatprep.mubr.f32.mxu0 0.0
    %193 = vmatmul.mubr.f32.gmra.mrb[0].mxu0 %v87
    %v194 = vpop.f32.mrb[0].mxu0
    %v195 = vadd.f32 0.0, %v194
    %v196 = vpop.f32.mrb[0].mxu0
    %197 = vdwg.mxu0
    %vm198 = vcmask 31744
    %v200 = vsel %vm198, %v46, 0
    %v203 = vsel %vm198, %v47, 0
    %v206 = vsel %vm198, %v48, 0
    %v209 = vsel %vm198, %v49, 0
    %v212 = vsel %vm198, %v50, 0
    %v215 = vsel %vm198, %v51, 0
    %v218 = vsel %vm198, %v52, 0
    %v221 = vsel %vm198, %v53, 0
    %vm223 = vcmask 1043456
    %v225 = vsel %vm223, %v54, 0
    %227 = vmatprep.subr.mxu0 0.0
    %228 = vmatpush1.msra.mxu0 %v225
    %229 = vmatprep.subr.mxu0 0.0
    %230 = vmatpush1.msra.mxu0 0.0
    %231 = vmatprep.subr.mxu0 0.0
    %232 = vmatpush1.msra.mxu0 0.0
    %233 = vmatprep.subr.mxu0 0.0
    %234 = vmatpush1.msra.mxu0 0.0
    %235 = vmatprep.subr.mxu0 0.0
    %236 = vmatpush1.msra.mxu0 0.0
    %237 = vmatprep.subr.mxu0 0.0
    %238 = vmatpush1.msra.mxu0 0.0
    %239 = vmatprep.subr.mxu0 0.0
    %240 = vmatpush1.msra.mxu0 0.0
    %241 = vmatprep.subr.mxu0 0.0
    %242 = vmatpush1.msra.mxu0 0.0
    %243 = vmatprep.subr.mxu0 0.0
    %244 = vmatpush1.msra.mxu0 0.0
    %245 = vmatprep.subr.mxu0 0.0
    %246 = vmatpush1.msra.mxu0 0.0
    %247 = vmatprep.subr.mxu0 0.0
    %248 = vmatpush1.msra.mxu0 0.0
    %249 = vmatprep.subr.mxu0 0.0
    %250 = vmatpush1.msra.mxu0 0.0
    %251 = vmatprep.subr.mxu0 0.0
    %252 = vmatpush1.msra.mxu0 0.0
    %253 = vmatprep.subr.mxu0 0.0
    %254 = vmatpush1.msra.mxu0 0.0
    %255 = vmatprep.subr.mxu0 0.0
    %256 = vmatpush1.msra.mxu0 0.0
    %257 = vmatprep.subr.mxu0 0.0
    %258 = vmatpush1.msra.mxu0 0.0
    %259 = vmatprep.subr.mxu0 0.0
    %260 = vmatpush1.msra.mxu0 0.0
    %261 = vmatprep.subr.mxu0 0.0
    %262 = vmatpush1.msra.mxu0 0.0
    %263 = vmatprep.subr.mxu0 0.0
    %264 = vmatpush1.msra.mxu0 0.0
    %265 = vmatprep.subr.mxu0 0.0
    %266 = vmatpush1.msra.mxu0 0.0
    %267 = vmatprep.subr.mxu0 0.0
    %268 = vmatpush1.msra.mxu0 0.0
    %269 = vmatprep.subr.mxu0 0.0
    %270 = vmatpush1.msra.mxu0 0.0
    %271 = vmatprep.subr.mxu0 0.0
    %272 = vmatpush1.msra.mxu0 0.0
    %273 = vmatprep.subr.mxu0 0.0
    %274 = vmatpush1.msra.mxu0 0.0
    %275 = vmatprep.subr.mxu0 0.0
    %276 = vmatpush1.msra.mxu0 0.0
    %277 = vmatprep.subr.mxu0 0.0
    %278 = vmatpush1.msra.mxu0 0.0
    %279 = vmatprep.subr.mxu0 0.0
    %280 = vmatpush1.msra.mxu0 0.0
    %281 = vmatprep.subr.mxu0 0.0
    %282 = vmatpush1.msra.mxu0 0.0
    %283 = vmatprep.subr.mxu0 0.0
    %284 = vmatpush1.msra.mxu0 0.0
    %285 = vmatprep.subr.mxu0 0.0
    %286 = vmatpush1.msra.mxu0 0.0
    %287 = vmatprep.subr.mxu0 0.0
    %288 = vmatpush1.msra.mxu0 0.0
    %289 = vmatprep.subr.mxu0 0.0
    %290 = vmatpush1.msra.mxu0 0.0
    %291 = vmatprep.mubr.f32.mxu0 0.0
    %292 = vmatmul.mubr.f32.gmra.mrb[0].mxu0 %v200
    %v293 = vpop.f32.mrb[0].mxu0
    %v294 = vadd.f32 %v160, %v293
    %v295 = vpop.f32.mrb[0].mxu0
    %296 = vmatprep.mubr.f32.mxu0 0.0
    %297 = vmatmul.mubr.f32.gmra.mrb[0].mxu0 %v203
    %v298 = vpop.f32.mrb[0].mxu0
    %v299 = vadd.f32 %v165, %v298
    %v300 = vpop.f32.mrb[0].mxu0
    %301 = vmatprep.mubr.f32.mxu0 0.0
    %302 = vmatmul.mubr.f32.gmra.mrb[0].mxu0 %v206
    %v303 = vpop.f32.mrb[0].mxu0
    %v304 = vadd.f32 %v170, %v303
    %v305 = vpop.f32.mrb[0].mxu0
    %306 = vmatprep.mubr.f32.mxu0 0.0
    %307 = vmatmul.mubr.f32.gmra.mrb[0].mxu0 %v209
    %v308 = vpop.f32.mrb[0].mxu0
    %v309 = vadd.f32 %v175, %v308
    %v310 = vpop.f32.mrb[0].mxu0
    %311 = vmatprep.mubr.f32.mxu0 0.0
    %312 = vmatmul.mubr.f32.gmra.mrb[0].mxu0 %v212
    %v313 = vpop.f32.mrb[0].mxu0
    %v314 = vadd.f32 %v180, %v313
    %v315 = vpop.f32.mrb[0].mxu0
    %316 = vmatprep.mubr.f32.mxu0 0.0
    %317 = vmatmul.mubr.f32.gmra.mrb[0].mxu0 %v215
    %v318 = vpop.f32.mrb[0].mxu0
    %v319 = vadd.f32 %v185, %v318
    %v320 = vpop.f32.mrb[0].mxu0
    %321 = vmatprep.mubr.f32.mxu0 0.0
    %322 = vmatmul.mubr.f32.gmra.mrb[0].mxu0 %v218
    %v323 = vpop.f32.mrb[0].mxu0
    %v324 = vadd.f32 %v190, %v323
    %v325 = vpop.f32.mrb[0].mxu0
    %326 = vmatprep.mubr.f32.mxu0 0.0
    %327 = vmatmul.mubr.f32.gmra.mrb[0].mxu0 %v221
    %v328 = vpop.f32.mrb[0].mxu0
    %v329 = vadd.f32 %v195, %v328
    %v330 = vpop.f32.mrb[0].mxu0
    %331 = vdwg.mxu0
    %v332 = vld [vmem:[%s7] sm:$0xff]
    %v333 = vld [vmem:[%s7 + $0x8] sm:$0xff]
    %v334 = vld [vmem:[%s7 + $0x10] sm:$0xff]
    %v335 = vld [vmem:[%s7 + $0x18] sm:$0xff]
    %v336 = vld [vmem:[%s7 + $0x20] sm:$0xff]
    %v337 = vld [vmem:[%s7 + $0x28] sm:$0xff]
    %v338 = vld [vmem:[%s7 + $0x30] sm:$0xff]
    %v339 = vld [vmem:[%s7 + $0x38] sm:$0xff]
    %341 = vset.pattern.permute.xlu0 0
    %342 = vperm.xlu0 %341, %v332
    %v343 = vpop.permute.xlu0 %342
    %346 = vset.pattern.permute.xlu0 0
    %347 = vperm.xlu0 %346, %v333
    %v348 = vpop.permute.xlu0 %347
    %351 = vset.pattern.permute.xlu0 0
    %352 = vperm.xlu0 %351, %v334
    %v353 = vpop.permute.xlu0 %352
    %356 = vset.pattern.permute.xlu0 0
    %357 = vperm.xlu0 %356, %v335
    %v358 = vpop.permute.xlu0 %357
    %361 = vset.pattern.permute.xlu0 0
    %362 = vperm.xlu0 %361, %v336
    %v363 = vpop.permute.xlu0 %362
    %366 = vset.pattern.permute.xlu0 0
    %367 = vperm.xlu0 %366, %v337
    %v368 = vpop.permute.xlu0 %367
    %371 = vset.pattern.permute.xlu0 0
    %372 = vperm.xlu0 %371, %v338
    %v373 = vpop.permute.xlu0 %372
    %376 = vset.pattern.permute.xlu0 0
    %377 = vperm.xlu0 %376, %v339
    %v378 = vpop.permute.xlu0 %377
    %v380 = vadd.f32 %v294, %v343
    %v381 = vadd.f32 %v299, %v348
    %v382 = vadd.f32 %v304, %v353
    %v383 = vadd.f32 %v309, %v358
    %v384 = vadd.f32 %v314, %v363
    %v385 = vadd.f32 %v319, %v368
    %v386 = vadd.f32 %v324, %v373
    %v387 = vadd.f32 %v329, %v378
    %v388 = vld [vmem:[%s0] sm:$0xff]
    %v389 = vld [vmem:[%s0 + $0x8] sm:$0xff]
    %v390 = vld [vmem:[%s0 + $0x10] sm:$0xff]
    %v391 = vld [vmem:[%s0 + $0x18] sm:$0xff]
    %v392 = vld [vmem:[%s0 + $0x20] sm:$0xff]
    %v393 = vld [vmem:[%s0 + $0x28] sm:$0xff]
    %v394 = vld [vmem:[%s0 + $0x30] sm:$0xff]
    %v395 = vld [vmem:[%s0 + $0x38] sm:$0xff]
    %vm396 = vcmask 130048
    %v398 = vsel %vm396, %v38, 0
    %v401 = vsel %vm396, %v39, 0
    %v404 = vsel %vm396, %v40, 0
    %v407 = vsel %vm396, %v41, 0
    %v410 = vsel %vm396, %v42, 0
    %v413 = vsel %vm396, %v43, 0
    %v416 = vsel %vm396, %v44, 0
    %v419 = vsel %vm396, %v45, 0
    %421 = vmatprep.subr.mxu0 0.0
    %422 = vmatpush1.msra.mxu0 0.0
    %423 = vmatprep.subr.mxu0 0.0
    %424 = vmatpush1.msra.mxu0 0.0
    %425 = vmatprep.subr.mxu0 0.0
    %426 = vmatpush1.msra.mxu0 0.0
    %427 = vmatprep.subr.mxu0 0.0
    %428 = vmatpush1.msra.mxu0 0.0
    %429 = vmatprep.subr.mxu0 0.0
    %430 = vmatpush1.msra.mxu0 0.0
    %431 = vmatprep.subr.mxu0 0.0
    %432 = vmatpush1.msra.mxu0 0.0
    %433 = vmatprep.subr.mxu0 0.0
    %434 = vmatpush1.msra.mxu0 0.0
    %435 = vmatprep.subr.mxu0 0.0
    %436 = vmatpush1.msra.mxu0 0.0
    %437 = vmatprep.subr.mxu0 0.0
    %438 = vmatpush1.msra.mxu0 0.0
    %439 = vmatprep.subr.mxu0 0.0
    %440 = vmatpush1.msra.mxu0 0.0
    %441 = vmatprep.subr.mxu0 0.0
    %442 = vmatpush1.msra.mxu0 0.0
    %443 = vmatprep.subr.mxu0 0.0
    %444 = vmatpush1.msra.mxu0 0.0
    %445 = vmatprep.subr.mxu0 0.0
    %446 = vmatpush1.msra.mxu0 0.0
    %447 = vmatprep.subr.mxu0 0.0
    %448 = vmatpush1.msra.mxu0 0.0
    %449 = vmatprep.subr.mxu0 0.0
    %450 = vmatpush1.msra.mxu0 0.0
    %451 = vmatprep.subr.mxu0 0.0
    %452 = vmatpush1.msra.mxu0 0.0
    %453 = vmatprep.subr.mxu0 0.0
    %454 = vmatpush1.msra.mxu0 0.0
    %455 = vmatprep.subr.mxu0 0.0
    %456 = vmatpush1.msra.mxu0 0.0
    %457 = vmatprep.subr.mxu0 0.0
    %458 = vmatpush1.msra.mxu0 0.0
    %459 = vmatprep.subr.mxu0 0.0
    %460 = vmatpush1.msra.mxu0 0.0
    %461 = vmatprep.subr.mxu0 0.0
    %462 = vmatpush1.msra.mxu0 0.0
    %463 = vmatprep.subr.mxu0 0.0
    %464 = vmatpush1.msra.mxu0 0.0
    %465 = vmatprep.subr.mxu0 0.0
    %466 = vmatpush1.msra.mxu0 0.0
    %467 = vmatprep.subr.mxu0 0.0
    %468 = vmatpush1.msra.mxu0 0.0
    %469 = vmatprep.subr.mxu0 0.0
    %470 = vmatpush1.msra.mxu0 0.0
    %471 = vmatprep.subr.mxu0 0.0
    %472 = vmatpush1.msra.mxu0 0.0
    %473 = vmatprep.subr.mxu0 0.0
    %474 = vmatpush1.msra.mxu0 0.0
    %475 = vmatprep.subr.mxu0 0.0
    %476 = vmatpush1.msra.mxu0 0.0
    %477 = vmatprep.subr.mxu0 0.0
    %478 = vmatpush1.msra.mxu0 0.0
    %479 = vmatprep.subr.mxu0 0.0
    %480 = vmatpush1.msra.mxu0 0.0
    %481 = vmatprep.subr.mxu0 0.0
    %482 = vmatpush1.msra.mxu0 0.0
    %483 = vmatprep.subr.mxu0 0.0
    %484 = vmatpush1.msra.mxu0 0.0
    %485 = vmatprep.mubr.f32.mxu0 0.0
    %486 = vmatmul.mubr.f32.gmra.mrb[0].mxu0 %v398
    %v487 = vpop.f32.mrb[0].mxu0
    %v488 = vadd.f32 0.0, %v487
    %v489 = vpop.f32.mrb[0].mxu0
    %490 = vmatprep.mubr.f32.mxu0 0.0
    %491 = vmatmul.mubr.f32.gmra.mrb[0].mxu0 %v401
    %v492 = vpop.f32.mrb[0].mxu0
    %v493 = vadd.f32 0.0, %v492
    %v494 = vpop.f32.mrb[0].mxu0
    %495 = vmatprep.mubr.f32.mxu0 0.0
    %496 = vmatmul.mubr.f32.gmra.mrb[0].mxu0 %v404
    %v497 = vpop.f32.mrb[0].mxu0
    %v498 = vadd.f32 0.0, %v497
    %v499 = vpop.f32.mrb[0].mxu0
    %500 = vmatprep.mubr.f32.mxu0 0.0
    %501 = vmatmul.mubr.f32.gmra.mrb[0].mxu0 %v407
    %v502 = vpop.f32.mrb[0].mxu0
    %v503 = vadd.f32 0.0, %v502
    %v504 = vpop.f32.mrb[0].mxu0
    %505 = vmatprep.mubr.f32.mxu0 0.0
    %506 = vmatmul.mubr.f32.gmra.mrb[0].mxu0 %v410
    %v507 = vpop.f32.mrb[0].mxu0
    %v508 = vadd.f32 0.0, %v507
    %v509 = vpop.f32.mrb[0].mxu0
    %510 = vmatprep.mubr.f32.mxu0 0.0
    %511 = vmatmul.mubr.f32.gmra.mrb[0].mxu0 %v413
    %v512 = vpop.f32.mrb[0].mxu0
    %v513 = vadd.f32 0.0, %v512
    %v514 = vpop.f32.mrb[0].mxu0
    %515 = vmatprep.mubr.f32.mxu0 0.0
    %516 = vmatmul.mubr.f32.gmra.mrb[0].mxu0 %v416
    %v517 = vpop.f32.mrb[0].mxu0
    %v518 = vadd.f32 0.0, %v517
    %v519 = vpop.f32.mrb[0].mxu0
    %520 = vmatprep.mubr.f32.mxu0 0.0
    %521 = vmatmul.mubr.f32.gmra.mrb[0].mxu0 %v419
    %v522 = vpop.f32.mrb[0].mxu0
    %v523 = vadd.f32 0.0, %v522
    %v524 = vpop.f32.mrb[0].mxu0
    %525 = vdwg.mxu0
    %v526 = vadd.f32 %v388, %v488
    %v527 = vadd.f32 %v389, %v493
    %v528 = vadd.f32 %v390, %v498
    %v529 = vadd.f32 %v391, %v503
    %v530 = vadd.f32 %v392, %v508
    %v531 = vadd.f32 %v393, %v513
    %v532 = vadd.f32 %v394, %v518
    %v533 = vadd.f32 %v395, %v523
    %v534 = vxor.u32 %v526, 2147483648
    %v535 = vxor.u32 %v527, 2147483648
    %v536 = vmul.f32 %v534, 1.442695
    %v537 = vpow.pop %v536
    %v538 = vmul.f32 %v535, 1.442695
    %v539 = vpow.pop %v538
    %v540 = vadd.f32 %v537, 1.0
    %v541 = vadd.f32 %v539, 1.0
    %v542 = vrcp.pop %v540
    %v543 = vmul.f32 1.0, %v542
    %v544 = vrcp.pop %v541
    %v545 = vmul.f32 1.0, %v544
    %v546 = vxor.u32 %v528, 2147483648
    %v547 = vxor.u32 %v529, 2147483648
    %v548 = vmul.f32 %v546, 1.442695
    %v549 = vpow.pop %v548
    %v550 = vmul.f32 %v547, 1.442695
    %v551 = vpow.pop %v550
    %v552 = vadd.f32 %v549, 1.0
    %v553 = vadd.f32 %v551, 1.0
    %v554 = vrcp.pop %v552
    %v555 = vmul.f32 1.0, %v554
    %v556 = vrcp.pop %v553
    %v557 = vmul.f32 1.0, %v556
    %v558 = vtanh.pop %v530
    %v559 = vtanh.pop %v531
    %v560 = vxor.u32 %v532, 2147483648
    %v561 = vxor.u32 %v533, 2147483648
    %v562 = vmul.f32 %v560, 1.442695
    %v563 = vpow.pop %v562
    %v564 = vmul.f32 %v561, 1.442695
    %v565 = vpow.pop %v564
    %v566 = vadd.f32 %v563, 1.0
    %v567 = vadd.f32 %v565, 1.0
    %v568 = vrcp.pop %v566
    %v569 = vmul.f32 1.0, %v568
    %v570 = vrcp.pop %v567
    %v571 = vmul.f32 1.0, %v570
    %v572 = vmul.f32 %v555, 0.0
    %v573 = vmul.f32 %v557, 0.0
    %v574 = vmul.f32 %v543, %v558
    %v575 = vmul.f32 %v545, %v559
    %v576 = vadd.f32 %v572, %v574
    %v577 = vadd.f32 %v573, %v575
    %v578 = vtanh.pop %v576
    %v579 = vtanh.pop %v577
    %v580 = vmul.f32 %v569, %v578
    %v581 = vmul.f32 %v571, %v579
    %s582 = scalar_lea.vmem %s0, 64
    %v583 = vld [vmem:[%s582] sm:$0xff]
    %v584 = vld [vmem:[%s582 + $0x8] sm:$0xff]
    %v585 = vld [vmem:[%s582 + $0x10] sm:$0xff]
    %v586 = vld [vmem:[%s582 + $0x18] sm:$0xff]
    %v587 = vld [vmem:[%s582 + $0x20] sm:$0xff]
    %v588 = vld [vmem:[%s582 + $0x28] sm:$0xff]
    %v589 = vld [vmem:[%s582 + $0x30] sm:$0xff]
    %v590 = vld [vmem:[%s582 + $0x38] sm:$0xff]
    %591 = vmatprep.subr.mxu0 0.0
    %592 = vmatpush1.msra.mxu0 %v580
    %593 = vmatprep.subr.mxu0 0.0
    %594 = vmatpush1.msra.mxu0 %v581
    %595 = vmatprep.subr.mxu0 0.0
    %596 = vmatpush1.msra.mxu0 0.0
    %597 = vmatprep.subr.mxu0 0.0
    %598 = vmatpush1.msra.mxu0 0.0
    %599 = vmatprep.subr.mxu0 0.0
    %600 = vmatpush1.msra.mxu0 0.0
    %601 = vmatprep.subr.mxu0 0.0
    %602 = vmatpush1.msra.mxu0 0.0
    %603 = vmatprep.subr.mxu0 0.0
    %604 = vmatpush1.msra.mxu0 0.0
    %605 = vmatprep.subr.mxu0 0.0
    %606 = vmatpush1.msra.mxu0 0.0
    %607 = vmatprep.subr.mxu0 0.0
    %608 = vmatpush1.msra.mxu0 0.0
    %609 = vmatprep.subr.mxu0 0.0
    %610 = vmatpush1.msra.mxu0 0.0
    %611 = vmatprep.subr.mxu0 0.0
    %612 = vmatpush1.msra.mxu0 0.0
    %613 = vmatprep.subr.mxu0 0.0
    %614 = vmatpush1.msra.mxu0 0.0
    %615 = vmatprep.subr.mxu0 0.0
    %616 = vmatpush1.msra.mxu0 0.0
    %617 = vmatprep.subr.mxu0 0.0
    %618 = vmatpush1.msra.mxu0 0.0
    %619 = vmatprep.subr.mxu0 0.0
    %620 = vmatpush1.msra.mxu0 0.0
    %621 = vmatprep.subr.mxu0 0.0
    %622 = vmatpush1.msra.mxu0 0.0
    %623 = vmatprep.subr.mxu0 0.0
    %624 = vmatpush1.msra.mxu0 0.0
    %625 = vmatprep.subr.mxu0 0.0
    %626 = vmatpush1.msra.mxu0 0.0
    %627 = vmatprep.subr.mxu0 0.0
    %628 = vmatpush1.msra.mxu0 0.0
    %629 = vmatprep.subr.mxu0 0.0
    %630 = vmatpush1.msra.mxu0 0.0
    %631 = vmatprep.subr.mxu0 0.0
    %632 = vmatpush1.msra.mxu0 0.0
    %633 = vmatprep.subr.mxu0 0.0
    %634 = vmatpush1.msra.mxu0 0.0
    %635 = vmatprep.subr.mxu0 0.0
    %636 = vmatpush1.msra.mxu0 0.0
    %637 = vmatprep.subr.mxu0 0.0
    %638 = vmatpush1.msra.mxu0 0.0
    %639 = vmatprep.subr.mxu0 0.0
    %640 = vmatpush1.msra.mxu0 0.0
    %641 = vmatprep.subr.mxu0 0.0
    %642 = vmatpush1.msra.mxu0 0.0
    %643 = vmatprep.subr.mxu0 0.0
    %644 = vmatpush1.msra.mxu0 0.0
    %645 = vmatprep.subr.mxu0 0.0
    %646 = vmatpush1.msra.mxu0 0.0
    %647 = vmatprep.subr.mxu0 0.0
    %648 = vmatpush1.msra.mxu0 0.0
    %649 = vmatprep.subr.mxu0 0.0
    %650 = vmatpush1.msra.mxu0 0.0
    %651 = vmatprep.subr.mxu0 0.0
    %652 = vmatpush1.msra.mxu0 0.0
    %653 = vmatprep.subr.mxu0 0.0
    %654 = vmatpush1.msra.mxu0 0.0
    %655 = vmatprep.mubr.f32.mxu0 0.0
    %656 = vmatmul.mubr.f32.gmra.mrb[0].mxu0 %v398
    %v657 = vpop.f32.mrb[0].mxu0
    %v658 = vadd.f32 0.0, %v657
    %v659 = vpop.f32.mrb[0].mxu0
    %660 = vmatprep.mubr.f32.mxu0 0.0
    %661 = vmatmul.mubr.f32.gmra.mrb[0].mxu0 %v401
    %v662 = vpop.f32.mrb[0].mxu0
    %v663 = vadd.f32 0.0, %v662
    %v664 = vpop.f32.mrb[0].mxu0
    %665 = vmatprep.mubr.f32.mxu0 0.0
    %666 = vmatmul.mubr.f32.gmra.mrb[0].mxu0 %v404
    %v667 = vpop.f32.mrb[0].mxu0
    %v668 = vadd.f32 0.0, %v667
    %v669 = vpop.f32.mrb[0].mxu0
    %670 = vmatprep.mubr.f32.mxu0 0.0
    %671 = vmatmul.mubr.f32.gmra.mrb[0].mxu0 %v407
    %v672 = vpop.f32.mrb[0].mxu0
    %v673 = vadd.f32 0.0, %v672
    %v674 = vpop.f32.mrb[0].mxu0
    %675 = vmatprep.mubr.f32.mxu0 0.0
    %676 = vmatmul.mubr.f32.gmra.mrb[0].mxu0 %v410
    %v677 = vpop.f32.mrb[0].mxu0
    %v678 = vadd.f32 0.0, %v677
    %v679 = vpop.f32.mrb[0].mxu0
    %680 = vmatprep.mubr.f32.mxu0 0.0
    %681 = vmatmul.mubr.f32.gmra.mrb[0].mxu0 %v413
    %v682 = vpop.f32.mrb[0].mxu0
    %v683 = vadd.f32 0.0, %v682
    %v684 = vpop.f32.mrb[0].mxu0
    %685 = vmatprep.mubr.f32.mxu0 0.0
    %686 = vmatmul.mubr.f32.gmra.mrb[0].mxu0 %v416
    %v687 = vpop.f32.mrb[0].mxu0
    %v688 = vadd.f32 0.0, %v687
    %v689 = vpop.f32.mrb[0].mxu0
    %690 = vmatprep.mubr.f32.mxu0 0.0
    %691 = vmatmul.mubr.f32.gmra.mrb[0].mxu0 %v419
    %v692 = vpop.f32.mrb[0].mxu0
    %v693 = vadd.f32 0.0, %v692
    %v694 = vpop.f32.mrb[0].mxu0
    %695 = vdwg.mxu0
    %v696 = vadd.f32 %v583, %v658
    %v697 = vadd.f32 %v584, %v663
    %v698 = vadd.f32 %v585, %v668
    %v699 = vadd.f32 %v586, %v673
    %v700 = vadd.f32 %v587, %v678
    %v701 = vadd.f32 %v588, %v683
    %v702 = vadd.f32 %v589, %v688
    %v703 = vadd.f32 %v590, %v693
    %v704 = vxor.u32 %v696, 2147483648
    %v705 = vxor.u32 %v697, 2147483648
    %v706 = vmul.f32 %v704, 1.442695
    %v707 = vpow.pop %v706
    %v708 = vmul.f32 %v705, 1.442695
    %v709 = vpow.pop %v708
    %v710 = vadd.f32 %v707, 1.0
    %v711 = vadd.f32 %v709, 1.0
    %v712 = vrcp.pop %v710
    %v713 = vmul.f32 1.0, %v712
    %v714 = vrcp.pop %v711
    %v715 = vmul.f32 1.0, %v714
    %v716 = vxor.u32 %v698, 2147483648
    %v717 = vxor.u32 %v699, 2147483648
    %v718 = vmul.f32 %v716, 1.442695
    %v719 = vpow.pop %v718
    %v720 = vmul.f32 %v717, 1.442695
    %v721 = vpow.pop %v720
    %v722 = vadd.f32 %v719, 1.0
    %v723 = vadd.f32 %v721, 1.0
    %v724 = vrcp.pop %v722
    %v725 = vmul.f32 1.0, %v724
    %v726 = vrcp.pop %v723
    %v727 = vmul.f32 1.0, %v726
    %v728 = vtanh.pop %v700
    %v729 = vtanh.pop %v701
    %v730 = vxor.u32 %v702, 2147483648
    %v731 = vxor.u32 %v703, 2147483648
    %v732 = vmul.f32 %v730, 1.442695
    %v733 = vpow.pop %v732
    %v734 = vmul.f32 %v731, 1.442695
    %v735 = vpow.pop %v734
    %v736 = vadd.f32 %v733, 1.0
    %v737 = vadd.f32 %v735, 1.0
    %v738 = vrcp.pop %v736
    %v739 = vmul.f32 1.0, %v738
    %v740 = vrcp.pop %v737
    %v741 = vmul.f32 1.0, %v740
    %v742 = vmul.f32 %v725, %v576
    %v743 = vmul.f32 %v727, %v577
    %v744 = vmul.f32 %v713, %v728
    %v745 = vmul.f32 %v715, %v729
    %v746 = vadd.f32 %v742, %v744
    %v747 = vadd.f32 %v743, %v745
    %v748 = vtanh.pop %v746
    %v749 = vtanh.pop %v747
    %v750 = vmul.f32 %v739, %v748
    %v751 = vmul.f32 %v741, %v749
    %s752 = scalar_lea.vmem %s0, 128
    %v753 = vld [vmem:[%s752] sm:$0xff]
    %v754 = vld [vmem:[%s752 + $0x8] sm:$0xff]
    %v755 = vld [vmem:[%s752 + $0x10] sm:$0xff]
    %v756 = vld [vmem:[%s752 + $0x18] sm:$0xff]
    %v757 = vld [vmem:[%s752 + $0x20] sm:$0xff]
    %v758 = vld [vmem:[%s752 + $0x28] sm:$0xff]
    %v759 = vld [vmem:[%s752 + $0x30] sm:$0xff]
    %v760 = vld [vmem:[%s752 + $0x38] sm:$0xff]
    %761 = vmatprep.subr.mxu0 0.0
    %762 = vmatpush1.msra.mxu0 %v750
    %763 = vmatprep.subr.mxu0 0.0
    %764 = vmatpush1.msra.mxu0 %v751
    %765 = vmatprep.subr.mxu0 0.0
    %766 = vmatpush1.msra.mxu0 0.0
    %767 = vmatprep.subr.mxu0 0.0
    %768 = vmatpush1.msra.mxu0 0.0
    %769 = vmatprep.subr.mxu0 0.0
    %770 = vmatpush1.msra.mxu0 0.0
    %771 = vmatprep.subr.mxu0 0.0
    %772 = vmatpush1.msra.mxu0 0.0
    %773 = vmatprep.subr.mxu0 0.0
    %774 = vmatpush1.msra.mxu0 0.0
    %775 = vmatprep.subr.mxu0 0.0
    %776 = vmatpush1.msra.mxu0 0.0
    %777 = vmatprep.subr.mxu0 0.0
    %778 = vmatpush1.msra.mxu0 0.0
    %779 = vmatprep.subr.mxu0 0.0
    %780 = vmatpush1.msra.mxu0 0.0
    %781 = vmatprep.subr.mxu0 0.0
    %782 = vmatpush1.msra.mxu0 0.0
    %783 = vmatprep.subr.mxu0 0.0
    %784 = vmatpush1.msra.mxu0 0.0
    %785 = vmatprep.subr.mxu0 0.0
    %786 = vmatpush1.msra.mxu0 0.0
    %787 = vmatprep.subr.mxu0 0.0
    %788 = vmatpush1.msra.mxu0 0.0
    %789 = vmatprep.subr.mxu0 0.0
    %790 = vmatpush1.msra.mxu0 0.0
    %791 = vmatprep.subr.mxu0 0.0
    %792 = vmatpush1.msra.mxu0 0.0
    %793 = vmatprep.subr.mxu0 0.0
    %794 = vmatpush1.msra.mxu0 0.0
    %795 = vmatprep.subr.mxu0 0.0
    %796 = vmatpush1.msra.mxu0 0.0
    %797 = vmatprep.subr.mxu0 0.0
    %798 = vmatpush1.msra.mxu0 0.0
    %799 = vmatprep.subr.mxu0 0.0
    %800 = vmatpush1.msra.mxu0 0.0
    %801 = vmatprep.subr.mxu0 0.0
    %802 = vmatpush1.msra.mxu0 0.0
    %803 = vmatprep.subr.mxu0 0.0
    %804 = vmatpush1.msra.mxu0 0.0
    %805 = vmatprep.subr.mxu0 0.0
    %806 = vmatpush1.msra.mxu0 0.0
    %807 = vmatprep.subr.mxu0 0.0
    %808 = vmatpush1.msra.mxu0 0.0
    %809 = vmatprep.subr.mxu0 0.0
    %810 = vmatpush1.msra.mxu0 0.0
    %811 = vmatprep.subr.mxu0 0.0
    %812 = vmatpush1.msra.mxu0 0.0
    %813 = vmatprep.subr.mxu0 0.0
    %814 = vmatpush1.msra.mxu0 0.0
    %815 = vmatprep.subr.mxu0 0.0
    %816 = vmatpush1.msra.mxu0 0.0
    %817 = vmatprep.subr.mxu0 0.0
    %818 = vmatpush1.msra.mxu0 0.0
    %819 = vmatprep.subr.mxu0 0.0
    %820 = vmatpush1.msra.mxu0 0.0
    %821 = vmatprep.subr.mxu0 0.0
    %822 = vmatpush1.msra.mxu0 0.0
    %823 = vmatprep.subr.mxu0 0.0
    %824 = vmatpush1.msra.mxu0 0.0
    %825 = vmatprep.mubr.f32.mxu0 0.0
    %826 = vmatmul.mubr.f32.gmra.mrb[0].mxu0 %v398
    %v827 = vpop.f32.mrb[0].mxu0
    %v828 = vadd.f32 0.0, %v827
    %v829 = vpop.f32.mrb[0].mxu0
    %830 = vmatprep.mubr.f32.mxu0 0.0
    %831 = vmatmul.mubr.f32.gmra.mrb[0].mxu0 %v401
    %v832 = vpop.f32.mrb[0].mxu0
    %v833 = vadd.f32 0.0, %v832
    %v834 = vpop.f32.mrb[0].mxu0
    %835 = vmatprep.mubr.f32.mxu0 0.0
    %836 = vmatmul.mubr.f32.gmra.mrb[0].mxu0 %v404
    %v837 = vpop.f32.mrb[0].mxu0
    %v838 = vadd.f32 0.0, %v837
    %v839 = vpop.f32.mrb[0].mxu0
    %840 = vmatprep.mubr.f32.mxu0 0.0
    %841 = vmatmul.mubr.f32.gmra.mrb[0].mxu0 %v407
    %v842 = vpop.f32.mrb[0].mxu0
    %v843 = vadd.f32 0.0, %v842
    %v844 = vpop.f32.mrb[0].mxu0
    %845 = vmatprep.mubr.f32.mxu0 0.0
    %846 = vmatmul.mubr.f32.gmra.mrb[0].mxu0 %v410
    %v847 = vpop.f32.mrb[0].mxu0
    %v848 = vadd.f32 0.0, %v847
    %v849 = vpop.f32.mrb[0].mxu0
    %850 = vmatprep.mubr.f32.mxu0 0.0
    %851 = vmatmul.mubr.f32.gmra.mrb[0].mxu0 %v413
    %v852 = vpop.f32.mrb[0].mxu0
    %v853 = vadd.f32 0.0, %v852
    %v854 = vpop.f32.mrb[0].mxu0
    %855 = vmatprep.mubr.f32.mxu0 0.0
    %856 = vmatmul.mubr.f32.gmra.mrb[0].mxu0 %v416
    %v857 = vpop.f32.mrb[0].mxu0
    %v858 = vadd.f32 0.0, %v857
    %v859 = vpop.f32.mrb[0].mxu0
    %860 = vmatprep.mubr.f32.mxu0 0.0
    %861 = vmatmul.mubr.f32.gmra.mrb[0].mxu0 %v419
    %v862 = vpop.f32.mrb[0].mxu0
    %v863 = vadd.f32 0.0, %v862
    %v864 = vpop.f32.mrb[0].mxu0
    %865 = vdwg.mxu0
    %v866 = vadd.f32 %v753, %v828
    %v867 = vadd.f32 %v754, %v833
    %v868 = vadd.f32 %v755, %v838
    %v869 = vadd.f32 %v756, %v843
    %v870 = vadd.f32 %v757, %v848
    %v871 = vadd.f32 %v758, %v853
    %v872 = vadd.f32 %v759, %v858
    %v873 = vadd.f32 %v760, %v863
    %v874 = vxor.u32 %v866, 2147483648
    %v875 = vxor.u32 %v867, 2147483648
    %v876 = vmul.f32 %v874, 1.442695
    %v877 = vpow.pop %v876
    %v878 = vmul.f32 %v875, 1.442695
    %v879 = vpow.pop %v878
    %v880 = vadd.f32 %v877, 1.0
    %v881 = vadd.f32 %v879, 1.0
    %v882 = vrcp.pop %v880
    %v883 = vmul.f32 1.0, %v882
    %v884 = vrcp.pop %v881
    %v885 = vmul.f32 1.0, %v884
    %v886 = vxor.u32 %v868, 2147483648
    %v887 = vxor.u32 %v869, 2147483648
    %v888 = vmul.f32 %v886, 1.442695
    %v889 = vpow.pop %v888
    %v890 = vmul.f32 %v887, 1.442695
    %v891 = vpow.pop %v890
    %v892 = vadd.f32 %v889, 1.0
    %v893 = vadd.f32 %v891, 1.0
    %v894 = vrcp.pop %v892
    %v895 = vmul.f32 1.0, %v894
    %v896 = vrcp.pop %v893
    %v897 = vmul.f32 1.0, %v896
    %v898 = vtanh.pop %v870
    %v899 = vtanh.pop %v871
    %v900 = vxor.u32 %v872, 2147483648
    %v901 = vxor.u32 %v873, 2147483648
    %v902 = vmul.f32 %v900, 1.442695
    %v903 = vpow.pop %v902
    %v904 = vmul.f32 %v901, 1.442695
    %v905 = vpow.pop %v904
    %v906 = vadd.f32 %v903, 1.0
    %v907 = vadd.f32 %v905, 1.0
    %v908 = vrcp.pop %v906
    %v909 = vmul.f32 1.0, %v908
    %v910 = vrcp.pop %v907
    %v911 = vmul.f32 1.0, %v910
    %v912 = vmul.f32 %v895, %v746
    %v913 = vmul.f32 %v897, %v747
    %v914 = vmul.f32 %v883, %v898
    %v915 = vmul.f32 %v885, %v899
    %v916 = vadd.f32 %v912, %v914
    %v917 = vadd.f32 %v913, %v915
    %v918 = vtanh.pop %v916
    %v919 = vtanh.pop %v917
    %v920 = vmul.f32 %v909, %v918
    %v921 = vmul.f32 %v911, %v919
    %s922 = scalar_lea.vmem %s0, 192
    %v923 = vld [vmem:[%s922] sm:$0xff]
    %v924 = vld [vmem:[%s922 + $0x8] sm:$0xff]
    %v925 = vld [vmem:[%s922 + $0x10] sm:$0xff]
    %v926 = vld [vmem:[%s922 + $0x18] sm:$0xff]
    %v927 = vld [vmem:[%s922 + $0x20] sm:$0xff]
    %v928 = vld [vmem:[%s922 + $0x28] sm:$0xff]
    %v929 = vld [vmem:[%s922 + $0x30] sm:$0xff]
    %v930 = vld [vmem:[%s922 + $0x38] sm:$0xff]
    %931 = vmatprep.subr.mxu0 0.0
    %932 = vmatpush1.msra.mxu0 %v920
    %933 = vmatprep.subr.mxu0 0.0
    %934 = vmatpush1.msra.mxu0 %v921
    %935 = vmatprep.subr.mxu0 0.0
    %936 = vmatpush1.msra.mxu0 0.0
    %937 = vmatprep.subr.mxu0 0.0
    %938 = vmatpush1.msra.mxu0 0.0
    %939 = vmatprep.subr.mxu0 0.0
    %940 = vmatpush1.msra.mxu0 0.0
    %941 = vmatprep.subr.mxu0 0.0
    %942 = vmatpush1.msra.mxu0 0.0
    %943 = vmatprep.subr.mxu0 0.0
    %944 = vmatpush1.msra.mxu0 0.0
    %945 = vmatprep.subr.mxu0 0.0
    %946 = vmatpush1.msra.mxu0 0.0
    %947 = vmatprep.subr.mxu0 0.0
    %948 = vmatpush1.msra.mxu0 0.0
    %949 = vmatprep.subr.mxu0 0.0
    %950 = vmatpush1.msra.mxu0 0.0
    %951 = vmatprep.subr.mxu0 0.0
    %952 = vmatpush1.msra.mxu0 0.0
    %953 = vmatprep.subr.mxu0 0.0
    %954 = vmatpush1.msra.mxu0 0.0
    %955 = vmatprep.subr.mxu0 0.0
    %956 = vmatpush1.msra.mxu0 0.0
    %957 = vmatprep.subr.mxu0 0.0
    %958 = vmatpush1.msra.mxu0 0.0
    %959 = vmatprep.subr.mxu0 0.0
    %960 = vmatpush1.msra.mxu0 0.0
    %961 = vmatprep.subr.mxu0 0.0
    %962 = vmatpush1.msra.mxu0 0.0
    %963 = vmatprep.subr.mxu0 0.0
    %964 = vmatpush1.msra.mxu0 0.0
    %965 = vmatprep.subr.mxu0 0.0
    %966 = vmatpush1.msra.mxu0 0.0
    %967 = vmatprep.subr.mxu0 0.0
    %968 = vmatpush1.msra.mxu0 0.0
    %969 = vmatprep.subr.mxu0 0.0
    %970 = vmatpush1.msra.mxu0 0.0
    %971 = vmatprep.subr.mxu0 0.0
    %972 = vmatpush1.msra.mxu0 0.0
    %973 = vmatprep.subr.mxu0 0.0
    %974 = vmatpush1.msra.mxu0 0.0
    %975 = vmatprep.subr.mxu0 0.0
    %976 = vmatpush1.msra.mxu0 0.0
    %977 = vmatprep.subr.mxu0 0.0
    %978 = vmatpush1.msra.mxu0 0.0
    %979 = vmatprep.subr.mxu0 0.0
    %980 = vmatpush1.msra.mxu0 0.0
    %981 = vmatprep.subr.mxu0 0.0
    %982 = vmatpush1.msra.mxu0 0.0
    %983 = vmatprep.subr.mxu0 0.0
    %984 = vmatpush1.msra.mxu0 0.0
    %985 = vmatprep.subr.mxu0 0.0
    %986 = vmatpush1.msra.mxu0 0.0
    %987 = vmatprep.subr.mxu0 0.0
    %988 = vmatpush1.msra.mxu0 0.0
    %989 = vmatprep.subr.mxu0 0.0
    %990 = vmatpush1.msra.mxu0 0.0
    %991 = vmatprep.subr.mxu0 0.0
    %992 = vmatpush1.msra.mxu0 0.0
    %993 = vmatprep.subr.mxu0 0.0
    %994 = vmatpush1.msra.mxu0 0.0
    %995 = vmatprep.mubr.f32.mxu0 0.0
    %996 = vmatmul.mubr.f32.gmra.mrb[0].mxu0 %v398
    %v997 = vpop.f32.mrb[0].mxu0
    %v998 = vadd.f32 0.0, %v997
    %v999 = vpop.f32.mrb[0].mxu0
    %1000 = vmatprep.mubr.f32.mxu0 0.0
    %1001 = vmatmul.mubr.f32.gmra.mrb[0].mxu0 %v401
    %v1002 = vpop.f32.mrb[0].mxu0
    %v1003 = vadd.f32 0.0, %v1002
    %v1004 = vpop.f32.mrb[0].mxu0
    %1005 = vmatprep.mubr.f32.mxu0 0.0
    %1006 = vmatmul.mubr.f32.gmra.mrb[0].mxu0 %v404
    %v1007 = vpop.f32.mrb[0].mxu0
    %v1008 = vadd.f32 0.0, %v1007
    %v1009 = vpop.f32.mrb[0].mxu0
    %1010 = vmatprep.mubr.f32.mxu0 0.0
    %1011 = vmatmul.mubr.f32.gmra.mrb[0].mxu0 %v407
    %v1012 = vpop.f32.mrb[0].mxu0
    %v1013 = vadd.f32 0.0, %v1012
    %v1014 = vpop.f32.mrb[0].mxu0
    %1015 = vmatprep.mubr.f32.mxu0 0.0
    %1016 = vmatmul.mubr.f32.gmra.mrb[0].mxu0 %v410
    %v1017 = vpop.f32.mrb[0].mxu0
    %v1018 = vadd.f32 0.0, %v1017
    %v1019 = vpop.f32.mrb[0].mxu0
    %1020 = vmatprep.mubr.f32.mxu0 0.0
    %1021 = vmatmul.mubr.f32.gmra.mrb[0].mxu0 %v413
    %v1022 = vpop.f32.mrb[0].mxu0
    %v1023 = vadd.f32 0.0, %v1022
    %v1024 = vpop.f32.mrb[0].mxu0
    %1025 = vmatprep.mubr.f32.mxu0 0.0
    %1026 = vmatmul.mubr.f32.gmra.mrb[0].mxu0 %v416
    %v1027 = vpop.f32.mrb[0].mxu0
    %v1028 = vadd.f32 0.0, %v1027
    %v1029 = vpop.f32.mrb[0].mxu0
    %1030 = vmatprep.mubr.f32.mxu0 0.0
    %1031 = vmatmul.mubr.f32.gmra.mrb[0].mxu0 %v419
    %v1032 = vpop.f32.mrb[0].mxu0
    %v1033 = vadd.f32 0.0, %v1032
    %v1034 = vpop.f32.mrb[0].mxu0
    %1035 = vdwg.mxu0
    %v1036 = vadd.f32 %v923, %v998
    %v1037 = vadd.f32 %v924, %v1003
    %v1038 = vadd.f32 %v925, %v1008
    %v1039 = vadd.f32 %v926, %v1013
    %v1040 = vadd.f32 %v927, %v1018
    %v1041 = vadd.f32 %v928, %v1023
    %v1042 = vadd.f32 %v929, %v1028
    %v1043 = vadd.f32 %v930, %v1033
    %v1044 = vxor.u32 %v1036, 2147483648
    %v1045 = vxor.u32 %v1037, 2147483648
    %v1046 = vmul.f32 %v1044, 1.442695
    %v1047 = vpow.pop %v1046
    %v1048 = vmul.f32 %v1045, 1.442695
    %v1049 = vpow.pop %v1048
    %v1050 = vadd.f32 %v1047, 1.0
    %v1051 = vadd.f32 %v1049, 1.0
    %v1052 = vrcp.pop %v1050
    %v1053 = vmul.f32 1.0, %v1052
    %v1054 = vrcp.pop %v1051
    %v1055 = vmul.f32 1.0, %v1054
    %v1056 = vxor.u32 %v1038, 2147483648
    %v1057 = vxor.u32 %v1039, 2147483648
    %v1058 = vmul.f32 %v1056, 1.442695
    %v1059 = vpow.pop %v1058
    %v1060 = vmul.f32 %v1057, 1.442695
    %v1061 = vpow.pop %v1060
    %v1062 = vadd.f32 %v1059, 1.0
    %v1063 = vadd.f32 %v1061, 1.0
    %v1064 = vrcp.pop %v1062
    %v1065 = vmul.f32 1.0, %v1064
    %v1066 = vrcp.pop %v1063
    %v1067 = vmul.f32 1.0, %v1066
    %v1068 = vtanh.pop %v1040
    %v1069 = vtanh.pop %v1041
    %v1070 = vxor.u32 %v1042, 2147483648
    %v1071 = vxor.u32 %v1043, 2147483648
    %v1072 = vmul.f32 %v1070, 1.442695
    %v1073 = vpow.pop %v1072
    %v1074 = vmul.f32 %v1071, 1.442695
    %v1075 = vpow.pop %v1074
    %v1076 = vadd.f32 %v1073, 1.0
    %v1077 = vadd.f32 %v1075, 1.0
    %v1078 = vrcp.pop %v1076
    %v1079 = vmul.f32 1.0, %v1078
    %v1080 = vrcp.pop %v1077
    %v1081 = vmul.f32 1.0, %v1080
    %v1082 = vmul.f32 %v1065, %v916
    %v1083 = vmul.f32 %v1067, %v917
    %v1084 = vmul.f32 %v1053, %v1068
    %v1085 = vmul.f32 %v1055, %v1069
    %v1086 = vadd.f32 %v1082, %v1084
    %v1087 = vadd.f32 %v1083, %v1085
    %v1088 = vtanh.pop %v1086
    %v1089 = vtanh.pop %v1087
    %v1090 = vmul.f32 %v1079, %v1088
    %v1091 = vmul.f32 %v1081, %v1089
    %s1092 = scalar_lea.vmem %s0, 256
    %v1093 = vld [vmem:[%s1092] sm:$0xff]
    %v1094 = vld [vmem:[%s1092 + $0x8] sm:$0xff]
    %v1095 = vld [vmem:[%s1092 + $0x10] sm:$0xff]
    %v1096 = vld [vmem:[%s1092 + $0x18] sm:$0xff]
    %v1097 = vld [vmem:[%s1092 + $0x20] sm:$0xff]
    %v1098 = vld [vmem:[%s1092 + $0x28] sm:$0xff]
    %v1099 = vld [vmem:[%s1092 + $0x30] sm:$0xff]
    %v1100 = vld [vmem:[%s1092 + $0x38] sm:$0xff]
    %1101 = vmatprep.subr.mxu0 0.0
    %1102 = vmatpush1.msra.mxu0 %v1090
    %1103 = vmatprep.subr.mxu0 0.0
    %1104 = vmatpush1.msra.mxu0 %v1091
    %1105 = vmatprep.subr.mxu0 0.0
    %1106 = vmatpush1.msra.mxu0 0.0
    %1107 = vmatprep.subr.mxu0 0.0
    %1108 = vmatpush1.msra.mxu0 0.0
    %1109 = vmatprep.subr.mxu0 0.0
    %1110 = vmatpush1.msra.mxu0 0.0
    %1111 = vmatprep.subr.mxu0 0.0
    %1112 = vmatpush1.msra.mxu0 0.0
    %1113 = vmatprep.subr.mxu0 0.0
    %1114 = vmatpush1.msra.mxu0 0.0
    %1115 = vmatprep.subr.mxu0 0.0
    %1116 = vmatpush1.msra.mxu0 0.0
    %1117 = vmatprep.subr.mxu0 0.0
    %1118 = vmatpush1.msra.mxu0 0.0
    %1119 = vmatprep.subr.mxu0 0.0
    %1120 = vmatpush1.msra.mxu0 0.0
    %1121 = vmatprep.subr.mxu0 0.0
    %1122 = vmatpush1.msra.mxu0 0.0
    %1123 = vmatprep.subr.mxu0 0.0
    %1124 = vmatpush1.msra.mxu0 0.0
    %1125 = vmatprep.subr.mxu0 0.0
    %1126 = vmatpush1.msra.mxu0 0.0
    %1127 = vmatprep.subr.mxu0 0.0
    %1128 = vmatpush1.msra.mxu0 0.0
    %1129 = vmatprep.subr.mxu0 0.0
    %1130 = vmatpush1.msra.mxu0 0.0
    %1131 = vmatprep.subr.mxu0 0.0
    %1132 = vmatpush1.msra.mxu0 0.0
    %1133 = vmatprep.subr.mxu0 0.0
    %1134 = vmatpush1.msra.mxu0 0.0
    %1135 = vmatprep.subr.mxu0 0.0
    %1136 = vmatpush1.msra.mxu0 0.0
    %1137 = vmatprep.subr.mxu0 0.0
    %1138 = vmatpush1.msra.mxu0 0.0
    %1139 = vmatprep.subr.mxu0 0.0
    %1140 = vmatpush1.msra.mxu0 0.0
    %1141 = vmatprep.subr.mxu0 0.0
    %1142 = vmatpush1.msra.mxu0 0.0
    %1143 = vmatprep.subr.mxu0 0.0
    %1144 = vmatpush1.msra.mxu0 0.0
    %1145 = vmatprep.subr.mxu0 0.0
    %1146 = vmatpush1.msra.mxu0 0.0
    %1147 = vmatprep.subr.mxu0 0.0
    %1148 = vmatpush1.msra.mxu0 0.0
    %1149 = vmatprep.subr.mxu0 0.0
    %1150 = vmatpush1.msra.mxu0 0.0
    %1151 = vmatprep.subr.mxu0 0.0
    %1152 = vmatpush1.msra.mxu0 0.0
    %1153 = vmatprep.subr.mxu0 0.0
    %1154 = vmatpush1.msra.mxu0 0.0
    %1155 = vmatprep.subr.mxu0 0.0
    %1156 = vmatpush1.msra.mxu0 0.0
    %1157 = vmatprep.subr.mxu0 0.0
    %1158 = vmatpush1.msra.mxu0 0.0
    %1159 = vmatprep.subr.mxu0 0.0
    %1160 = vmatpush1.msra.mxu0 0.0
    %1161 = vmatprep.subr.mxu0 0.0
    %1162 = vmatpush1.msra.mxu0 0.0
    %1163 = vmatprep.subr.mxu0 0.0
    %1164 = vmatpush1.msra.mxu0 0.0
    %1165 = vmatprep.mubr.f32.mxu0 0.0
    %1166 = vmatmul.mubr.f32.gmra.mrb[0].mxu0 %v398
    %v1167 = vpop.f32.mrb[0].mxu0
    %v1168 = vadd.f32 0.0, %v1167
    %v1169 = vpop.f32.mrb[0].mxu0
    %1170 = vmatprep.mubr.f32.mxu0 0.0
    %1171 = vmatmul.mubr.f32.gmra.mrb[0].mxu0 %v401
    %v1172 = vpop.f32.mrb[0].mxu0
    %v1173 = vadd.f32 0.0, %v1172
    %v1174 = vpop.f32.mrb[0].mxu0
    %1175 = vmatprep.mubr.f32.mxu0 0.0
    %1176 = vmatmul.mubr.f32.gmra.mrb[0].mxu0 %v404
    %v1177 = vpop.f32.mrb[0].mxu0
    %v1178 = vadd.f32 0.0, %v1177
    %v1179 = vpop.f32.mrb[0].mxu0
    %1180 = vmatprep.mubr.f32.mxu0 0.0
    %1181 = vmatmul.mubr.f32.gmra.mrb[0].mxu0 %v407
    %v1182 = vpop.f32.mrb[0].mxu0
    %v1183 = vadd.f32 0.0, %v1182
    %v1184 = vpop.f32.mrb[0].mxu0
    %1185 = vmatprep.mubr.f32.mxu0 0.0
    %1186 = vmatmul.mubr.f32.gmra.mrb[0].mxu0 %v410
    %v1187 = vpop.f32.mrb[0].mxu0
    %v1188 = vadd.f32 0.0, %v1187
    %v1189 = vpop.f32.mrb[0].mxu0
    %1190 = vmatprep.mubr.f32.mxu0 0.0
    %1191 = vmatmul.mubr.f32.gmra.mrb[0].mxu0 %v413
    %v1192 = vpop.f32.mrb[0].mxu0
    %v1193 = vadd.f32 0.0, %v1192
    %v1194 = vpop.f32.mrb[0].mxu0
    %1195 = vmatprep.mubr.f32.mxu0 0.0
    %1196 = vmatmul.mubr.f32.gmra.mrb[0].mxu0 %v416
    %v1197 = vpop.f32.mrb[0].mxu0
    %v1198 = vadd.f32 0.0, %v1197
    %v1199 = vpop.f32.mrb[0].mxu0
    %1200 = vmatprep.mubr.f32.mxu0 0.0
    %1201 = vmatmul.mubr.f32.gmra.mrb[0].mxu0 %v419
    %v1202 = vpop.f32.mrb[0].mxu0
    %v1203 = vadd.f32 0.0, %v1202
    %v1204 = vpop.f32.mrb[0].mxu0
    %1205 = vdwg.mxu0
    %v1206 = vadd.f32 %v1093, %v1168
    %v1207 = vadd.f32 %v1094, %v1173
    %v1208 = vadd.f32 %v1095, %v1178
    %v1209 = vadd.f32 %v1096, %v1183
    %v1210 = vadd.f32 %v1097, %v1188
    %v1211 = vadd.f32 %v1098, %v1193
    %v1212 = vadd.f32 %v1099, %v1198
    %v1213 = vadd.f32 %v1100, %v1203
    %v1214 = vxor.u32 %v1206, 2147483648
    %v1215 = vxor.u32 %v1207, 2147483648
    %v1216 = vmul.f32 %v1214, 1.442695
    %v1217 = vpow.pop %v1216
    %v1218 = vmul.f32 %v1215, 1.442695
    %v1219 = vpow.pop %v1218
    %v1220 = vadd.f32 %v1217, 1.0
    %v1221 = vadd.f32 %v1219, 1.0
    %v1222 = vrcp.pop %v1220
    %v1223 = vmul.f32 1.0, %v1222
    %v1224 = vrcp.pop %v1221
    %v1225 = vmul.f32 1.0, %v1224
    %v1226 = vxor.u32 %v1208, 2147483648
    %v1227 = vxor.u32 %v1209, 2147483648
    %v1228 = vmul.f32 %v1226, 1.442695
    %v1229 = vpow.pop %v1228
    %v1230 = vmul.f32 %v1227, 1.442695
    %v1231 = vpow.pop %v1230
    %v1232 = vadd.f32 %v1229, 1.0
    %v1233 = vadd.f32 %v1231, 1.0
    %v1234 = vrcp.pop %v1232
    %v1235 = vmul.f32 1.0, %v1234
    %v1236 = vrcp.pop %v1233
    %v1237 = vmul.f32 1.0, %v1236
    %v1238 = vtanh.pop %v1210
    %v1239 = vtanh.pop %v1211
    %v1240 = vxor.u32 %v1212, 2147483648
    %v1241 = vxor.u32 %v1213, 2147483648
    %v1242 = vmul.f32 %v1240, 1.442695
    %v1243 = vpow.pop %v1242
    %v1244 = vmul.f32 %v1241, 1.442695
    %v1245 = vpow.pop %v1244
    %v1246 = vadd.f32 %v1243, 1.0
    %v1247 = vadd.f32 %v1245, 1.0
    %v1248 = vrcp.pop %v1246
    %v1249 = vmul.f32 1.0, %v1248
    %v1250 = vrcp.pop %v1247
    %v1251 = vmul.f32 1.0, %v1250
    %v1252 = vmul.f32 %v1235, %v1086
    %v1253 = vmul.f32 %v1237, %v1087
    %v1254 = vmul.f32 %v1223, %v1238
    %v1255 = vmul.f32 %v1225, %v1239
    %v1256 = vadd.f32 %v1252, %v1254
    %v1257 = vadd.f32 %v1253, %v1255
    %v1258 = vtanh.pop %v1256
    %v1259 = vtanh.pop %v1257
    %v1260 = vmul.f32 %v1249, %v1258
    %v1261 = vmul.f32 %v1251, %v1259
    %s1262 = scalar_lea.vmem %s0, 320
    %v1263 = vld [vmem:[%s1262] sm:$0xff]
    %v1264 = vld [vmem:[%s1262 + $0x8] sm:$0xff]
    %v1265 = vld [vmem:[%s1262 + $0x10] sm:$0xff]
    %v1266 = vld [vmem:[%s1262 + $0x18] sm:$0xff]
    %v1267 = vld [vmem:[%s1262 + $0x20] sm:$0xff]
    %v1268 = vld [vmem:[%s1262 + $0x28] sm:$0xff]
    %v1269 = vld [vmem:[%s1262 + $0x30] sm:$0xff]
    %v1270 = vld [vmem:[%s1262 + $0x38] sm:$0xff]
    %1271 = vmatprep.subr.mxu0 0.0
    %1272 = vmatpush1.msra.mxu0 %v1260
    %1273 = vmatprep.subr.mxu0 0.0
    %1274 = vmatpush1.msra.mxu0 %v1261
    %1275 = vmatprep.subr.mxu0 0.0
    %1276 = vmatpush1.msra.mxu0 0.0
    %1277 = vmatprep.subr.mxu0 0.0
    %1278 = vmatpush1.msra.mxu0 0.0
    %1279 = vmatprep.subr.mxu0 0.0
    %1280 = vmatpush1.msra.mxu0 0.0
    %1281 = vmatprep.subr.mxu0 0.0
    %1282 = vmatpush1.msra.mxu0 0.0
    %1283 = vmatprep.subr.mxu0 0.0
    %1284 = vmatpush1.msra.mxu0 0.0
    %1285 = vmatprep.subr.mxu0 0.0
    %1286 = vmatpush1.msra.mxu0 0.0
    %1287 = vmatprep.subr.mxu0 0.0
    %1288 = vmatpush1.msra.mxu0 0.0
    %1289 = vmatprep.subr.mxu0 0.0
    %1290 = vmatpush1.msra.mxu0 0.0
    %1291 = vmatprep.subr.mxu0 0.0
    %1292 = vmatpush1.msra.mxu0 0.0
    %1293 = vmatprep.subr.mxu0 0.0
    %1294 = vmatpush1.msra.mxu0 0.0
    %1295 = vmatprep.subr.mxu0 0.0
    %1296 = vmatpush1.msra.mxu0 0.0
    %1297 = vmatprep.subr.mxu0 0.0
    %1298 = vmatpush1.msra.mxu0 0.0
    %1299 = vmatprep.subr.mxu0 0.0
    %1300 = vmatpush1.msra.mxu0 0.0
    %1301 = vmatprep.subr.mxu0 0.0
    %1302 = vmatpush1.msra.mxu0 0.0
    %1303 = vmatprep.subr.mxu0 0.0
    %1304 = vmatpush1.msra.mxu0 0.0
    %1305 = vmatprep.subr.mxu0 0.0
    %1306 = vmatpush1.msra.mxu0 0.0
    %1307 = vmatprep.subr.mxu0 0.0
    %1308 = vmatpush1.msra.mxu0 0.0
    %1309 = vmatprep.subr.mxu0 0.0
    %1310 = vmatpush1.msra.mxu0 0.0
    %1311 = vmatprep.subr.mxu0 0.0
    %1312 = vmatpush1.msra.mxu0 0.0
    %1313 = vmatprep.subr.mxu0 0.0
    %1314 = vmatpush1.msra.mxu0 0.0
    %1315 = vmatprep.subr.mxu0 0.0
    %1316 = vmatpush1.msra.mxu0 0.0
    %1317 = vmatprep.subr.mxu0 0.0
    %1318 = vmatpush1.msra.mxu0 0.0
    %1319 = vmatprep.subr.mxu0 0.0
    %1320 = vmatpush1.msra.mxu0 0.0
    %1321 = vmatprep.subr.mxu0 0.0
    %1322 = vmatpush1.msra.mxu0 0.0
    %1323 = vmatprep.subr.mxu0 0.0
    %1324 = vmatpush1.msra.mxu0 0.0
    %1325 = vmatprep.subr.mxu0 0.0
    %1326 = vmatpush1.msra.mxu0 0.0
    %1327 = vmatprep.subr.mxu0 0.0
    %1328 = vmatpush1.msra.mxu0 0.0
    %1329 = vmatprep.subr.mxu0 0.0
    %1330 = vmatpush1.msra.mxu0 0.0
    %1331 = vmatprep.subr.mxu0 0.0
    %1332 = vmatpush1.msra.mxu0 0.0
    %1333 = vmatprep.subr.mxu0 0.0
    %1334 = vmatpush1.msra.mxu0 0.0
    %1335 = vmatprep.mubr.f32.mxu0 0.0
    %1336 = vmatmul.mubr.f32.gmra.mrb[0].mxu0 %v398
    %v1337 = vpop.f32.mrb[0].mxu0
    %v1338 = vadd.f32 0.0, %v1337
    %v1339 = vpop.f32.mrb[0].mxu0
    %1340 = vmatprep.mubr.f32.mxu0 0.0
    %1341 = vmatmul.mubr.f32.gmra.mrb[0].mxu0 %v401
    %v1342 = vpop.f32.mrb[0].mxu0
    %v1343 = vadd.f32 0.0, %v1342
    %v1344 = vpop.f32.mrb[0].mxu0
    %1345 = vmatprep.mubr.f32.mxu0 0.0
    %1346 = vmatmul.mubr.f32.gmra.mrb[0].mxu0 %v404
    %v1347 = vpop.f32.mrb[0].mxu0
    %v1348 = vadd.f32 0.0, %v1347
    %v1349 = vpop.f32.mrb[0].mxu0
    %1350 = vmatprep.mubr.f32.mxu0 0.0
    %1351 = vmatmul.mubr.f32.gmra.mrb[0].mxu0 %v407
    %v1352 = vpop.f32.mrb[0].mxu0
    %v1353 = vadd.f32 0.0, %v1352
    %v1354 = vpop.f32.mrb[0].mxu0
    %1355 = vmatprep.mubr.f32.mxu0 0.0
    %1356 = vmatmul.mubr.f32.gmra.mrb[0].mxu0 %v410
    %v1357 = vpop.f32.mrb[0].mxu0
    %v1358 = vadd.f32 0.0, %v1357
    %v1359 = vpop.f32.mrb[0].mxu0
    %1360 = vmatprep.mubr.f32.mxu0 0.0
    %1361 = vmatmul.mubr.f32.gmra.mrb[0].mxu0 %v413
    %v1362 = vpop.f32.mrb[0].mxu0
    %v1363 = vadd.f32 0.0, %v1362
    %v1364 = vpop.f32.mrb[0].mxu0
    %1365 = vmatprep.mubr.f32.mxu0 0.0
    %1366 = vmatmul.mubr.f32.gmra.mrb[0].mxu0 %v416
    %v1367 = vpop.f32.mrb[0].mxu0
    %v1368 = vadd.f32 0.0, %v1367
    %v1369 = vpop.f32.mrb[0].mxu0
    %1370 = vmatprep.mubr.f32.mxu0 0.0
    %1371 = vmatmul.mubr.f32.gmra.mrb[0].mxu0 %v419
    %v1372 = vpop.f32.mrb[0].mxu0
    %v1373 = vadd.f32 0.0, %v1372
    %v1374 = vpop.f32.mrb[0].mxu0
    %1375 = vdwg.mxu0
    %v1376 = vadd.f32 %v1263, %v1338
    %v1377 = vadd.f32 %v1264, %v1343
    %v1378 = vadd.f32 %v1265, %v1348
    %v1379 = vadd.f32 %v1266, %v1353
    %v1380 = vadd.f32 %v1267, %v1358
    %v1381 = vadd.f32 %v1268, %v1363
    %v1382 = vadd.f32 %v1269, %v1368
    %v1383 = vadd.f32 %v1270, %v1373
    %v1384 = vxor.u32 %v1376, 2147483648
    %v1385 = vxor.u32 %v1377, 2147483648
    %v1386 = vmul.f32 %v1384, 1.442695
    %v1387 = vpow.pop %v1386
    %v1388 = vmul.f32 %v1385, 1.442695
    %v1389 = vpow.pop %v1388
    %v1390 = vadd.f32 %v1387, 1.0
    %v1391 = vadd.f32 %v1389, 1.0
    %v1392 = vrcp.pop %v1390
    %v1393 = vmul.f32 1.0, %v1392
    %v1394 = vrcp.pop %v1391
    %v1395 = vmul.f32 1.0, %v1394
    %v1396 = vxor.u32 %v1378, 2147483648
    %v1397 = vxor.u32 %v1379, 2147483648
    %v1398 = vmul.f32 %v1396, 1.442695
    %v1399 = vpow.pop %v1398
    %v1400 = vmul.f32 %v1397, 1.442695
    %v1401 = vpow.pop %v1400
    %v1402 = vadd.f32 %v1399, 1.0
    %v1403 = vadd.f32 %v1401, 1.0
    %v1404 = vrcp.pop %v1402
    %v1405 = vmul.f32 1.0, %v1404
    %v1406 = vrcp.pop %v1403
    %v1407 = vmul.f32 1.0, %v1406
    %v1408 = vtanh.pop %v1380
    %v1409 = vtanh.pop %v1381
    %v1410 = vxor.u32 %v1382, 2147483648
    %v1411 = vxor.u32 %v1383, 2147483648
    %v1412 = vmul.f32 %v1410, 1.442695
    %v1413 = vpow.pop %v1412
    %v1414 = vmul.f32 %v1411, 1.442695
    %v1415 = vpow.pop %v1414
    %v1416 = vadd.f32 %v1413, 1.0
    %v1417 = vadd.f32 %v1415, 1.0
    %v1418 = vrcp.pop %v1416
    %v1419 = vmul.f32 1.0, %v1418
    %v1420 = vrcp.pop %v1417
    %v1421 = vmul.f32 1.0, %v1420
    %v1422 = vmul.f32 %v1405, %v1256
    %v1423 = vmul.f32 %v1407, %v1257
    %v1424 = vmul.f32 %v1393, %v1408
    %v1425 = vmul.f32 %v1395, %v1409
    %v1426 = vadd.f32 %v1422, %v1424
    %v1427 = vadd.f32 %v1423, %v1425
    %v1428 = vtanh.pop %v1426
    %v1429 = vtanh.pop %v1427
    %v1430 = vmul.f32 %v1419, %v1428
    %v1431 = vmul.f32 %v1421, %v1429
    %s1432 = scalar_lea.vmem %s0, 384
    %v1433 = vld [vmem:[%s1432] sm:$0xff]
    %v1434 = vld [vmem:[%s1432 + $0x8] sm:$0xff]
    %v1435 = vld [vmem:[%s1432 + $0x10] sm:$0xff]
    %v1436 = vld [vmem:[%s1432 + $0x18] sm:$0xff]
    %v1437 = vld [vmem:[%s1432 + $0x20] sm:$0xff]
    %v1438 = vld [vmem:[%s1432 + $0x28] sm:$0xff]
    %v1439 = vld [vmem:[%s1432 + $0x30] sm:$0xff]
    %v1440 = vld [vmem:[%s1432 + $0x38] sm:$0xff]
    %1441 = vmatprep.subr.mxu0 0.0
    %1442 = vmatpush1.msra.mxu0 %v1430
    %1443 = vmatprep.subr.mxu0 0.0
    %1444 = vmatpush1.msra.mxu0 %v1431
    %1445 = vmatprep.subr.mxu0 0.0
    %1446 = vmatpush1.msra.mxu0 0.0
    %1447 = vmatprep.subr.mxu0 0.0
    %1448 = vmatpush1.msra.mxu0 0.0
    %1449 = vmatprep.subr.mxu0 0.0
    %1450 = vmatpush1.msra.mxu0 0.0
    %1451 = vmatprep.subr.mxu0 0.0
    %1452 = vmatpush1.msra.mxu0 0.0
    %1453 = vmatprep.subr.mxu0 0.0
    %1454 = vmatpush1.msra.mxu0 0.0
    %1455 = vmatprep.subr.mxu0 0.0
    %1456 = vmatpush1.msra.mxu0 0.0
    %1457 = vmatprep.subr.mxu0 0.0
    %1458 = vmatpush1.msra.mxu0 0.0
    %1459 = vmatprep.subr.mxu0 0.0
    %1460 = vmatpush1.msra.mxu0 0.0
    %1461 = vmatprep.subr.mxu0 0.0
    %1462 = vmatpush1.msra.mxu0 0.0
    %1463 = vmatprep.subr.mxu0 0.0
    %1464 = vmatpush1.msra.mxu0 0.0
    %1465 = vmatprep.subr.mxu0 0.0
    %1466 = vmatpush1.msra.mxu0 0.0
    %1467 = vmatprep.subr.mxu0 0.0
    %1468 = vmatpush1.msra.mxu0 0.0
    %1469 = vmatprep.subr.mxu0 0.0
    %1470 = vmatpush1.msra.mxu0 0.0
    %1471 = vmatprep.subr.mxu0 0.0
    %1472 = vmatpush1.msra.mxu0 0.0
    %1473 = vmatprep.subr.mxu0 0.0
    %1474 = vmatpush1.msra.mxu0 0.0
    %1475 = vmatprep.subr.mxu0 0.0
    %1476 = vmatpush1.msra.mxu0 0.0
    %1477 = vmatprep.subr.mxu0 0.0
    %1478 = vmatpush1.msra.mxu0 0.0
    %1479 = vmatprep.subr.mxu0 0.0
    %1480 = vmatpush1.msra.mxu0 0.0
    %1481 = vmatprep.subr.mxu0 0.0
    %1482 = vmatpush1.msra.mxu0 0.0
    %1483 = vmatprep.subr.mxu0 0.0
    %1484 = vmatpush1.msra.mxu0 0.0
    %1485 = vmatprep.subr.mxu0 0.0
    %1486 = vmatpush1.msra.mxu0 0.0
    %1487 = vmatprep.subr.mxu0 0.0
    %1488 = vmatpush1.msra.mxu0 0.0
    %1489 = vmatprep.subr.mxu0 0.0
    %1490 = vmatpush1.msra.mxu0 0.0
    %1491 = vmatprep.subr.mxu0 0.0
    %1492 = vmatpush1.msra.mxu0 0.0
    %1493 = vmatprep.subr.mxu0 0.0
    %1494 = vmatpush1.msra.mxu0 0.0
    %1495 = vmatprep.subr.mxu0 0.0
    %1496 = vmatpush1.msra.mxu0 0.0
    %1497 = vmatprep.subr.mxu0 0.0
    %1498 = vmatpush1.msra.mxu0 0.0
    %1499 = vmatprep.subr.mxu0 0.0
    %1500 = vmatpush1.msra.mxu0 0.0
    %1501 = vmatprep.subr.mxu0 0.0
    %1502 = vmatpush1.msra.mxu0 0.0
    %1503 = vmatprep.subr.mxu0 0.0
    %1504 = vmatpush1.msra.mxu0 0.0
    %1505 = vmatprep.mubr.f32.mxu0 0.0
    %1506 = vmatmul.mubr.f32.gmra.mrb[0].mxu0 %v398
    %v1507 = vpop.f32.mrb[0].mxu0
    %v1508 = vadd.f32 0.0, %v1507
    %v1509 = vpop.f32.mrb[0].mxu0
    %1510 = vmatprep.mubr.f32.mxu0 0.0
    %1511 = vmatmul.mubr.f32.gmra.mrb[0].mxu0 %v401
    %v1512 = vpop.f32.mrb[0].mxu0
    %v1513 = vadd.f32 0.0, %v1512
    %v1514 = vpop.f32.mrb[0].mxu0
    %1515 = vmatprep.mubr.f32.mxu0 0.0
    %1516 = vmatmul.mubr.f32.gmra.mrb[0].mxu0 %v404
    %v1517 = vpop.f32.mrb[0].mxu0
    %v1518 = vadd.f32 0.0, %v1517
    %v1519 = vpop.f32.mrb[0].mxu0
    %1520 = vmatprep.mubr.f32.mxu0 0.0
    %1521 = vmatmul.mubr.f32.gmra.mrb[0].mxu0 %v407
    %v1522 = vpop.f32.mrb[0].mxu0
    %v1523 = vadd.f32 0.0, %v1522
    %v1524 = vpop.f32.mrb[0].mxu0
    %1525 = vmatprep.mubr.f32.mxu0 0.0
    %1526 = vmatmul.mubr.f32.gmra.mrb[0].mxu0 %v410
    %v1527 = vpop.f32.mrb[0].mxu0
    %v1528 = vadd.f32 0.0, %v1527
    %v1529 = vpop.f32.mrb[0].mxu0
    %1530 = vmatprep.mubr.f32.mxu0 0.0
    %1531 = vmatmul.mubr.f32.gmra.mrb[0].mxu0 %v413
    %v1532 = vpop.f32.mrb[0].mxu0
    %v1533 = vadd.f32 0.0, %v1532
    %v1534 = vpop.f32.mrb[0].mxu0
    %1535 = vmatprep.mubr.f32.mxu0 0.0
    %1536 = vmatmul.mubr.f32.gmra.mrb[0].mxu0 %v416
    %v1537 = vpop.f32.mrb[0].mxu0
    %v1538 = vadd.f32 0.0, %v1537
    %v1539 = vpop.f32.mrb[0].mxu0
    %1540 = vmatprep.mubr.f32.mxu0 0.0
    %1541 = vmatmul.mubr.f32.gmra.mrb[0].mxu0 %v419
    %v1542 = vpop.f32.mrb[0].mxu0
    %v1543 = vadd.f32 0.0, %v1542
    %v1544 = vpop.f32.mrb[0].mxu0
    %1545 = vdwg.mxu0
    %v1546 = vadd.f32 %v1433, %v1508
    %v1547 = vadd.f32 %v1434, %v1513
    %v1548 = vadd.f32 %v1435, %v1518
    %v1549 = vadd.f32 %v1436, %v1523
    %v1550 = vadd.f32 %v1437, %v1528
    %v1551 = vadd.f32 %v1438, %v1533
    %v1552 = vadd.f32 %v1439, %v1538
    %v1553 = vadd.f32 %v1440, %v1543
    %v1554 = vxor.u32 %v1546, 2147483648
    %v1555 = vxor.u32 %v1547, 2147483648
    %v1556 = vmul.f32 %v1554, 1.442695
    %v1557 = vpow.pop %v1556
    %v1558 = vmul.f32 %v1555, 1.442695
    %v1559 = vpow.pop %v1558
    %v1560 = vadd.f32 %v1557, 1.0
    %v1561 = vadd.f32 %v1559, 1.0
    %v1562 = vrcp.pop %v1560
    %v1563 = vmul.f32 1.0, %v1562
    %v1564 = vrcp.pop %v1561
    %v1565 = vmul.f32 1.0, %v1564
    %v1566 = vxor.u32 %v1548, 2147483648
    %v1567 = vxor.u32 %v1549, 2147483648
    %v1568 = vmul.f32 %v1566, 1.442695
    %v1569 = vpow.pop %v1568
    %v1570 = vmul.f32 %v1567, 1.442695
    %v1571 = vpow.pop %v1570
    %v1572 = vadd.f32 %v1569, 1.0
    %v1573 = vadd.f32 %v1571, 1.0
    %v1574 = vrcp.pop %v1572
    %v1575 = vmul.f32 1.0, %v1574
    %v1576 = vrcp.pop %v1573
    %v1577 = vmul.f32 1.0, %v1576
    %v1578 = vtanh.pop %v1550
    %v1579 = vtanh.pop %v1551
    %v1580 = vxor.u32 %v1552, 2147483648
    %v1581 = vxor.u32 %v1553, 2147483648
    %v1582 = vmul.f32 %v1580, 1.442695
    %v1583 = vpow.pop %v1582
    %v1584 = vmul.f32 %v1581, 1.442695
    %v1585 = vpow.pop %v1584
    %v1586 = vadd.f32 %v1583, 1.0
    %v1587 = vadd.f32 %v1585, 1.0
    %v1588 = vrcp.pop %v1586
    %v1589 = vmul.f32 1.0, %v1588
    %v1590 = vrcp.pop %v1587
    %v1591 = vmul.f32 1.0, %v1590
    %v1592 = vmul.f32 %v1575, %v1426
    %v1593 = vmul.f32 %v1577, %v1427
    %v1594 = vmul.f32 %v1563, %v1578
    %v1595 = vmul.f32 %v1565, %v1579
    %v1596 = vadd.f32 %v1592, %v1594
    %v1597 = vadd.f32 %v1593, %v1595
    %v1598 = vtanh.pop %v1596
    %v1599 = vtanh.pop %v1597
    %v1600 = vmul.f32 %v1589, %v1598
    %v1601 = vmul.f32 %v1591, %v1599
    %s1602 = scalar_lea.vmem %s0, 448
    %v1603 = vld [vmem:[%s1602] sm:$0xff]
    %v1604 = vld [vmem:[%s1602 + $0x8] sm:$0xff]
    %v1605 = vld [vmem:[%s1602 + $0x10] sm:$0xff]
    %v1606 = vld [vmem:[%s1602 + $0x18] sm:$0xff]
    %v1607 = vld [vmem:[%s1602 + $0x20] sm:$0xff]
    %v1608 = vld [vmem:[%s1602 + $0x28] sm:$0xff]
    %v1609 = vld [vmem:[%s1602 + $0x30] sm:$0xff]
    %v1610 = vld [vmem:[%s1602 + $0x38] sm:$0xff]
    %1611 = vmatprep.subr.mxu0 0.0
    %1612 = vmatpush1.msra.mxu0 %v1600
    %1613 = vmatprep.subr.mxu0 0.0
    %1614 = vmatpush1.msra.mxu0 %v1601
    %1615 = vmatprep.subr.mxu0 0.0
    %1616 = vmatpush1.msra.mxu0 0.0
    %1617 = vmatprep.subr.mxu0 0.0
    %1618 = vmatpush1.msra.mxu0 0.0
    %1619 = vmatprep.subr.mxu0 0.0
    %1620 = vmatpush1.msra.mxu0 0.0
    %1621 = vmatprep.subr.mxu0 0.0
    %1622 = vmatpush1.msra.mxu0 0.0
    %1623 = vmatprep.subr.mxu0 0.0
    %1624 = vmatpush1.msra.mxu0 0.0
    %1625 = vmatprep.subr.mxu0 0.0
    %1626 = vmatpush1.msra.mxu0 0.0
    %1627 = vmatprep.subr.mxu0 0.0
    %1628 = vmatpush1.msra.mxu0 0.0
    %1629 = vmatprep.subr.mxu0 0.0
    %1630 = vmatpush1.msra.mxu0 0.0
    %1631 = vmatprep.subr.mxu0 0.0
    %1632 = vmatpush1.msra.mxu0 0.0
    %1633 = vmatprep.subr.mxu0 0.0
    %1634 = vmatpush1.msra.mxu0 0.0
    %1635 = vmatprep.subr.mxu0 0.0
    %1636 = vmatpush1.msra.mxu0 0.0
    %1637 = vmatprep.subr.mxu0 0.0
    %1638 = vmatpush1.msra.mxu0 0.0
    %1639 = vmatprep.subr.mxu0 0.0
    %1640 = vmatpush1.msra.mxu0 0.0
    %1641 = vmatprep.subr.mxu0 0.0
    %1642 = vmatpush1.msra.mxu0 0.0
    %1643 = vmatprep.subr.mxu0 0.0
    %1644 = vmatpush1.msra.mxu0 0.0
    %1645 = vmatprep.subr.mxu0 0.0
    %1646 = vmatpush1.msra.mxu0 0.0
    %1647 = vmatprep.subr.mxu0 0.0
    %1648 = vmatpush1.msra.mxu0 0.0
    %1649 = vmatprep.subr.mxu0 0.0
    %1650 = vmatpush1.msra.mxu0 0.0
    %1651 = vmatprep.subr.mxu0 0.0
    %1652 = vmatpush1.msra.mxu0 0.0
    %1653 = vmatprep.subr.mxu0 0.0
    %1654 = vmatpush1.msra.mxu0 0.0
    %1655 = vmatprep.subr.mxu0 0.0
    %1656 = vmatpush1.msra.mxu0 0.0
    %1657 = vmatprep.subr.mxu0 0.0
    %1658 = vmatpush1.msra.mxu0 0.0
    %1659 = vmatprep.subr.mxu0 0.0
    %1660 = vmatpush1.msra.mxu0 0.0
    %1661 = vmatprep.subr.mxu0 0.0
    %1662 = vmatpush1.msra.mxu0 0.0
    %1663 = vmatprep.subr.mxu0 0.0
    %1664 = vmatpush1.msra.mxu0 0.0
    %1665 = vmatprep.subr.mxu0 0.0
    %1666 = vmatpush1.msra.mxu0 0.0
    %1667 = vmatprep.subr.mxu0 0.0
    %1668 = vmatpush1.msra.mxu0 0.0
    %1669 = vmatprep.subr.mxu0 0.0
    %1670 = vmatpush1.msra.mxu0 0.0
    %1671 = vmatprep.subr.mxu0 0.0
    %1672 = vmatpush1.msra.mxu0 0.0
    %1673 = vmatprep.subr.mxu0 0.0
    %1674 = vmatpush1.msra.mxu0 0.0
    %1675 = vmatprep.mubr.f32.mxu0 0.0
    %1676 = vmatmul.mubr.f32.gmra.mrb[0].mxu0 %v398
    %v1677 = vpop.f32.mrb[0].mxu0
    %v1678 = vadd.f32 0.0, %v1677
    %v1679 = vpop.f32.mrb[0].mxu0
    %1680 = vmatprep.mubr.f32.mxu0 0.0
    %1681 = vmatmul.mubr.f32.gmra.mrb[0].mxu0 %v401
    %v1682 = vpop.f32.mrb[0].mxu0
    %v1683 = vadd.f32 0.0, %v1682
    %v1684 = vpop.f32.mrb[0].mxu0
    %1685 = vmatprep.mubr.f32.mxu0 0.0
    %1686 = vmatmul.mubr.f32.gmra.mrb[0].mxu0 %v404
    %v1687 = vpop.f32.mrb[0].mxu0
    %v1688 = vadd.f32 0.0, %v1687
    %v1689 = vpop.f32.mrb[0].mxu0
    %1690 = vmatprep.mubr.f32.mxu0 0.0
    %1691 = vmatmul.mubr.f32.gmra.mrb[0].mxu0 %v407
    %v1692 = vpop.f32.mrb[0].mxu0
    %v1693 = vadd.f32 0.0, %v1692
    %v1694 = vpop.f32.mrb[0].mxu0
    %1695 = vmatprep.mubr.f32.mxu0 0.0
    %1696 = vmatmul.mubr.f32.gmra.mrb[0].mxu0 %v410
    %v1697 = vpop.f32.mrb[0].mxu0
    %v1698 = vadd.f32 0.0, %v1697
    %v1699 = vpop.f32.mrb[0].mxu0
    %1700 = vmatprep.mubr.f32.mxu0 0.0
    %1701 = vmatmul.mubr.f32.gmra.mrb[0].mxu0 %v413
    %v1702 = vpop.f32.mrb[0].mxu0
    %v1703 = vadd.f32 0.0, %v1702
    %v1704 = vpop.f32.mrb[0].mxu0
    %1705 = vmatprep.mubr.f32.mxu0 0.0
    %1706 = vmatmul.mubr.f32.gmra.mrb[0].mxu0 %v416
    %v1707 = vpop.f32.mrb[0].mxu0
    %v1708 = vadd.f32 0.0, %v1707
    %v1709 = vpop.f32.mrb[0].mxu0
    %1710 = vmatprep.mubr.f32.mxu0 0.0
    %1711 = vmatmul.mubr.f32.gmra.mrb[0].mxu0 %v419
    %v1712 = vpop.f32.mrb[0].mxu0
    %v1713 = vadd.f32 0.0, %v1712
    %v1714 = vpop.f32.mrb[0].mxu0
    %1715 = vdwg.mxu0
    %v1716 = vadd.f32 %v1603, %v1678
    %v1717 = vadd.f32 %v1604, %v1683
    %v1718 = vadd.f32 %v1605, %v1688
    %v1719 = vadd.f32 %v1606, %v1693
    %v1720 = vadd.f32 %v1607, %v1698
    %v1721 = vadd.f32 %v1608, %v1703
    %v1722 = vadd.f32 %v1609, %v1708
    %v1723 = vadd.f32 %v1610, %v1713
    %v1724 = vxor.u32 %v1716, 2147483648
    %v1725 = vxor.u32 %v1717, 2147483648
    %v1726 = vmul.f32 %v1724, 1.442695
    %v1727 = vpow.pop %v1726
    %v1728 = vmul.f32 %v1725, 1.442695
    %v1729 = vpow.pop %v1728
    %v1730 = vadd.f32 %v1727, 1.0
    %v1731 = vadd.f32 %v1729, 1.0
    %v1732 = vrcp.pop %v1730
    %v1733 = vmul.f32 1.0, %v1732
    %v1734 = vrcp.pop %v1731
    %v1735 = vmul.f32 1.0, %v1734
    %v1736 = vxor.u32 %v1718, 2147483648
    %v1737 = vxor.u32 %v1719, 2147483648
    %v1738 = vmul.f32 %v1736, 1.442695
    %v1739 = vpow.pop %v1738
    %v1740 = vmul.f32 %v1737, 1.442695
    %v1741 = vpow.pop %v1740
    %v1742 = vadd.f32 %v1739, 1.0
    %v1743 = vadd.f32 %v1741, 1.0
    %v1744 = vrcp.pop %v1742
    %v1745 = vmul.f32 1.0, %v1744
    %v1746 = vrcp.pop %v1743
    %v1747 = vmul.f32 1.0, %v1746
    %v1748 = vtanh.pop %v1720
    %v1749 = vtanh.pop %v1721
    %v1750 = vxor.u32 %v1722, 2147483648
    %v1751 = vxor.u32 %v1723, 2147483648
    %v1752 = vmul.f32 %v1750, 1.442695
    %v1753 = vpow.pop %v1752
    %v1754 = vmul.f32 %v1751, 1.442695
    %v1755 = vpow.pop %v1754
    %v1756 = vadd.f32 %v1753, 1.0
    %v1757 = vadd.f32 %v1755, 1.0
    %v1758 = vrcp.pop %v1756
    %v1759 = vmul.f32 1.0, %v1758
    %v1760 = vrcp.pop %v1757
    %v1761 = vmul.f32 1.0, %v1760
    %v1762 = vmul.f32 %v1745, %v1596
    %v1763 = vmul.f32 %v1747, %v1597
    %v1764 = vmul.f32 %v1733, %v1748
    %v1765 = vmul.f32 %v1735, %v1749
    %v1766 = vadd.f32 %v1762, %v1764
    %v1767 = vadd.f32 %v1763, %v1765
    %v1768 = vtanh.pop %v1766
    %v1769 = vtanh.pop %v1767
    %v1770 = vmul.f32 %v1759, %v1768
    %v1771 = vmul.f32 %v1761, %v1769
    %s1772 = scalar_lea.vmem %s0, 512
    %v1773 = vld [vmem:[%s1772] sm:$0xff]
    %v1774 = vld [vmem:[%s1772 + $0x8] sm:$0xff]
    %v1775 = vld [vmem:[%s1772 + $0x10] sm:$0xff]
    %v1776 = vld [vmem:[%s1772 + $0x18] sm:$0xff]
    %v1777 = vld [vmem:[%s1772 + $0x20] sm:$0xff]
    %v1778 = vld [vmem:[%s1772 + $0x28] sm:$0xff]
    %v1779 = vld [vmem:[%s1772 + $0x30] sm:$0xff]
    %v1780 = vld [vmem:[%s1772 + $0x38] sm:$0xff]
    %1781 = vmatprep.subr.mxu0 0.0
    %1782 = vmatpush1.msra.mxu0 %v1770
    %1783 = vmatprep.subr.mxu0 0.0
    %1784 = vmatpush1.msra.mxu0 %v1771
    %1785 = vmatprep.subr.mxu0 0.0
    %1786 = vmatpush1.msra.mxu0 0.0
    %1787 = vmatprep.subr.mxu0 0.0
    %1788 = vmatpush1.msra.mxu0 0.0
    %1789 = vmatprep.subr.mxu0 0.0
    %1790 = vmatpush1.msra.mxu0 0.0
    %1791 = vmatprep.subr.mxu0 0.0
    %1792 = vmatpush1.msra.mxu0 0.0
    %1793 = vmatprep.subr.mxu0 0.0
    %1794 = vmatpush1.msra.mxu0 0.0
    %1795 = vmatprep.subr.mxu0 0.0
    %1796 = vmatpush1.msra.mxu0 0.0
    %1797 = vmatprep.subr.mxu0 0.0
    %1798 = vmatpush1.msra.mxu0 0.0
    %1799 = vmatprep.subr.mxu0 0.0
    %1800 = vmatpush1.msra.mxu0 0.0
    %1801 = vmatprep.subr.mxu0 0.0
    %1802 = vmatpush1.msra.mxu0 0.0
    %1803 = vmatprep.subr.mxu0 0.0
    %1804 = vmatpush1.msra.mxu0 0.0
    %1805 = vmatprep.subr.mxu0 0.0
    %1806 = vmatpush1.msra.mxu0 0.0
    %1807 = vmatprep.subr.mxu0 0.0
    %1808 = vmatpush1.msra.mxu0 0.0
    %1809 = vmatprep.subr.mxu0 0.0
    %1810 = vmatpush1.msra.mxu0 0.0
    %1811 = vmatprep.subr.mxu0 0.0
    %1812 = vmatpush1.msra.mxu0 0.0
    %1813 = vmatprep.subr.mxu0 0.0
    %1814 = vmatpush1.msra.mxu0 0.0
    %1815 = vmatprep.subr.mxu0 0.0
    %1816 = vmatpush1.msra.mxu0 0.0
    %1817 = vmatprep.subr.mxu0 0.0
    %1818 = vmatpush1.msra.mxu0 0.0
    %1819 = vmatprep.subr.mxu0 0.0
    %1820 = vmatpush1.msra.mxu0 0.0
    %1821 = vmatprep.subr.mxu0 0.0
    %1822 = vmatpush1.msra.mxu0 0.0
    %1823 = vmatprep.subr.mxu0 0.0
    %1824 = vmatpush1.msra.mxu0 0.0
    %1825 = vmatprep.subr.mxu0 0.0
    %1826 = vmatpush1.msra.mxu0 0.0
    %1827 = vmatprep.subr.mxu0 0.0
    %1828 = vmatpush1.msra.mxu0 0.0
    %1829 = vmatprep.subr.mxu0 0.0
    %1830 = vmatpush1.msra.mxu0 0.0
    %1831 = vmatprep.subr.mxu0 0.0
    %1832 = vmatpush1.msra.mxu0 0.0
    %1833 = vmatprep.subr.mxu0 0.0
    %1834 = vmatpush1.msra.mxu0 0.0
    %1835 = vmatprep.subr.mxu0 0.0
    %1836 = vmatpush1.msra.mxu0 0.0
    %1837 = vmatprep.subr.mxu0 0.0
    %1838 = vmatpush1.msra.mxu0 0.0
    %1839 = vmatprep.subr.mxu0 0.0
    %1840 = vmatpush1.msra.mxu0 0.0
    %1841 = vmatprep.subr.mxu0 0.0
    %1842 = vmatpush1.msra.mxu0 0.0
    %1843 = vmatprep.subr.mxu0 0.0
    %1844 = vmatpush1.msra.mxu0 0.0
    %1845 = vmatprep.mubr.f32.mxu0 0.0
    %1846 = vmatmul.mubr.f32.gmra.mrb[0].mxu0 %v398
    %v1847 = vpop.f32.mrb[0].mxu0
    %v1848 = vadd.f32 0.0, %v1847
    %v1849 = vpop.f32.mrb[0].mxu0
    %1850 = vmatprep.mubr.f32.mxu0 0.0
    %1851 = vmatmul.mubr.f32.gmra.mrb[0].mxu0 %v401
    %v1852 = vpop.f32.mrb[0].mxu0
    %v1853 = vadd.f32 0.0, %v1852
    %v1854 = vpop.f32.mrb[0].mxu0
    %1855 = vmatprep.mubr.f32.mxu0 0.0
    %1856 = vmatmul.mubr.f32.gmra.mrb[0].mxu0 %v404
    %v1857 = vpop.f32.mrb[0].mxu0
    %v1858 = vadd.f32 0.0, %v1857
    %v1859 = vpop.f32.mrb[0].mxu0
    %1860 = vmatprep.mubr.f32.mxu0 0.0
    %1861 = vmatmul.mubr.f32.gmra.mrb[0].mxu0 %v407
    %v1862 = vpop.f32.mrb[0].mxu0
    %v1863 = vadd.f32 0.0, %v1862
    %v1864 = vpop.f32.mrb[0].mxu0
    %1865 = vmatprep.mubr.f32.mxu0 0.0
    %1866 = vmatmul.mubr.f32.gmra.mrb[0].mxu0 %v410
    %v1867 = vpop.f32.mrb[0].mxu0
    %v1868 = vadd.f32 0.0, %v1867
    %v1869 = vpop.f32.mrb[0].mxu0
    %1870 = vmatprep.mubr.f32.mxu0 0.0
    %1871 = vmatmul.mubr.f32.gmra.mrb[0].mxu0 %v413
    %v1872 = vpop.f32.mrb[0].mxu0
    %v1873 = vadd.f32 0.0, %v1872
    %v1874 = vpop.f32.mrb[0].mxu0
    %1875 = vmatprep.mubr.f32.mxu0 0.0
    %1876 = vmatmul.mubr.f32.gmra.mrb[0].mxu0 %v416
    %v1877 = vpop.f32.mrb[0].mxu0
    %v1878 = vadd.f32 0.0, %v1877
    %v1879 = vpop.f32.mrb[0].mxu0
    %1880 = vmatprep.mubr.f32.mxu0 0.0
    %1881 = vmatmul.mubr.f32.gmra.mrb[0].mxu0 %v419
    %v1882 = vpop.f32.mrb[0].mxu0
    %v1883 = vadd.f32 0.0, %v1882
    %v1884 = vpop.f32.mrb[0].mxu0
    %1885 = vdwg.mxu0
    %v1886 = vadd.f32 %v1773, %v1848
    %v1887 = vadd.f32 %v1774, %v1853
    %v1888 = vadd.f32 %v1775, %v1858
    %v1889 = vadd.f32 %v1776, %v1863
    %v1890 = vadd.f32 %v1777, %v1868
    %v1891 = vadd.f32 %v1778, %v1873
    %v1892 = vadd.f32 %v1779, %v1878
    %v1893 = vadd.f32 %v1780, %v1883
    %v1894 = vxor.u32 %v1886, 2147483648
    %v1895 = vxor.u32 %v1887, 2147483648
    %v1896 = vmul.f32 %v1894, 1.442695
    %v1897 = vpow.pop %v1896
    %v1898 = vmul.f32 %v1895, 1.442695
    %v1899 = vpow.pop %v1898
    %v1900 = vadd.f32 %v1897, 1.0
    %v1901 = vadd.f32 %v1899, 1.0
    %v1902 = vrcp.pop %v1900
    %v1903 = vmul.f32 1.0, %v1902
    %v1904 = vrcp.pop %v1901
    %v1905 = vmul.f32 1.0, %v1904
    %v1906 = vxor.u32 %v1888, 2147483648
    %v1907 = vxor.u32 %v1889, 2147483648
    %v1908 = vmul.f32 %v1906, 1.442695
    %v1909 = vpow.pop %v1908
    %v1910 = vmul.f32 %v1907, 1.442695
    %v1911 = vpow.pop %v1910
    %v1912 = vadd.f32 %v1909, 1.0
    %v1913 = vadd.f32 %v1911, 1.0
    %v1914 = vrcp.pop %v1912
    %v1915 = vmul.f32 1.0, %v1914
    %v1916 = vrcp.pop %v1913
    %v1917 = vmul.f32 1.0, %v1916
    %v1918 = vtanh.pop %v1890
    %v1919 = vtanh.pop %v1891
    %v1920 = vxor.u32 %v1892, 2147483648
    %v1921 = vxor.u32 %v1893, 2147483648
    %v1922 = vmul.f32 %v1920, 1.442695
    %v1923 = vpow.pop %v1922
    %v1924 = vmul.f32 %v1921, 1.442695
    %v1925 = vpow.pop %v1924
    %v1926 = vadd.f32 %v1923, 1.0
    %v1927 = vadd.f32 %v1925, 1.0
    %v1928 = vrcp.pop %v1926
    %v1929 = vmul.f32 1.0, %v1928
    %v1930 = vrcp.pop %v1927
    %v1931 = vmul.f32 1.0, %v1930
    %v1932 = vmul.f32 %v1915, %v1766
    %v1933 = vmul.f32 %v1917, %v1767
    %v1934 = vmul.f32 %v1903, %v1918
    %v1935 = vmul.f32 %v1905, %v1919
    %v1936 = vadd.f32 %v1932, %v1934
    %v1937 = vadd.f32 %v1933, %v1935
    %v1938 = vtanh.pop %v1936
    %v1939 = vtanh.pop %v1937
    %v1940 = vmul.f32 %v1929, %v1938
    %v1941 = vmul.f32 %v1931, %v1939
    %s1942 = scalar_lea.vmem %s0, 576
    %v1943 = vld [vmem:[%s1942] sm:$0xff]
    %v1944 = vld [vmem:[%s1942 + $0x8] sm:$0xff]
    %v1945 = vld [vmem:[%s1942 + $0x10] sm:$0xff]
    %v1946 = vld [vmem:[%s1942 + $0x18] sm:$0xff]
    %v1947 = vld [vmem:[%s1942 + $0x20] sm:$0xff]
    %v1948 = vld [vmem:[%s1942 + $0x28] sm:$0xff]
    %v1949 = vld [vmem:[%s1942 + $0x30] sm:$0xff]
    %v1950 = vld [vmem:[%s1942 + $0x38] sm:$0xff]
    %1951 = vmatprep.subr.mxu0 0.0
    %1952 = vmatpush1.msra.mxu0 %v1940
    %1953 = vmatprep.subr.mxu0 0.0
    %1954 = vmatpush1.msra.mxu0 %v1941
    %1955 = vmatprep.subr.mxu0 0.0
    %1956 = vmatpush1.msra.mxu0 0.0
    %1957 = vmatprep.subr.mxu0 0.0
    %1958 = vmatpush1.msra.mxu0 0.0
    %1959 = vmatprep.subr.mxu0 0.0
    %1960 = vmatpush1.msra.mxu0 0.0
    %1961 = vmatprep.subr.mxu0 0.0
    %1962 = vmatpush1.msra.mxu0 0.0
    %1963 = vmatprep.subr.mxu0 0.0
    %1964 = vmatpush1.msra.mxu0 0.0
    %1965 = vmatprep.subr.mxu0 0.0
    %1966 = vmatpush1.msra.mxu0 0.0
    %1967 = vmatprep.subr.mxu0 0.0
    %1968 = vmatpush1.msra.mxu0 0.0
    %1969 = vmatprep.subr.mxu0 0.0
    %1970 = vmatpush1.msra.mxu0 0.0
    %1971 = vmatprep.subr.mxu0 0.0
    %1972 = vmatpush1.msra.mxu0 0.0
    %1973 = vmatprep.subr.mxu0 0.0
    %1974 = vmatpush1.msra.mxu0 0.0
    %1975 = vmatprep.subr.mxu0 0.0
    %1976 = vmatpush1.msra.mxu0 0.0
    %1977 = vmatprep.subr.mxu0 0.0
    %1978 = vmatpush1.msra.mxu0 0.0
    %1979 = vmatprep.subr.mxu0 0.0
    %1980 = vmatpush1.msra.mxu0 0.0
    %1981 = vmatprep.subr.mxu0 0.0
    %1982 = vmatpush1.msra.mxu0 0.0
    %1983 = vmatprep.subr.mxu0 0.0
    %1984 = vmatpush1.msra.mxu0 0.0
    %1985 = vmatprep.subr.mxu0 0.0
    %1986 = vmatpush1.msra.mxu0 0.0
    %1987 = vmatprep.subr.mxu0 0.0
    %1988 = vmatpush1.msra.mxu0 0.0
    %1989 = vmatprep.subr.mxu0 0.0
    %1990 = vmatpush1.msra.mxu0 0.0
    %1991 = vmatprep.subr.mxu0 0.0
    %1992 = vmatpush1.msra.mxu0 0.0
    %1993 = vmatprep.subr.mxu0 0.0
    %1994 = vmatpush1.msra.mxu0 0.0
    %1995 = vmatprep.subr.mxu0 0.0
    %1996 = vmatpush1.msra.mxu0 0.0
    %1997 = vmatprep.subr.mxu0 0.0
    %1998 = vmatpush1.msra.mxu0 0.0
    %1999 = vmatprep.subr.mxu0 0.0
    %2000 = vmatpush1.msra.mxu0 0.0
    %2001 = vmatprep.subr.mxu0 0.0
    %2002 = vmatpush1.msra.mxu0 0.0
    %2003 = vmatprep.subr.mxu0 0.0
    %2004 = vmatpush1.msra.mxu0 0.0
    %2005 = vmatprep.subr.mxu0 0.0
    %2006 = vmatpush1.msra.mxu0 0.0
    %2007 = vmatprep.subr.mxu0 0.0
    %2008 = vmatpush1.msra.mxu0 0.0
    %2009 = vmatprep.subr.mxu0 0.0
    %2010 = vmatpush1.msra.mxu0 0.0
    %2011 = vmatprep.subr.mxu0 0.0
    %2012 = vmatpush1.msra.mxu0 0.0
    %2013 = vmatprep.subr.mxu0 0.0
    %2014 = vmatpush1.msra.mxu0 0.0
    %2015 = vmatprep.mubr.f32.mxu0 0.0
    %2016 = vmatmul.mubr.f32.gmra.mrb[0].mxu0 %v398
    %v2017 = vpop.f32.mrb[0].mxu0
    %v2018 = vadd.f32 0.0, %v2017
    %v2019 = vpop.f32.mrb[0].mxu0
    %2020 = vmatprep.mubr.f32.mxu0 0.0
    %2021 = vmatmul.mubr.f32.gmra.mrb[0].mxu0 %v401
    %v2022 = vpop.f32.mrb[0].mxu0
    %v2023 = vadd.f32 0.0, %v2022
    %v2024 = vpop.f32.mrb[0].mxu0
    %2025 = vmatprep.mubr.f32.mxu0 0.0
    %2026 = vmatmul.mubr.f32.gmra.mrb[0].mxu0 %v404
    %v2027 = vpop.f32.mrb[0].mxu0
    %v2028 = vadd.f32 0.0, %v2027
    %v2029 = vpop.f32.mrb[0].mxu0
    %2030 = vmatprep.mubr.f32.mxu0 0.0
    %2031 = vmatmul.mubr.f32.gmra.mrb[0].mxu0 %v407
    %v2032 = vpop.f32.mrb[0].mxu0
    %v2033 = vadd.f32 0.0, %v2032
    %v2034 = vpop.f32.mrb[0].mxu0
    %2035 = vmatprep.mubr.f32.mxu0 0.0
    %2036 = vmatmul.mubr.f32.gmra.mrb[0].mxu0 %v410
    %v2037 = vpop.f32.mrb[0].mxu0
    %v2038 = vadd.f32 0.0, %v2037
    %v2039 = vpop.f32.mrb[0].mxu0
    %2040 = vmatprep.mubr.f32.mxu0 0.0
    %2041 = vmatmul.mubr.f32.gmra.mrb[0].mxu0 %v413
    %v2042 = vpop.f32.mrb[0].mxu0
    %v2043 = vadd.f32 0.0, %v2042
    %v2044 = vpop.f32.mrb[0].mxu0
    %2045 = vmatprep.mubr.f32.mxu0 0.0
    %2046 = vmatmul.mubr.f32.gmra.mrb[0].mxu0 %v416
    %v2047 = vpop.f32.mrb[0].mxu0
    %v2048 = vadd.f32 0.0, %v2047
    %v2049 = vpop.f32.mrb[0].mxu0
    %2050 = vmatprep.mubr.f32.mxu0 0.0
    %2051 = vmatmul.mubr.f32.gmra.mrb[0].mxu0 %v419
    %v2052 = vpop.f32.mrb[0].mxu0
    %v2053 = vadd.f32 0.0, %v2052
    %v2054 = vpop.f32.mrb[0].mxu0
    %2055 = vdwg.mxu0
    %v2056 = vadd.f32 %v1943, %v2018
    %v2057 = vadd.f32 %v1944, %v2023
    %v2058 = vadd.f32 %v1945, %v2028
    %v2059 = vadd.f32 %v1946, %v2033
    %v2060 = vadd.f32 %v1947, %v2038
    %v2061 = vadd.f32 %v1948, %v2043
    %v2062 = vadd.f32 %v1949, %v2048
    %v2063 = vadd.f32 %v1950, %v2053
    %v2064 = vxor.u32 %v2056, 2147483648
    %v2065 = vxor.u32 %v2057, 2147483648
    %v2066 = vmul.f32 %v2064, 1.442695
    %v2067 = vpow.pop %v2066
    %v2068 = vmul.f32 %v2065, 1.442695
    %v2069 = vpow.pop %v2068
    %v2070 = vadd.f32 %v2067, 1.0
    %v2071 = vadd.f32 %v2069, 1.0
    %v2072 = vrcp.pop %v2070
    %v2073 = vmul.f32 1.0, %v2072
    %v2074 = vrcp.pop %v2071
    %v2075 = vmul.f32 1.0, %v2074
    %v2076 = vxor.u32 %v2058, 2147483648
    %v2077 = vxor.u32 %v2059, 2147483648
    %v2078 = vmul.f32 %v2076, 1.442695
    %v2079 = vpow.pop %v2078
    %v2080 = vmul.f32 %v2077, 1.442695
    %v2081 = vpow.pop %v2080
    %v2082 = vadd.f32 %v2079, 1.0
    %v2083 = vadd.f32 %v2081, 1.0
    %v2084 = vrcp.pop %v2082
    %v2085 = vmul.f32 1.0, %v2084
    %v2086 = vrcp.pop %v2083
    %v2087 = vmul.f32 1.0, %v2086
    %v2088 = vtanh.pop %v2060
    %v2089 = vtanh.pop %v2061
    %v2090 = vxor.u32 %v2062, 2147483648
    %v2091 = vxor.u32 %v2063, 2147483648
    %v2092 = vmul.f32 %v2090, 1.442695
    %v2093 = vpow.pop %v2092
    %v2094 = vmul.f32 %v2091, 1.442695
    %v2095 = vpow.pop %v2094
    %v2096 = vadd.f32 %v2093, 1.0
    %v2097 = vadd.f32 %v2095, 1.0
    %v2098 = vrcp.pop %v2096
    %v2099 = vmul.f32 1.0, %v2098
    %v2100 = vrcp.pop %v2097
    %v2101 = vmul.f32 1.0, %v2100
    %v2102 = vmul.f32 %v2085, %v1936
    %v2103 = vmul.f32 %v2087, %v1937
    %v2104 = vmul.f32 %v2073, %v2088
    %v2105 = vmul.f32 %v2075, %v2089
    %v2106 = vadd.f32 %v2102, %v2104
    %v2107 = vadd.f32 %v2103, %v2105
    %v2108 = vtanh.pop %v2106
    %v2109 = vtanh.pop %v2107
    %v2110 = vmul.f32 %v2099, %v2108
    %v2111 = vmul.f32 %v2101, %v2109
    %s2112 = scalar_lea.vmem %s0, 640
    %v2113 = vld [vmem:[%s2112] sm:$0xff]
    %v2114 = vld [vmem:[%s2112 + $0x8] sm:$0xff]
    %v2115 = vld [vmem:[%s2112 + $0x10] sm:$0xff]
    %v2116 = vld [vmem:[%s2112 + $0x18] sm:$0xff]
    %v2117 = vld [vmem:[%s2112 + $0x20] sm:$0xff]
    %v2118 = vld [vmem:[%s2112 + $0x28] sm:$0xff]
    %v2119 = vld [vmem:[%s2112 + $0x30] sm:$0xff]
    %v2120 = vld [vmem:[%s2112 + $0x38] sm:$0xff]
    %2121 = vmatprep.subr.mxu0 0.0
    %2122 = vmatpush1.msra.mxu0 %v2110
    %2123 = vmatprep.subr.mxu0 0.0
    %2124 = vmatpush1.msra.mxu0 %v2111
    %2125 = vmatprep.subr.mxu0 0.0
    %2126 = vmatpush1.msra.mxu0 0.0
    %2127 = vmatprep.subr.mxu0 0.0
    %2128 = vmatpush1.msra.mxu0 0.0
    %2129 = vmatprep.subr.mxu0 0.0
    %2130 = vmatpush1.msra.mxu0 0.0
    %2131 = vmatprep.subr.mxu0 0.0
    %2132 = vmatpush1.msra.mxu0 0.0
    %2133 = vmatprep.subr.mxu0 0.0
    %2134 = vmatpush1.msra.mxu0 0.0
    %2135 = vmatprep.subr.mxu0 0.0
    %2136 = vmatpush1.msra.mxu0 0.0
    %2137 = vmatprep.subr.mxu0 0.0
    %2138 = vmatpush1.msra.mxu0 0.0
    %2139 = vmatprep.subr.mxu0 0.0
    %2140 = vmatpush1.msra.mxu0 0.0
    %2141 = vmatprep.subr.mxu0 0.0
    %2142 = vmatpush1.msra.mxu0 0.0
    %2143 = vmatprep.subr.mxu0 0.0
    %2144 = vmatpush1.msra.mxu0 0.0
    %2145 = vmatprep.subr.mxu0 0.0
    %2146 = vmatpush1.msra.mxu0 0.0
    %2147 = vmatprep.subr.mxu0 0.0
    %2148 = vmatpush1.msra.mxu0 0.0
    %2149 = vmatprep.subr.mxu0 0.0
    %2150 = vmatpush1.msra.mxu0 0.0
    %2151 = vmatprep.subr.mxu0 0.0
    %2152 = vmatpush1.msra.mxu0 0.0
    %2153 = vmatprep.subr.mxu0 0.0
    %2154 = vmatpush1.msra.mxu0 0.0
    %2155 = vmatprep.subr.mxu0 0.0
    %2156 = vmatpush1.msra.mxu0 0.0
    %2157 = vmatprep.subr.mxu0 0.0
    %2158 = vmatpush1.msra.mxu0 0.0
    %2159 = vmatprep.subr.mxu0 0.0
    %2160 = vmatpush1.msra.mxu0 0.0
    %2161 = vmatprep.subr.mxu0 0.0
    %2162 = vmatpush1.msra.mxu0 0.0
    %2163 = vmatprep.subr.mxu0 0.0
    %2164 = vmatpush1.msra.mxu0 0.0
    %2165 = vmatprep.subr.mxu0 0.0
    %2166 = vmatpush1.msra.mxu0 0.0
    %2167 = vmatprep.subr.mxu0 0.0
    %2168 = vmatpush1.msra.mxu0 0.0
    %2169 = vmatprep.subr.mxu0 0.0
    %2170 = vmatpush1.msra.mxu0 0.0
    %2171 = vmatprep.subr.mxu0 0.0
    %2172 = vmatpush1.msra.mxu0 0.0
    %2173 = vmatprep.subr.mxu0 0.0
    %2174 = vmatpush1.msra.mxu0 0.0
    %2175 = vmatprep.subr.mxu0 0.0
    %2176 = vmatpush1.msra.mxu0 0.0
    %2177 = vmatprep.subr.mxu0 0.0
    %2178 = vmatpush1.msra.mxu0 0.0
    %2179 = vmatprep.subr.mxu0 0.0
    %2180 = vmatpush1.msra.mxu0 0.0
    %2181 = vmatprep.subr.mxu0 0.0
    %2182 = vmatpush1.msra.mxu0 0.0
    %2183 = vmatprep.subr.mxu0 0.0
    %2184 = vmatpush1.msra.mxu0 0.0
    %2185 = vmatprep.mubr.f32.mxu0 0.0
    %2186 = vmatmul.mubr.f32.gmra.mrb[0].mxu0 %v398
    %v2187 = vpop.f32.mrb[0].mxu0
    %v2188 = vadd.f32 0.0, %v2187
    %v2189 = vpop.f32.mrb[0].mxu0
    %2190 = vmatprep.mubr.f32.mxu0 0.0
    %2191 = vmatmul.mubr.f32.gmra.mrb[0].mxu0 %v401
    %v2192 = vpop.f32.mrb[0].mxu0
    %v2193 = vadd.f32 0.0, %v2192
    %v2194 = vpop.f32.mrb[0].mxu0
    %2195 = vmatprep.mubr.f32.mxu0 0.0
    %2196 = vmatmul.mubr.f32.gmra.mrb[0].mxu0 %v404
    %v2197 = vpop.f32.mrb[0].mxu0
    %v2198 = vadd.f32 0.0, %v2197
    %v2199 = vpop.f32.mrb[0].mxu0
    %2200 = vmatprep.mubr.f32.mxu0 0.0
    %2201 = vmatmul.mubr.f32.gmra.mrb[0].mxu0 %v407
    %v2202 = vpop.f32.mrb[0].mxu0
    %v2203 = vadd.f32 0.0, %v2202
    %v2204 = vpop.f32.mrb[0].mxu0
    %2205 = vmatprep.mubr.f32.mxu0 0.0
    %2206 = vmatmul.mubr.f32.gmra.mrb[0].mxu0 %v410
    %v2207 = vpop.f32.mrb[0].mxu0
    %v2208 = vadd.f32 0.0, %v2207
    %v2209 = vpop.f32.mrb[0].mxu0
    %2210 = vmatprep.mubr.f32.mxu0 0.0
    %2211 = vmatmul.mubr.f32.gmra.mrb[0].mxu0 %v413
    %v2212 = vpop.f32.mrb[0].mxu0
    %v2213 = vadd.f32 0.0, %v2212
    %v2214 = vpop.f32.mrb[0].mxu0
    %2215 = vmatprep.mubr.f32.mxu0 0.0
    %2216 = vmatmul.mubr.f32.gmra.mrb[0].mxu0 %v416
    %v2217 = vpop.f32.mrb[0].mxu0
    %v2218 = vadd.f32 0.0, %v2217
    %v2219 = vpop.f32.mrb[0].mxu0
    %2220 = vmatprep.mubr.f32.mxu0 0.0
    %2221 = vmatmul.mubr.f32.gmra.mrb[0].mxu0 %v419
    %v2222 = vpop.f32.mrb[0].mxu0
    %v2223 = vadd.f32 0.0, %v2222
    %v2224 = vpop.f32.mrb[0].mxu0
    %2225 = vdwg.mxu0
    %v2226 = vadd.f32 %v2113, %v2188
    %v2227 = vadd.f32 %v2114, %v2193
    %v2228 = vadd.f32 %v2115, %v2198
    %v2229 = vadd.f32 %v2116, %v2203
    %v2230 = vadd.f32 %v2117, %v2208
    %v2231 = vadd.f32 %v2118, %v2213
    %v2232 = vadd.f32 %v2119, %v2218
    %v2233 = vadd.f32 %v2120, %v2223
    %v2234 = vxor.u32 %v2226, 2147483648
    %v2235 = vxor.u32 %v2227, 2147483648
    %v2236 = vmul.f32 %v2234, 1.442695
    %v2237 = vpow.pop %v2236
    %v2238 = vmul.f32 %v2235, 1.442695
    %v2239 = vpow.pop %v2238
    %v2240 = vadd.f32 %v2237, 1.0
    %v2241 = vadd.f32 %v2239, 1.0
    %v2242 = vrcp.pop %v2240
    %v2243 = vmul.f32 1.0, %v2242
    %v2244 = vrcp.pop %v2241
    %v2245 = vmul.f32 1.0, %v2244
    %v2246 = vxor.u32 %v2228, 2147483648
    %v2247 = vxor.u32 %v2229, 2147483648
    %v2248 = vmul.f32 %v2246, 1.442695
    %v2249 = vpow.pop %v2248
    %v2250 = vmul.f32 %v2247, 1.442695
    %v2251 = vpow.pop %v2250
    %v2252 = vadd.f32 %v2249, 1.0
    %v2253 = vadd.f32 %v2251, 1.0
    %v2254 = vrcp.pop %v2252
    %v2255 = vmul.f32 1.0, %v2254
    %v2256 = vrcp.pop %v2253
    %v2257 = vmul.f32 1.0, %v2256
    %v2258 = vtanh.pop %v2230
    %v2259 = vtanh.pop %v2231
    %v2260 = vxor.u32 %v2232, 2147483648
    %v2261 = vxor.u32 %v2233, 2147483648
    %v2262 = vmul.f32 %v2260, 1.442695
    %v2263 = vpow.pop %v2262
    %v2264 = vmul.f32 %v2261, 1.442695
    %v2265 = vpow.pop %v2264
    %v2266 = vadd.f32 %v2263, 1.0
    %v2267 = vadd.f32 %v2265, 1.0
    %v2268 = vrcp.pop %v2266
    %v2269 = vmul.f32 1.0, %v2268
    %v2270 = vrcp.pop %v2267
    %v2271 = vmul.f32 1.0, %v2270
    %v2272 = vmul.f32 %v2255, %v2106
    %v2273 = vmul.f32 %v2257, %v2107
    %v2274 = vmul.f32 %v2243, %v2258
    %v2275 = vmul.f32 %v2245, %v2259
    %v2276 = vadd.f32 %v2272, %v2274
    %v2277 = vadd.f32 %v2273, %v2275
    %v2278 = vtanh.pop %v2276
    %v2279 = vtanh.pop %v2277
    %v2280 = vmul.f32 %v2269, %v2278
    %v2281 = vmul.f32 %v2271, %v2279
    %s2282 = scalar_lea.vmem %s0, 704
    %v2283 = vld [vmem:[%s2282] sm:$0xff]
    %v2284 = vld [vmem:[%s2282 + $0x8] sm:$0xff]
    %v2285 = vld [vmem:[%s2282 + $0x10] sm:$0xff]
    %v2286 = vld [vmem:[%s2282 + $0x18] sm:$0xff]
    %v2287 = vld [vmem:[%s2282 + $0x20] sm:$0xff]
    %v2288 = vld [vmem:[%s2282 + $0x28] sm:$0xff]
    %v2289 = vld [vmem:[%s2282 + $0x30] sm:$0xff]
    %v2290 = vld [vmem:[%s2282 + $0x38] sm:$0xff]
    %2291 = vmatprep.subr.mxu0 0.0
    %2292 = vmatpush1.msra.mxu0 %v2280
    %2293 = vmatprep.subr.mxu0 0.0
    %2294 = vmatpush1.msra.mxu0 %v2281
    %2295 = vmatprep.subr.mxu0 0.0
    %2296 = vmatpush1.msra.mxu0 0.0
    %2297 = vmatprep.subr.mxu0 0.0
    %2298 = vmatpush1.msra.mxu0 0.0
    %2299 = vmatprep.subr.mxu0 0.0
    %2300 = vmatpush1.msra.mxu0 0.0
    %2301 = vmatprep.subr.mxu0 0.0
    %2302 = vmatpush1.msra.mxu0 0.0
    %2303 = vmatprep.subr.mxu0 0.0
    %2304 = vmatpush1.msra.mxu0 0.0
    %2305 = vmatprep.subr.mxu0 0.0
    %2306 = vmatpush1.msra.mxu0 0.0
    %2307 = vmatprep.subr.mxu0 0.0
    %2308 = vmatpush1.msra.mxu0 0.0
    %2309 = vmatprep.subr.mxu0 0.0
    %2310 = vmatpush1.msra.mxu0 0.0
    %2311 = vmatprep.subr.mxu0 0.0
    %2312 = vmatpush1.msra.mxu0 0.0
    %2313 = vmatprep.subr.mxu0 0.0
    %2314 = vmatpush1.msra.mxu0 0.0
    %2315 = vmatprep.subr.mxu0 0.0
    %2316 = vmatpush1.msra.mxu0 0.0
    %2317 = vmatprep.subr.mxu0 0.0
    %2318 = vmatpush1.msra.mxu0 0.0
    %2319 = vmatprep.subr.mxu0 0.0
    %2320 = vmatpush1.msra.mxu0 0.0
    %2321 = vmatprep.subr.mxu0 0.0
    %2322 = vmatpush1.msra.mxu0 0.0
    %2323 = vmatprep.subr.mxu0 0.0
    %2324 = vmatpush1.msra.mxu0 0.0
    %2325 = vmatprep.subr.mxu0 0.0
    %2326 = vmatpush1.msra.mxu0 0.0
    %2327 = vmatprep.subr.mxu0 0.0
    %2328 = vmatpush1.msra.mxu0 0.0
    %2329 = vmatprep.subr.mxu0 0.0
    %2330 = vmatpush1.msra.mxu0 0.0
    %2331 = vmatprep.subr.mxu0 0.0
    %2332 = vmatpush1.msra.mxu0 0.0
    %2333 = vmatprep.subr.mxu0 0.0
    %2334 = vmatpush1.msra.mxu0 0.0
    %2335 = vmatprep.subr.mxu0 0.0
    %2336 = vmatpush1.msra.mxu0 0.0
    %2337 = vmatprep.subr.mxu0 0.0
    %2338 = vmatpush1.msra.mxu0 0.0
    %2339 = vmatprep.subr.mxu0 0.0
    %2340 = vmatpush1.msra.mxu0 0.0
    %2341 = vmatprep.subr.mxu0 0.0
    %2342 = vmatpush1.msra.mxu0 0.0
    %2343 = vmatprep.subr.mxu0 0.0
    %2344 = vmatpush1.msra.mxu0 0.0
    %2345 = vmatprep.subr.mxu0 0.0
    %2346 = vmatpush1.msra.mxu0 0.0
    %2347 = vmatprep.subr.mxu0 0.0
    %2348 = vmatpush1.msra.mxu0 0.0
    %2349 = vmatprep.subr.mxu0 0.0
    %2350 = vmatpush1.msra.mxu0 0.0
    %2351 = vmatprep.subr.mxu0 0.0
    %2352 = vmatpush1.msra.mxu0 0.0
    %2353 = vmatprep.subr.mxu0 0.0
    %2354 = vmatpush1.msra.mxu0 0.0
    %2355 = vmatprep.mubr.f32.mxu0 0.0
    %2356 = vmatmul.mubr.f32.gmra.mrb[0].mxu0 %v398
    %v2357 = vpop.f32.mrb[0].mxu0
    %v2358 = vadd.f32 0.0, %v2357
    %v2359 = vpop.f32.mrb[0].mxu0
    %2360 = vmatprep.mubr.f32.mxu0 0.0
    %2361 = vmatmul.mubr.f32.gmra.mrb[0].mxu0 %v401
    %v2362 = vpop.f32.mrb[0].mxu0
    %v2363 = vadd.f32 0.0, %v2362
    %v2364 = vpop.f32.mrb[0].mxu0
    %2365 = vmatprep.mubr.f32.mxu0 0.0
    %2366 = vmatmul.mubr.f32.gmra.mrb[0].mxu0 %v404
    %v2367 = vpop.f32.mrb[0].mxu0
    %v2368 = vadd.f32 0.0, %v2367
    %v2369 = vpop.f32.mrb[0].mxu0
    %2370 = vmatprep.mubr.f32.mxu0 0.0
    %2371 = vmatmul.mubr.f32.gmra.mrb[0].mxu0 %v407
    %v2372 = vpop.f32.mrb[0].mxu0
    %v2373 = vadd.f32 0.0, %v2372
    %v2374 = vpop.f32.mrb[0].mxu0
    %2375 = vmatprep.mubr.f32.mxu0 0.0
    %2376 = vmatmul.mubr.f32.gmra.mrb[0].mxu0 %v410
    %v2377 = vpop.f32.mrb[0].mxu0
    %v2378 = vadd.f32 0.0, %v2377
    %v2379 = vpop.f32.mrb[0].mxu0
    %2380 = vmatprep.mubr.f32.mxu0 0.0
    %2381 = vmatmul.mubr.f32.gmra.mrb[0].mxu0 %v413
    %v2382 = vpop.f32.mrb[0].mxu0
    %v2383 = vadd.f32 0.0, %v2382
    %v2384 = vpop.f32.mrb[0].mxu0
    %2385 = vmatprep.mubr.f32.mxu0 0.0
    %2386 = vmatmul.mubr.f32.gmra.mrb[0].mxu0 %v416
    %v2387 = vpop.f32.mrb[0].mxu0
    %v2388 = vadd.f32 0.0, %v2387
    %v2389 = vpop.f32.mrb[0].mxu0
    %2390 = vmatprep.mubr.f32.mxu0 0.0
    %2391 = vmatmul.mubr.f32.gmra.mrb[0].mxu0 %v419
    %v2392 = vpop.f32.mrb[0].mxu0
    %v2393 = vadd.f32 0.0, %v2392
    %v2394 = vpop.f32.mrb[0].mxu0
    %2395 = vdwg.mxu0
    %v2396 = vadd.f32 %v2283, %v2358
    %v2397 = vadd.f32 %v2284, %v2363
    %v2398 = vadd.f32 %v2285, %v2368
    %v2399 = vadd.f32 %v2286, %v2373
    %v2400 = vadd.f32 %v2287, %v2378
    %v2401 = vadd.f32 %v2288, %v2383
    %v2402 = vadd.f32 %v2289, %v2388
    %v2403 = vadd.f32 %v2290, %v2393
    %v2404 = vxor.u32 %v2396, 2147483648
    %v2405 = vxor.u32 %v2397, 2147483648
    %v2406 = vmul.f32 %v2404, 1.442695
    %v2407 = vpow.pop %v2406
    %v2408 = vmul.f32 %v2405, 1.442695
    %v2409 = vpow.pop %v2408
    %v2410 = vadd.f32 %v2407, 1.0
    %v2411 = vadd.f32 %v2409, 1.0
    %v2412 = vrcp.pop %v2410
    %v2413 = vmul.f32 1.0, %v2412
    %v2414 = vrcp.pop %v2411
    %v2415 = vmul.f32 1.0, %v2414
    %v2416 = vxor.u32 %v2398, 2147483648
    %v2417 = vxor.u32 %v2399, 2147483648
    %v2418 = vmul.f32 %v2416, 1.442695
    %v2419 = vpow.pop %v2418
    %v2420 = vmul.f32 %v2417, 1.442695
    %v2421 = vpow.pop %v2420
    %v2422 = vadd.f32 %v2419, 1.0
    %v2423 = vadd.f32 %v2421, 1.0
    %v2424 = vrcp.pop %v2422
    %v2425 = vmul.f32 1.0, %v2424
    %v2426 = vrcp.pop %v2423
    %v2427 = vmul.f32 1.0, %v2426
    %v2428 = vtanh.pop %v2400
    %v2429 = vtanh.pop %v2401
    %v2430 = vxor.u32 %v2402, 2147483648
    %v2431 = vxor.u32 %v2403, 2147483648
    %v2432 = vmul.f32 %v2430, 1.442695
    %v2433 = vpow.pop %v2432
    %v2434 = vmul.f32 %v2431, 1.442695
    %v2435 = vpow.pop %v2434
    %v2436 = vadd.f32 %v2433, 1.0
    %v2437 = vadd.f32 %v2435, 1.0
    %v2438 = vrcp.pop %v2436
    %v2439 = vmul.f32 1.0, %v2438
    %v2440 = vrcp.pop %v2437
    %v2441 = vmul.f32 1.0, %v2440
    %v2442 = vmul.f32 %v2425, %v2276
    %v2443 = vmul.f32 %v2427, %v2277
    %v2444 = vmul.f32 %v2413, %v2428
    %v2445 = vmul.f32 %v2415, %v2429
    %v2446 = vadd.f32 %v2442, %v2444
    %v2447 = vadd.f32 %v2443, %v2445
    %v2448 = vtanh.pop %v2446
    %v2449 = vtanh.pop %v2447
    %v2450 = vmul.f32 %v2439, %v2448
    %v2451 = vmul.f32 %v2441, %v2449
    %s2452 = scalar_lea.vmem %s0, 768
    %v2453 = vld [vmem:[%s2452] sm:$0xff]
    %v2454 = vld [vmem:[%s2452 + $0x8] sm:$0xff]
    %v2455 = vld [vmem:[%s2452 + $0x10] sm:$0xff]
    %v2456 = vld [vmem:[%s2452 + $0x18] sm:$0xff]
    %v2457 = vld [vmem:[%s2452 + $0x20] sm:$0xff]
    %v2458 = vld [vmem:[%s2452 + $0x28] sm:$0xff]
    %v2459 = vld [vmem:[%s2452 + $0x30] sm:$0xff]
    %v2460 = vld [vmem:[%s2452 + $0x38] sm:$0xff]
    %2461 = vmatprep.subr.mxu0 0.0
    %2462 = vmatpush1.msra.mxu0 %v2450
    %2463 = vmatprep.subr.mxu0 0.0
    %2464 = vmatpush1.msra.mxu0 %v2451
    %2465 = vmatprep.subr.mxu0 0.0
    %2466 = vmatpush1.msra.mxu0 0.0
    %2467 = vmatprep.subr.mxu0 0.0
    %2468 = vmatpush1.msra.mxu0 0.0
    %2469 = vmatprep.subr.mxu0 0.0
    %2470 = vmatpush1.msra.mxu0 0.0
    %2471 = vmatprep.subr.mxu0 0.0
    %2472 = vmatpush1.msra.mxu0 0.0
    %2473 = vmatprep.subr.mxu0 0.0
    %2474 = vmatpush1.msra.mxu0 0.0
    %2475 = vmatprep.subr.mxu0 0.0
    %2476 = vmatpush1.msra.mxu0 0.0
    %2477 = vmatprep.subr.mxu0 0.0
    %2478 = vmatpush1.msra.mxu0 0.0
    %2479 = vmatprep.subr.mxu0 0.0
    %2480 = vmatpush1.msra.mxu0 0.0
    %2481 = vmatprep.subr.mxu0 0.0
    %2482 = vmatpush1.msra.mxu0 0.0
    %2483 = vmatprep.subr.mxu0 0.0
    %2484 = vmatpush1.msra.mxu0 0.0
    %2485 = vmatprep.subr.mxu0 0.0
    %2486 = vmatpush1.msra.mxu0 0.0
    %2487 = vmatprep.subr.mxu0 0.0
    %2488 = vmatpush1.msra.mxu0 0.0
    %2489 = vmatprep.subr.mxu0 0.0
    %2490 = vmatpush1.msra.mxu0 0.0
    %2491 = vmatprep.subr.mxu0 0.0
    %2492 = vmatpush1.msra.mxu0 0.0
    %2493 = vmatprep.subr.mxu0 0.0
    %2494 = vmatpush1.msra.mxu0 0.0
    %2495 = vmatprep.subr.mxu0 0.0
    %2496 = vmatpush1.msra.mxu0 0.0
    %2497 = vmatprep.subr.mxu0 0.0
    %2498 = vmatpush1.msra.mxu0 0.0
    %2499 = vmatprep.subr.mxu0 0.0
    %2500 = vmatpush1.msra.mxu0 0.0
    %2501 = vmatprep.subr.mxu0 0.0
    %2502 = vmatpush1.msra.mxu0 0.0
    %2503 = vmatprep.subr.mxu0 0.0
    %2504 = vmatpush1.msra.mxu0 0.0
    %2505 = vmatprep.subr.mxu0 0.0
    %2506 = vmatpush1.msra.mxu0 0.0
    %2507 = vmatprep.subr.mxu0 0.0
    %2508 = vmatpush1.msra.mxu0 0.0
    %2509 = vmatprep.subr.mxu0 0.0
    %2510 = vmatpush1.msra.mxu0 0.0
    %2511 = vmatprep.subr.mxu0 0.0
    %2512 = vmatpush1.msra.mxu0 0.0
    %2513 = vmatprep.subr.mxu0 0.0
    %2514 = vmatpush1.msra.mxu0 0.0
    %2515 = vmatprep.subr.mxu0 0.0
    %2516 = vmatpush1.msra.mxu0 0.0
    %2517 = vmatprep.subr.mxu0 0.0
    %2518 = vmatpush1.msra.mxu0 0.0
    %2519 = vmatprep.subr.mxu0 0.0
    %2520 = vmatpush1.msra.mxu0 0.0
    %2521 = vmatprep.subr.mxu0 0.0
    %2522 = vmatpush1.msra.mxu0 0.0
    %2523 = vmatprep.subr.mxu0 0.0
    %2524 = vmatpush1.msra.mxu0 0.0
    %2525 = vmatprep.mubr.f32.mxu0 0.0
    %2526 = vmatmul.mubr.f32.gmra.mrb[0].mxu0 %v398
    %v2527 = vpop.f32.mrb[0].mxu0
    %v2528 = vadd.f32 0.0, %v2527
    %v2529 = vpop.f32.mrb[0].mxu0
    %2530 = vmatprep.mubr.f32.mxu0 0.0
    %2531 = vmatmul.mubr.f32.gmra.mrb[0].mxu0 %v401
    %v2532 = vpop.f32.mrb[0].mxu0
    %v2533 = vadd.f32 0.0, %v2532
    %v2534 = vpop.f32.mrb[0].mxu0
    %2535 = vmatprep.mubr.f32.mxu0 0.0
    %2536 = vmatmul.mubr.f32.gmra.mrb[0].mxu0 %v404
    %v2537 = vpop.f32.mrb[0].mxu0
    %v2538 = vadd.f32 0.0, %v2537
    %v2539 = vpop.f32.mrb[0].mxu0
    %2540 = vmatprep.mubr.f32.mxu0 0.0
    %2541 = vmatmul.mubr.f32.gmra.mrb[0].mxu0 %v407
    %v2542 = vpop.f32.mrb[0].mxu0
    %v2543 = vadd.f32 0.0, %v2542
    %v2544 = vpop.f32.mrb[0].mxu0
    %2545 = vmatprep.mubr.f32.mxu0 0.0
    %2546 = vmatmul.mubr.f32.gmra.mrb[0].mxu0 %v410
    %v2547 = vpop.f32.mrb[0].mxu0
    %v2548 = vadd.f32 0.0, %v2547
    %v2549 = vpop.f32.mrb[0].mxu0
    %2550 = vmatprep.mubr.f32.mxu0 0.0
    %2551 = vmatmul.mubr.f32.gmra.mrb[0].mxu0 %v413
    %v2552 = vpop.f32.mrb[0].mxu0
    %v2553 = vadd.f32 0.0, %v2552
    %v2554 = vpop.f32.mrb[0].mxu0
    %2555 = vmatprep.mubr.f32.mxu0 0.0
    %2556 = vmatmul.mubr.f32.gmra.mrb[0].mxu0 %v416
    %v2557 = vpop.f32.mrb[0].mxu0
    %v2558 = vadd.f32 0.0, %v2557
    %v2559 = vpop.f32.mrb[0].mxu0
    %2560 = vmatprep.mubr.f32.mxu0 0.0
    %2561 = vmatmul.mubr.f32.gmra.mrb[0].mxu0 %v419
    %v2562 = vpop.f32.mrb[0].mxu0
    %v2563 = vadd.f32 0.0, %v2562
    %v2564 = vpop.f32.mrb[0].mxu0
    %2565 = vdwg.mxu0
    %v2566 = vadd.f32 %v2453, %v2528
    %v2567 = vadd.f32 %v2454, %v2533
    %v2568 = vadd.f32 %v2455, %v2538
    %v2569 = vadd.f32 %v2456, %v2543
    %v2570 = vadd.f32 %v2457, %v2548
    %v2571 = vadd.f32 %v2458, %v2553
    %v2572 = vadd.f32 %v2459, %v2558
    %v2573 = vadd.f32 %v2460, %v2563
    %v2574 = vxor.u32 %v2566, 2147483648
    %v2575 = vxor.u32 %v2567, 2147483648
    %v2576 = vmul.f32 %v2574, 1.442695
    %v2577 = vpow.pop %v2576
    %v2578 = vmul.f32 %v2575, 1.442695
    %v2579 = vpow.pop %v2578
    %v2580 = vadd.f32 %v2577, 1.0
    %v2581 = vadd.f32 %v2579, 1.0
    %v2582 = vrcp.pop %v2580
    %v2583 = vmul.f32 1.0, %v2582
    %v2584 = vrcp.pop %v2581
    %v2585 = vmul.f32 1.0, %v2584
    %v2586 = vxor.u32 %v2568, 2147483648
    %v2587 = vxor.u32 %v2569, 2147483648
    %v2588 = vmul.f32 %v2586, 1.442695
    %v2589 = vpow.pop %v2588
    %v2590 = vmul.f32 %v2587, 1.442695
    %v2591 = vpow.pop %v2590
    %v2592 = vadd.f32 %v2589, 1.0
    %v2593 = vadd.f32 %v2591, 1.0
    %v2594 = vrcp.pop %v2592
    %v2595 = vmul.f32 1.0, %v2594
    %v2596 = vrcp.pop %v2593
    %v2597 = vmul.f32 1.0, %v2596
    %v2598 = vtanh.pop %v2570
    %v2599 = vtanh.pop %v2571
    %v2600 = vxor.u32 %v2572, 2147483648
    %v2601 = vxor.u32 %v2573, 2147483648
    %v2602 = vmul.f32 %v2600, 1.442695
    %v2603 = vpow.pop %v2602
    %v2604 = vmul.f32 %v2601, 1.442695
    %v2605 = vpow.pop %v2604
    %v2606 = vadd.f32 %v2603, 1.0
    %v2607 = vadd.f32 %v2605, 1.0
    %v2608 = vrcp.pop %v2606
    %v2609 = vmul.f32 1.0, %v2608
    %v2610 = vrcp.pop %v2607
    %v2611 = vmul.f32 1.0, %v2610
    %v2612 = vmul.f32 %v2595, %v2446
    %v2613 = vmul.f32 %v2597, %v2447
    %v2614 = vmul.f32 %v2583, %v2598
    %v2615 = vmul.f32 %v2585, %v2599
    %v2616 = vadd.f32 %v2612, %v2614
    %v2617 = vadd.f32 %v2613, %v2615
    %v2618 = vtanh.pop %v2616
    %v2619 = vtanh.pop %v2617
    %v2620 = vmul.f32 %v2609, %v2618
    %v2621 = vmul.f32 %v2611, %v2619
    %s2622 = scalar_lea.vmem %s0, 832
    %v2623 = vld [vmem:[%s2622] sm:$0xff]
    %v2624 = vld [vmem:[%s2622 + $0x8] sm:$0xff]
    %v2625 = vld [vmem:[%s2622 + $0x10] sm:$0xff]
    %v2626 = vld [vmem:[%s2622 + $0x18] sm:$0xff]
    %v2627 = vld [vmem:[%s2622 + $0x20] sm:$0xff]
    %v2628 = vld [vmem:[%s2622 + $0x28] sm:$0xff]
    %v2629 = vld [vmem:[%s2622 + $0x30] sm:$0xff]
    %v2630 = vld [vmem:[%s2622 + $0x38] sm:$0xff]
    %2631 = vmatprep.subr.mxu0 0.0
    %2632 = vmatpush1.msra.mxu0 %v2620
    %2633 = vmatprep.subr.mxu0 0.0
    %2634 = vmatpush1.msra.mxu0 %v2621
    %2635 = vmatprep.subr.mxu0 0.0
    %2636 = vmatpush1.msra.mxu0 0.0
    %2637 = vmatprep.subr.mxu0 0.0
    %2638 = vmatpush1.msra.mxu0 0.0
    %2639 = vmatprep.subr.mxu0 0.0
    %2640 = vmatpush1.msra.mxu0 0.0
    %2641 = vmatprep.subr.mxu0 0.0
    %2642 = vmatpush1.msra.mxu0 0.0
    %2643 = vmatprep.subr.mxu0 0.0
    %2644 = vmatpush1.msra.mxu0 0.0
    %2645 = vmatprep.subr.mxu0 0.0
    %2646 = vmatpush1.msra.mxu0 0.0
    %2647 = vmatprep.subr.mxu0 0.0
    %2648 = vmatpush1.msra.mxu0 0.0
    %2649 = vmatprep.subr.mxu0 0.0
    %2650 = vmatpush1.msra.mxu0 0.0
    %2651 = vmatprep.subr.mxu0 0.0
    %2652 = vmatpush1.msra.mxu0 0.0
    %2653 = vmatprep.subr.mxu0 0.0
    %2654 = vmatpush1.msra.mxu0 0.0
    %2655 = vmatprep.subr.mxu0 0.0
    %2656 = vmatpush1.msra.mxu0 0.0
    %2657 = vmatprep.subr.mxu0 0.0
    %2658 = vmatpush1.msra.mxu0 0.0
    %2659 = vmatprep.subr.mxu0 0.0
    %2660 = vmatpush1.msra.mxu0 0.0
    %2661 = vmatprep.subr.mxu0 0.0
    %2662 = vmatpush1.msra.mxu0 0.0
    %2663 = vmatprep.subr.mxu0 0.0
    %2664 = vmatpush1.msra.mxu0 0.0
    %2665 = vmatprep.subr.mxu0 0.0
    %2666 = vmatpush1.msra.mxu0 0.0
    %2667 = vmatprep.subr.mxu0 0.0
    %2668 = vmatpush1.msra.mxu0 0.0
    %2669 = vmatprep.subr.mxu0 0.0
    %2670 = vmatpush1.msra.mxu0 0.0
    %2671 = vmatprep.subr.mxu0 0.0
    %2672 = vmatpush1.msra.mxu0 0.0
    %2673 = vmatprep.subr.mxu0 0.0
    %2674 = vmatpush1.msra.mxu0 0.0
    %2675 = vmatprep.subr.mxu0 0.0
    %2676 = vmatpush1.msra.mxu0 0.0
    %2677 = vmatprep.subr.mxu0 0.0
    %2678 = vmatpush1.msra.mxu0 0.0
    %2679 = vmatprep.subr.mxu0 0.0
    %2680 = vmatpush1.msra.mxu0 0.0
    %2681 = vmatprep.subr.mxu0 0.0
    %2682 = vmatpush1.msra.mxu0 0.0
    %2683 = vmatprep.subr.mxu0 0.0
    %2684 = vmatpush1.msra.mxu0 0.0
    %2685 = vmatprep.subr.mxu0 0.0
    %2686 = vmatpush1.msra.mxu0 0.0
    %2687 = vmatprep.subr.mxu0 0.0
    %2688 = vmatpush1.msra.mxu0 0.0
    %2689 = vmatprep.subr.mxu0 0.0
    %2690 = vmatpush1.msra.mxu0 0.0
    %2691 = vmatprep.subr.mxu0 0.0
    %2692 = vmatpush1.msra.mxu0 0.0
    %2693 = vmatprep.subr.mxu0 0.0
    %2694 = vmatpush1.msra.mxu0 0.0
    %2695 = vmatprep.mubr.f32.mxu0 0.0
    %2696 = vmatmul.mubr.f32.gmra.mrb[0].mxu0 %v398
    %v2697 = vpop.f32.mrb[0].mxu0
    %v2698 = vadd.f32 0.0, %v2697
    %v2699 = vpop.f32.mrb[0].mxu0
    %2700 = vmatprep.mubr.f32.mxu0 0.0
    %2701 = vmatmul.mubr.f32.gmra.mrb[0].mxu0 %v401
    %v2702 = vpop.f32.mrb[0].mxu0
    %v2703 = vadd.f32 0.0, %v2702
    %v2704 = vpop.f32.mrb[0].mxu0
    %2705 = vmatprep.mubr.f32.mxu0 0.0
    %2706 = vmatmul.mubr.f32.gmra.mrb[0].mxu0 %v404
    %v2707 = vpop.f32.mrb[0].mxu0
    %v2708 = vadd.f32 0.0, %v2707
    %v2709 = vpop.f32.mrb[0].mxu0
    %2710 = vmatprep.mubr.f32.mxu0 0.0
    %2711 = vmatmul.mubr.f32.gmra.mrb[0].mxu0 %v407
    %v2712 = vpop.f32.mrb[0].mxu0
    %v2713 = vadd.f32 0.0, %v2712
    %v2714 = vpop.f32.mrb[0].mxu0
    %2715 = vmatprep.mubr.f32.mxu0 0.0
    %2716 = vmatmul.mubr.f32.gmra.mrb[0].mxu0 %v410
    %v2717 = vpop.f32.mrb[0].mxu0
    %v2718 = vadd.f32 0.0, %v2717
    %v2719 = vpop.f32.mrb[0].mxu0
    %2720 = vmatprep.mubr.f32.mxu0 0.0
    %2721 = vmatmul.mubr.f32.gmra.mrb[0].mxu0 %v413
    %v2722 = vpop.f32.mrb[0].mxu0
    %v2723 = vadd.f32 0.0, %v2722
    %v2724 = vpop.f32.mrb[0].mxu0
    %2725 = vmatprep.mubr.f32.mxu0 0.0
    %2726 = vmatmul.mubr.f32.gmra.mrb[0].mxu0 %v416
    %v2727 = vpop.f32.mrb[0].mxu0
    %v2728 = vadd.f32 0.0, %v2727
    %v2729 = vpop.f32.mrb[0].mxu0
    %2730 = vmatprep.mubr.f32.mxu0 0.0
    %2731 = vmatmul.mubr.f32.gmra.mrb[0].mxu0 %v419
    %v2732 = vpop.f32.mrb[0].mxu0
    %v2733 = vadd.f32 0.0, %v2732
    %v2734 = vpop.f32.mrb[0].mxu0
    %2735 = vdwg.mxu0
    %v2736 = vadd.f32 %v2623, %v2698
    %v2737 = vadd.f32 %v2624, %v2703
    %v2738 = vadd.f32 %v2625, %v2708
    %v2739 = vadd.f32 %v2626, %v2713
    %v2740 = vadd.f32 %v2627, %v2718
    %v2741 = vadd.f32 %v2628, %v2723
    %v2742 = vadd.f32 %v2629, %v2728
    %v2743 = vadd.f32 %v2630, %v2733
    %v2744 = vxor.u32 %v2736, 2147483648
    %v2745 = vxor.u32 %v2737, 2147483648
    %v2746 = vmul.f32 %v2744, 1.442695
    %v2747 = vpow.pop %v2746
    %v2748 = vmul.f32 %v2745, 1.442695
    %v2749 = vpow.pop %v2748
    %v2750 = vadd.f32 %v2747, 1.0
    %v2751 = vadd.f32 %v2749, 1.0
    %v2752 = vrcp.pop %v2750
    %v2753 = vmul.f32 1.0, %v2752
    %v2754 = vrcp.pop %v2751
    %v2755 = vmul.f32 1.0, %v2754
    %v2756 = vxor.u32 %v2738, 2147483648
    %v2757 = vxor.u32 %v2739, 2147483648
    %v2758 = vmul.f32 %v2756, 1.442695
    %v2759 = vpow.pop %v2758
    %v2760 = vmul.f32 %v2757, 1.442695
    %v2761 = vpow.pop %v2760
    %v2762 = vadd.f32 %v2759, 1.0
    %v2763 = vadd.f32 %v2761, 1.0
    %v2764 = vrcp.pop %v2762
    %v2765 = vmul.f32 1.0, %v2764
    %v2766 = vrcp.pop %v2763
    %v2767 = vmul.f32 1.0, %v2766
    %v2768 = vtanh.pop %v2740
    %v2769 = vtanh.pop %v2741
    %v2770 = vxor.u32 %v2742, 2147483648
    %v2771 = vxor.u32 %v2743, 2147483648
    %v2772 = vmul.f32 %v2770, 1.442695
    %v2773 = vpow.pop %v2772
    %v2774 = vmul.f32 %v2771, 1.442695
    %v2775 = vpow.pop %v2774
    %v2776 = vadd.f32 %v2773, 1.0
    %v2777 = vadd.f32 %v2775, 1.0
    %v2778 = vrcp.pop %v2776
    %v2779 = vmul.f32 1.0, %v2778
    %v2780 = vrcp.pop %v2777
    %v2781 = vmul.f32 1.0, %v2780
    %v2782 = vmul.f32 %v2765, %v2616
    %v2783 = vmul.f32 %v2767, %v2617
    %v2784 = vmul.f32 %v2753, %v2768
    %v2785 = vmul.f32 %v2755, %v2769
    %v2786 = vadd.f32 %v2782, %v2784
    %v2787 = vadd.f32 %v2783, %v2785
    %v2788 = vtanh.pop %v2786
    %v2789 = vtanh.pop %v2787
    %v2790 = vmul.f32 %v2779, %v2788
    %v2791 = vmul.f32 %v2781, %v2789
    %s2792 = scalar_lea.vmem %s0, 896
    %v2793 = vld [vmem:[%s2792] sm:$0xff]
    %v2794 = vld [vmem:[%s2792 + $0x8] sm:$0xff]
    %v2795 = vld [vmem:[%s2792 + $0x10] sm:$0xff]
    %v2796 = vld [vmem:[%s2792 + $0x18] sm:$0xff]
    %v2797 = vld [vmem:[%s2792 + $0x20] sm:$0xff]
    %v2798 = vld [vmem:[%s2792 + $0x28] sm:$0xff]
    %v2799 = vld [vmem:[%s2792 + $0x30] sm:$0xff]
    %v2800 = vld [vmem:[%s2792 + $0x38] sm:$0xff]
    %2801 = vmatprep.subr.mxu0 0.0
    %2802 = vmatpush1.msra.mxu0 %v2790
    %2803 = vmatprep.subr.mxu0 0.0
    %2804 = vmatpush1.msra.mxu0 %v2791
    %2805 = vmatprep.subr.mxu0 0.0
    %2806 = vmatpush1.msra.mxu0 0.0
    %2807 = vmatprep.subr.mxu0 0.0
    %2808 = vmatpush1.msra.mxu0 0.0
    %2809 = vmatprep.subr.mxu0 0.0
    %2810 = vmatpush1.msra.mxu0 0.0
    %2811 = vmatprep.subr.mxu0 0.0
    %2812 = vmatpush1.msra.mxu0 0.0
    %2813 = vmatprep.subr.mxu0 0.0
    %2814 = vmatpush1.msra.mxu0 0.0
    %2815 = vmatprep.subr.mxu0 0.0
    %2816 = vmatpush1.msra.mxu0 0.0
    %2817 = vmatprep.subr.mxu0 0.0
    %2818 = vmatpush1.msra.mxu0 0.0
    %2819 = vmatprep.subr.mxu0 0.0
    %2820 = vmatpush1.msra.mxu0 0.0
    %2821 = vmatprep.subr.mxu0 0.0
    %2822 = vmatpush1.msra.mxu0 0.0
    %2823 = vmatprep.subr.mxu0 0.0
    %2824 = vmatpush1.msra.mxu0 0.0
    %2825 = vmatprep.subr.mxu0 0.0
    %2826 = vmatpush1.msra.mxu0 0.0
    %2827 = vmatprep.subr.mxu0 0.0
    %2828 = vmatpush1.msra.mxu0 0.0
    %2829 = vmatprep.subr.mxu0 0.0
    %2830 = vmatpush1.msra.mxu0 0.0
    %2831 = vmatprep.subr.mxu0 0.0
    %2832 = vmatpush1.msra.mxu0 0.0
    %2833 = vmatprep.subr.mxu0 0.0
    %2834 = vmatpush1.msra.mxu0 0.0
    %2835 = vmatprep.subr.mxu0 0.0
    %2836 = vmatpush1.msra.mxu0 0.0
    %2837 = vmatprep.subr.mxu0 0.0
    %2838 = vmatpush1.msra.mxu0 0.0
    %2839 = vmatprep.subr.mxu0 0.0
    %2840 = vmatpush1.msra.mxu0 0.0
    %2841 = vmatprep.subr.mxu0 0.0
    %2842 = vmatpush1.msra.mxu0 0.0
    %2843 = vmatprep.subr.mxu0 0.0
    %2844 = vmatpush1.msra.mxu0 0.0
    %2845 = vmatprep.subr.mxu0 0.0
    %2846 = vmatpush1.msra.mxu0 0.0
    %2847 = vmatprep.subr.mxu0 0.0
    %2848 = vmatpush1.msra.mxu0 0.0
    %2849 = vmatprep.subr.mxu0 0.0
    %2850 = vmatpush1.msra.mxu0 0.0
    %2851 = vmatprep.subr.mxu0 0.0
    %2852 = vmatpush1.msra.mxu0 0.0
    %2853 = vmatprep.subr.mxu0 0.0
    %2854 = vmatpush1.msra.mxu0 0.0
    %2855 = vmatprep.subr.mxu0 0.0
    %2856 = vmatpush1.msra.mxu0 0.0
    %2857 = vmatprep.subr.mxu0 0.0
    %2858 = vmatpush1.msra.mxu0 0.0
    %2859 = vmatprep.subr.mxu0 0.0
    %2860 = vmatpush1.msra.mxu0 0.0
    %2861 = vmatprep.subr.mxu0 0.0
    %2862 = vmatpush1.msra.mxu0 0.0
    %2863 = vmatprep.subr.mxu0 0.0
    %2864 = vmatpush1.msra.mxu0 0.0
    %2865 = vmatprep.mubr.f32.mxu0 0.0
    %2866 = vmatmul.mubr.f32.gmra.mrb[0].mxu0 %v398
    %v2867 = vpop.f32.mrb[0].mxu0
    %v2868 = vadd.f32 0.0, %v2867
    %v2869 = vpop.f32.mrb[0].mxu0
    %2870 = vmatprep.mubr.f32.mxu0 0.0
    %2871 = vmatmul.mubr.f32.gmra.mrb[0].mxu0 %v401
    %v2872 = vpop.f32.mrb[0].mxu0
    %v2873 = vadd.f32 0.0, %v2872
    %v2874 = vpop.f32.mrb[0].mxu0
    %2875 = vmatprep.mubr.f32.mxu0 0.0
    %2876 = vmatmul.mubr.f32.gmra.mrb[0].mxu0 %v404
    %v2877 = vpop.f32.mrb[0].mxu0
    %v2878 = vadd.f32 0.0, %v2877
    %v2879 = vpop.f32.mrb[0].mxu0
    %2880 = vmatprep.mubr.f32.mxu0 0.0
    %2881 = vmatmul.mubr.f32.gmra.mrb[0].mxu0 %v407
    %v2882 = vpop.f32.mrb[0].mxu0
    %v2883 = vadd.f32 0.0, %v2882
    %v2884 = vpop.f32.mrb[0].mxu0
    %2885 = vmatprep.mubr.f32.mxu0 0.0
    %2886 = vmatmul.mubr.f32.gmra.mrb[0].mxu0 %v410
    %v2887 = vpop.f32.mrb[0].mxu0
    %v2888 = vadd.f32 0.0, %v2887
    %v2889 = vpop.f32.mrb[0].mxu0
    %2890 = vmatprep.mubr.f32.mxu0 0.0
    %2891 = vmatmul.mubr.f32.gmra.mrb[0].mxu0 %v413
    %v2892 = vpop.f32.mrb[0].mxu0
    %v2893 = vadd.f32 0.0, %v2892
    %v2894 = vpop.f32.mrb[0].mxu0
    %2895 = vmatprep.mubr.f32.mxu0 0.0
    %2896 = vmatmul.mubr.f32.gmra.mrb[0].mxu0 %v416
    %v2897 = vpop.f32.mrb[0].mxu0
    %v2898 = vadd.f32 0.0, %v2897
    %v2899 = vpop.f32.mrb[0].mxu0
    %2900 = vmatprep.mubr.f32.mxu0 0.0
    %2901 = vmatmul.mubr.f32.gmra.mrb[0].mxu0 %v419
    %v2902 = vpop.f32.mrb[0].mxu0
    %v2903 = vadd.f32 0.0, %v2902
    %v2904 = vpop.f32.mrb[0].mxu0
    %2905 = vdwg.mxu0
    %v2906 = vadd.f32 %v2793, %v2868
    %v2907 = vadd.f32 %v2794, %v2873
    %v2908 = vadd.f32 %v2795, %v2878
    %v2909 = vadd.f32 %v2796, %v2883
    %v2910 = vadd.f32 %v2797, %v2888
    %v2911 = vadd.f32 %v2798, %v2893
    %v2912 = vadd.f32 %v2799, %v2898
    %v2913 = vadd.f32 %v2800, %v2903
    %v2914 = vxor.u32 %v2906, 2147483648
    %v2915 = vxor.u32 %v2907, 2147483648
    %v2916 = vmul.f32 %v2914, 1.442695
    %v2917 = vpow.pop %v2916
    %v2918 = vmul.f32 %v2915, 1.442695
    %v2919 = vpow.pop %v2918
    %v2920 = vadd.f32 %v2917, 1.0
    %v2921 = vadd.f32 %v2919, 1.0
    %v2922 = vrcp.pop %v2920
    %v2923 = vmul.f32 1.0, %v2922
    %v2924 = vrcp.pop %v2921
    %v2925 = vmul.f32 1.0, %v2924
    %v2926 = vxor.u32 %v2908, 2147483648
    %v2927 = vxor.u32 %v2909, 2147483648
    %v2928 = vmul.f32 %v2926, 1.442695
    %v2929 = vpow.pop %v2928
    %v2930 = vmul.f32 %v2927, 1.442695
    %v2931 = vpow.pop %v2930
    %v2932 = vadd.f32 %v2929, 1.0
    %v2933 = vadd.f32 %v2931, 1.0
    %v2934 = vrcp.pop %v2932
    %v2935 = vmul.f32 1.0, %v2934
    %v2936 = vrcp.pop %v2933
    %v2937 = vmul.f32 1.0, %v2936
    %v2938 = vtanh.pop %v2910
    %v2939 = vtanh.pop %v2911
    %v2940 = vxor.u32 %v2912, 2147483648
    %v2941 = vxor.u32 %v2913, 2147483648
    %v2942 = vmul.f32 %v2940, 1.442695
    %v2943 = vpow.pop %v2942
    %v2944 = vmul.f32 %v2941, 1.442695
    %v2945 = vpow.pop %v2944
    %v2946 = vadd.f32 %v2943, 1.0
    %v2947 = vadd.f32 %v2945, 1.0
    %v2948 = vrcp.pop %v2946
    %v2949 = vmul.f32 1.0, %v2948
    %v2950 = vrcp.pop %v2947
    %v2951 = vmul.f32 1.0, %v2950
    %v2952 = vmul.f32 %v2935, %v2786
    %v2953 = vmul.f32 %v2937, %v2787
    %v2954 = vmul.f32 %v2923, %v2938
    %v2955 = vmul.f32 %v2925, %v2939
    %v2956 = vadd.f32 %v2952, %v2954
    %v2957 = vadd.f32 %v2953, %v2955
    %v2958 = vtanh.pop %v2956
    %v2959 = vtanh.pop %v2957
    %v2960 = vmul.f32 %v2949, %v2958
    %v2961 = vmul.f32 %v2951, %v2959
    %v2962 = vld [vmem:[%s4] sm:$0xff]
    %v2963 = vld [vmem:[%s4 + $0x8] sm:$0xff]
    %v2964 = vld [vmem:[%s4 + $0x10] sm:$0xff]
    %v2965 = vld [vmem:[%s4 + $0x18] sm:$0xff]
    %v2966 = vld [vmem:[%s4 + $0x20] sm:$0xff]
    %v2967 = vld [vmem:[%s4 + $0x28] sm:$0xff]
    %v2968 = vld [vmem:[%s4 + $0x30] sm:$0xff]
    %v2969 = vld [vmem:[%s4 + $0x38] sm:$0xff]
    %v2971 = vsel %vm396, %v2962, 0
    %v2974 = vsel %vm396, %v2963, 0
    %v2977 = vsel %vm396, %v2964, 0
    %v2980 = vsel %vm396, %v2965, 0
    %v2983 = vsel %vm396, %v2966, 0
    %v2986 = vsel %vm396, %v2967, 0
    %v2989 = vsel %vm396, %v2968, 0
    %v2992 = vsel %vm396, %v2969, 0
    %2994 = vmatprep.subr.mxu0 0.0
    %2995 = vmatpush1.msra.mxu0 %v2960
    %2996 = vmatprep.subr.mxu0 0.0
    %2997 = vmatpush1.msra.mxu0 %v2961
    %2998 = vmatprep.subr.mxu0 0.0
    %2999 = vmatpush1.msra.mxu0 0.0
    %3000 = vmatprep.subr.mxu0 0.0
    %3001 = vmatpush1.msra.mxu0 0.0
    %3002 = vmatprep.subr.mxu0 0.0
    %3003 = vmatpush1.msra.mxu0 0.0
    %3004 = vmatprep.subr.mxu0 0.0
    %3005 = vmatpush1.msra.mxu0 0.0
    %3006 = vmatprep.subr.mxu0 0.0
    %3007 = vmatpush1.msra.mxu0 0.0
    %3008 = vmatprep.subr.mxu0 0.0
    %3009 = vmatpush1.msra.mxu0 0.0
    %3010 = vmatprep.subr.mxu0 0.0
    %3011 = vmatpush1.msra.mxu0 0.0
    %3012 = vmatprep.subr.mxu0 0.0
    %3013 = vmatpush1.msra.mxu0 0.0
    %3014 = vmatprep.subr.mxu0 0.0
    %3015 = vmatpush1.msra.mxu0 0.0
    %3016 = vmatprep.subr.mxu0 0.0
    %3017 = vmatpush1.msra.mxu0 0.0
    %3018 = vmatprep.subr.mxu0 0.0
    %3019 = vmatpush1.msra.mxu0 0.0
    %3020 = vmatprep.subr.mxu0 0.0
    %3021 = vmatpush1.msra.mxu0 0.0
    %3022 = vmatprep.subr.mxu0 0.0
    %3023 = vmatpush1.msra.mxu0 0.0
    %3024 = vmatprep.subr.mxu0 0.0
    %3025 = vmatpush1.msra.mxu0 0.0
    %3026 = vmatprep.subr.mxu0 0.0
    %3027 = vmatpush1.msra.mxu0 0.0
    %3028 = vmatprep.subr.mxu0 0.0
    %3029 = vmatpush1.msra.mxu0 0.0
    %3030 = vmatprep.subr.mxu0 0.0
    %3031 = vmatpush1.msra.mxu0 0.0
    %3032 = vmatprep.subr.mxu0 0.0
    %3033 = vmatpush1.msra.mxu0 0.0
    %3034 = vmatprep.subr.mxu0 0.0
    %3035 = vmatpush1.msra.mxu0 0.0
    %3036 = vmatprep.subr.mxu0 0.0
    %3037 = vmatpush1.msra.mxu0 0.0
    %3038 = vmatprep.subr.mxu0 0.0
    %3039 = vmatpush1.msra.mxu0 0.0
    %3040 = vmatprep.subr.mxu0 0.0
    %3041 = vmatpush1.msra.mxu0 0.0
    %3042 = vmatprep.subr.mxu0 0.0
    %3043 = vmatpush1.msra.mxu0 0.0
    %3044 = vmatprep.subr.mxu0 0.0
    %3045 = vmatpush1.msra.mxu0 0.0
    %3046 = vmatprep.subr.mxu0 0.0
    %3047 = vmatpush1.msra.mxu0 0.0
    %3048 = vmatprep.subr.mxu0 0.0
    %3049 = vmatpush1.msra.mxu0 0.0
    %3050 = vmatprep.subr.mxu0 0.0
    %3051 = vmatpush1.msra.mxu0 0.0
    %3052 = vmatprep.subr.mxu0 0.0
    %3053 = vmatpush1.msra.mxu0 0.0
    %3054 = vmatprep.subr.mxu0 0.0
    %3055 = vmatpush1.msra.mxu0 0.0
    %3056 = vmatprep.subr.mxu0 0.0
    %3057 = vmatpush1.msra.mxu0 0.0
    %3058 = vmatprep.mubr.f32.mxu0 0.0
    %3059 = vmatmul.mubr.f32.gmra.mrb[0].mxu0 %v2971
    %v3060 = vpop.f32.mrb[0].mxu0
    %v3061 = vadd.f32 %v380, %v3060
    %v3062 = vpop.f32.mrb[0].mxu0
    %3063 = vmatprep.mubr.f32.mxu0 0.0
    %3064 = vmatmul.mubr.f32.gmra.mrb[0].mxu0 %v2974
    %v3065 = vpop.f32.mrb[0].mxu0
    %v3066 = vadd.f32 %v381, %v3065
    %v3067 = vpop.f32.mrb[0].mxu0
    %3068 = vmatprep.mubr.f32.mxu0 0.0
    %3069 = vmatmul.mubr.f32.gmra.mrb[0].mxu0 %v2977
    %v3070 = vpop.f32.mrb[0].mxu0
    %v3071 = vadd.f32 %v382, %v3070
    %v3072 = vpop.f32.mrb[0].mxu0
    %3073 = vmatprep.mubr.f32.mxu0 0.0
    %3074 = vmatmul.mubr.f32.gmra.mrb[0].mxu0 %v2980
    %v3075 = vpop.f32.mrb[0].mxu0
    %v3076 = vadd.f32 %v383, %v3075
    %v3077 = vpop.f32.mrb[0].mxu0
    %3078 = vmatprep.mubr.f32.mxu0 0.0
    %3079 = vmatmul.mubr.f32.gmra.mrb[0].mxu0 %v2983
    %v3080 = vpop.f32.mrb[0].mxu0
    %v3081 = vadd.f32 %v384, %v3080
    %v3082 = vpop.f32.mrb[0].mxu0
    %3083 = vmatprep.mubr.f32.mxu0 0.0
    %3084 = vmatmul.mubr.f32.gmra.mrb[0].mxu0 %v2986
    %v3085 = vpop.f32.mrb[0].mxu0
    %v3086 = vadd.f32 %v385, %v3085
    %v3087 = vpop.f32.mrb[0].mxu0
    %3088 = vmatprep.mubr.f32.mxu0 0.0
    %3089 = vmatmul.mubr.f32.gmra.mrb[0].mxu0 %v2989
    %v3090 = vpop.f32.mrb[0].mxu0
    %v3091 = vadd.f32 %v386, %v3090
    %v3092 = vpop.f32.mrb[0].mxu0
    %3093 = vmatprep.mubr.f32.mxu0 0.0
    %3094 = vmatmul.mubr.f32.gmra.mrb[0].mxu0 %v2992
    %v3095 = vpop.f32.mrb[0].mxu0
    %v3096 = vadd.f32 %v387, %v3095
    %v3097 = vpop.f32.mrb[0].mxu0
    %3098 = vdwg.mxu0
    %v3099 = vmax.f32 %v3061, 0.0
    %v3100 = vmax.f32 %v3066, 0.0
    %v3101 = vmax.f32 %v3071, 0.0
    %v3102 = vmax.f32 %v3076, 0.0
    %v3103 = vmax.f32 %v3081, 0.0
    %v3104 = vmax.f32 %v3086, 0.0
    %v3105 = vmax.f32 %v3091, 0.0
    %v3106 = vmax.f32 %v3096, 0.0
    %v3107 = vld [vmem:[%s8] sm:$0xff]
    %v3108 = vld [vmem:[%s8 + $0x8] sm:$0xff]
    %v3109 = vld [vmem:[%s8 + $0x10] sm:$0xff]
    %v3110 = vld [vmem:[%s8 + $0x18] sm:$0xff]
    %v3111 = vld [vmem:[%s8 + $0x20] sm:$0xff]
    %v3112 = vld [vmem:[%s8 + $0x28] sm:$0xff]
    %v3113 = vld [vmem:[%s8 + $0x30] sm:$0xff]
    %v3114 = vld [vmem:[%s8 + $0x38] sm:$0xff]
    %3116 = vset.pattern.permute.xlu0 0
    %3117 = vperm.xlu0 %3116, %v3107
    %v3118 = vpop.permute.xlu0 %3117
    %3121 = vset.pattern.permute.xlu0 0
    %3122 = vperm.xlu0 %3121, %v3108
    %v3123 = vpop.permute.xlu0 %3122
    %3126 = vset.pattern.permute.xlu0 0
    %3127 = vperm.xlu0 %3126, %v3109
    %v3128 = vpop.permute.xlu0 %3127
    %3131 = vset.pattern.permute.xlu0 0
    %3132 = vperm.xlu0 %3131, %v3110
    %v3133 = vpop.permute.xlu0 %3132
    %3136 = vset.pattern.permute.xlu0 0
    %3137 = vperm.xlu0 %3136, %v3111
    %v3138 = vpop.permute.xlu0 %3137
    %3141 = vset.pattern.permute.xlu0 0
    %3142 = vperm.xlu0 %3141, %v3112
    %v3143 = vpop.permute.xlu0 %3142
    %3146 = vset.pattern.permute.xlu0 0
    %3147 = vperm.xlu0 %3146, %v3113
    %v3148 = vpop.permute.xlu0 %3147
    %3151 = vset.pattern.permute.xlu0 0
    %3152 = vperm.xlu0 %3151, %v3114
    %v3153 = vpop.permute.xlu0 %3152
    %v3155 = vmul.f32 %v3099, %v3118
    %v3156 = vmul.f32 %v3100, %v3123
    %v3157 = vmul.f32 %v3101, %v3128
    %v3158 = vmul.f32 %v3102, %v3133
    %v3159 = vmul.f32 %v3103, %v3138
    %v3160 = vmul.f32 %v3104, %v3143
    %v3161 = vmul.f32 %v3105, %v3148
    %v3162 = vmul.f32 %v3106, %v3153
    %vm3163 = vcmask 15360
    %v3164 = vsel %vm3163, %v3155, 0.0
    %v3165 = vsel %vm3163, %v3156, 0.0
    %v3166 = vadd.f32 %v3164, %v3165
    %v3167 = vsel %vm3163, %v3157, 0.0
    %v3168 = vadd.f32 %v3166, %v3167
    %v3169 = vsel %vm3163, %v3158, 0.0
    %v3170 = vadd.f32 %v3168, %v3169
    %v3171 = vsel %vm3163, %v3159, 0.0
    %v3172 = vadd.f32 %v3170, %v3171
    %v3173 = vsel %vm3163, %v3160, 0.0
    %v3174 = vadd.f32 %v3172, %v3173
    %v3175 = vsel %vm3163, %v3161, 0.0
    %v3176 = vadd.f32 %v3174, %v3175
    %v3177 = vsel %vm3163, %v3162, 0.0
    %v3178 = vadd.f32 %v3176, %v3177
    %v3179 = vrot.slane %v3178, 4
    %v3180 = vadd.f32 %v3178, %v3179
    %v3181 = vrot.slane %v3180, 2
    %v3182 = vadd.f32 %v3180, %v3181
    %v3183 = vrot.slane %v3182, 1
    %v3184 = vadd.f32 %v3182, %v3183
    %v3185 = vld [vmem:[#allocation2] sm:$0x1]
    %3187 = vset.pattern.permute.xlu0 0
    %3188 = vperm.xlu0 %3187, %v3185
    %v3189 = vpop.permute.xlu0 %3188
    %v3191 = vlaneseq
    %v3192 = vshrl.u32 %v3191, 7
    %v3193 = vsub.s32 0, %v3192
    %v3194 = vrot.slane %v3189, %v3193
    %v3195 = vadd.f32 %v3184, %v3194
    %vm3196 = vcmask 8192
    %3197 = vst.msk [vmem:[#allocation3] sm:$0x1] %vm3196, %v3195
    // Predicated region
    $region42: #{tpu_custom_call.1} parent=1 // pred_check
      _
    $region43: #{tpu_custom_call.1} parent=1 // pred_check_branch
      %3199 = sbr.rel (0) target = $region45
    $region44: #{tpu_custom_call.1} parent=1 // pred_region
      %s3201 = ssub.s32 16, 16
      %3202 = vsyncadd [#allocation4], %s3201
      %s3204 = sshll.u32 [#allocation3], 4
      %s3205 = int_to_ptr.vmem [resolvable:$true] %s3204
      %3207 = dma.vmem_to_hbm [thread:$0]  %s3205, 16, %s10, [#allocation4]
    $region45: #{tpu_custom_call.1} parent=1 // pred_fallthru
      _
    // Predicated region
    $region46: #{tpu_custom_call.1} parent=1 // pred_check
      _
    $region47: #{tpu_custom_call.1} parent=1 // pred_check_branch
      %3209 = sbr.rel (0) target = $region49
    $region48: #{tpu_custom_call.1} parent=1 // pred_region
      %3210 = dma.done [#allocation4], 16
    $region49: #{tpu_custom_call.1} parent=1 // pred_fallthru
      _
    %3211 = vsyncpa [#allocation4], 1

</llo_original>
